<compile_context>
chip_gen: v7x
topology: tpu7x:2x2x1
jax: 0.10.0
libtpu: 0.0.40
codegen_flags: <defaults>
</compile_context>

<pallas_src>
import functools

import jax
import jax.numpy as jnp
from jax import lax
from jax.experimental import pallas as pl
from jax.experimental.pallas import tpu as pltpu

SIGMA = 0.1
NUM_BINS = 256
EPSILON = 1e-10
NORMALIZE = True


def _round_up(x, m):
    return (x + m - 1) // m * m


def _mi_kernel(x1_ref, x2_ref, o_ref, joint_acc, s1_acc, s2_acc, *,
               neg_half_inv_sigma_sq, epsilon, normalize, num_bins,
               n_samples, bin_scale, tile_n):
    n_idx = pl.program_id(1)
    n_last = pl.num_programs(1) - 1

    @pl.when(n_idx == 0)
    def _():
        joint_acc[...] = jnp.zeros_like(joint_acc)
        s1_acc[...] = jnp.zeros_like(s1_acc)
        s2_acc[...] = jnp.zeros_like(s2_acc)

    # bins = linspace(0, 255, num_bins), generated in-kernel as a (NB, 1) column.
    bins_col = (lax.broadcasted_iota(jnp.int32, (num_bins, 1), 0)
                .astype(jnp.float32) * bin_scale)

    x1 = x1_ref[...]          # (1, TILE_N) lane-dense
    x2 = x2_ref[...]

    # Fused Gaussian: k = exp(c * d * d), c = -0.5/sigma^2 (3 VALU ops + EUP).
    # exp in f32, then a single bf16 materialization consumed by both the MXU
    # contraction and the marginal partial sums.
    d1 = x1 - bins_col                                   # (NB, TILE_N) f32
    d2 = x2 - bins_col
    k1 = jnp.exp(neg_half_inv_sigma_sq * (d1 * d1)).astype(jnp.bfloat16)
    k2 = jnp.exp(neg_half_inv_sigma_sq * (d2 * d2)).astype(jnp.bfloat16)

    # Marginal partial sums: lane-dense (NB, 128) accumulator.  128-aligned
    # lane slices -> pure vreg selection + VPU adds in f32, no XLU reduce and
    # no masked 1-lane stores per tile.  The cross-lane reduce happens once,
    # in the finalize block.
    n_lane_groups = tile_n // 128

    def lane_partials(k):
        acc = k[:, 0:128].astype(jnp.float32)
        for i in range(1, n_lane_groups):
            acc = acc + k[:, i * 128:(i + 1) * 128].astype(jnp.float32)
        return acc

    s1_acc[...] += lane_partials(k1)
    s2_acc[...] += lane_partials(k2)

    # joint[k, l] += sum_n K1[k, n] * K2[l, n]  (bf16 operands, f32 accumulate)
    joint_acc[...] += lax.dot_general(
        k1, k2,
        dimension_numbers=(((1,), (1,)), ((), ())),
        preferred_element_type=jnp.float32)

    @pl.when(n_idx == n_last)
    def _():
        inv_n = 1.0 / n_samples
        s1 = jnp.sum(s1_acc[...], axis=1, keepdims=True)    # (NB, 1)
        s2 = jnp.sum(s2_acc[...], axis=1, keepdims=True)
        pdf1 = s1 * inv_n                                   # mean over samples
        pdf2 = s2 * inv_n
        pdf1 = pdf1 / (jnp.sum(pdf1) + epsilon)
        pdf2 = pdf2 / (jnp.sum(pdf2) + epsilon)

        joint = joint_acc[...]
        joint = joint / (jnp.sum(joint) + epsilon)

        h1 = -jnp.sum(pdf1 * jnp.log2(pdf1 + epsilon))
        h2 = -jnp.sum(pdf2 * jnp.log2(pdf2 + epsilon))
        h12 = -jnp.sum(joint * jnp.log2(joint + epsilon))

        mi = h1 + h2 - h12
        if normalize:
            mi = 2.0 * mi / (h1 + h2)

        o_ref[...] = jnp.broadcast_to(mi, o_ref.shape).astype(o_ref.dtype)


def mutual_information(input1, input2, *, sigma=SIGMA, num_bins=NUM_BINS,
                       normalize=NORMALIZE, epsilon=EPSILON, tile_n=2048):
    """input1, input2: (B, 1, H, W) float32 in [0, 255]. Returns (B,) float32."""
    B, C, H, W = input1.shape
    assert input1.shape == input2.shape and C == 1
    N = H * W
    x1 = input1.reshape(B, N).astype(jnp.float32)
    x2 = input2.reshape(B, N).astype(jnp.float32)

    tile_n = min(tile_n, _round_up(N, 256))
    n_pad = _round_up(N, tile_n)
    if n_pad != N:
        # Pad samples with a huge value: exp(c*(1e9-bin)^2) underflows to
        # exactly 0 in f32, so padding contributes nothing to any sum.
        pad = jnp.full((B, n_pad - N), 1e9, dtype=jnp.float32)
        x1 = jnp.concatenate([x1, pad], axis=1)
        x2 = jnp.concatenate([x2, pad], axis=1)
    n_tiles = n_pad // tile_n
    x1 = x1.reshape(B, n_tiles, 1, tile_n)
    x2 = x2.reshape(B, n_tiles, 1, tile_n)

    kernel = functools.partial(
        _mi_kernel,
        neg_half_inv_sigma_sq=-0.5 / float(sigma) ** 2,
        epsilon=float(epsilon),
        normalize=normalize,
        num_bins=num_bins,
        n_samples=float(N),
        bin_scale=255.0 / (num_bins - 1),
        tile_n=tile_n)

    out = pl.pallas_call(
        kernel,
        out_shape=jax.ShapeDtypeStruct((B, 1, 128), jnp.float32),
        grid_spec=pltpu.PrefetchScalarGridSpec(
            num_scalar_prefetch=0,
            grid=(B, n_tiles),
            in_specs=[
                pl.BlockSpec((pl.Squeezed(), pl.Squeezed(), 1, tile_n),
                             lambda b, n: (b, n, 0, 0)),
                pl.BlockSpec((pl.Squeezed(), pl.Squeezed(), 1, tile_n),
                             lambda b, n: (b, n, 0, 0)),
            ],
            out_specs=pl.BlockSpec((pl.Squeezed(), 1, 128),
                                   lambda b, n: (b, 0, 0)),
            scratch_shapes=[
                pltpu.VMEM((num_bins, num_bins), jnp.float32),  # joint acc
                pltpu.VMEM((num_bins, 128), jnp.float32),       # marginal 1 partials
                pltpu.VMEM((num_bins, 128), jnp.float32),       # marginal 2 partials
            ],
        ),
        compiler_params=pltpu.CompilerParams(
            dimension_semantics=("parallel", "arbitrary"),
            vmem_limit_bytes=48 * 1024 * 1024),
    )(x1, x2)
    return out[:, 0, 0]


def mutual_information_ref(input1, input2, *, sigma=SIGMA, num_bins=NUM_BINS,
                           normalize=NORMALIZE, epsilon=EPSILON):
    """Pure-JAX mirror of the PyTorch forward, for verification."""
    B, C, H, W = input1.shape
    x1 = input1.reshape(B, H * W, 1).astype(jnp.float32)
    x2 = input2.reshape(B, H * W, 1).astype(jnp.float32)
    bins = jnp.linspace(0.0, 255.0, num_bins, dtype=jnp.float32)

    def marginal(values):
        residuals = values - bins[None, None, :]
        kv = jnp.exp(-0.5 * (residuals / sigma) ** 2)          # (B, N, NB)
        pdf = jnp.mean(kv, axis=1)                             # (B, NB)
        pdf = pdf / (jnp.sum(pdf, axis=1, keepdims=True) + epsilon)
        return pdf, kv

    pdf1, kv1 = marginal(x1)
    pdf2, kv2 = marginal(x2)
    joint = jnp.einsum('bnk,bnl->bkl', kv1, kv2,
                       precision=lax.Precision.HIGHEST)
    joint = joint / (jnp.sum(joint, axis=(1, 2), keepdims=True) + epsilon)

    h1 = -jnp.sum(pdf1 * jnp.log2(pdf1 + epsilon), axis=1)
    h2 = -jnp.sum(pdf2 * jnp.log2(pdf2 + epsilon), axis=1)
    h12 = -jnp.sum(joint * jnp.log2(joint + epsilon), axis=(1, 2))
    mi = h1 + h2 - h12
    if normalize:
        mi = 2.0 * mi / (h1 + h2)
    return mi


if __name__ == "__main__":
    key = jax.random.PRNGKey(0)
    ka, kb, kc, kd, ke, kf = jax.random.split(key, 6)
    B, C = 2, 1

    # Case 1: single-tile path (16x16 image, N=256).
    img1 = jax.random.uniform(ka, (B, C, 16, 16), jnp.float32, 0.0, 255.0)
    img2 = jax.random.uniform(kb, (B, C, 16, 16), jnp.float32, 0.0, 255.0)
    out = jax.block_until_ready(mutual_information(img1, img2))
    ref = mutual_information_ref(img1, img2)
    assert out.shape == (B,)
    assert jnp.allclose(out, ref, atol=1e-2, rtol=1e-2), (out, ref)

    # Case 2: N not divisible by the tile (exercises the 1e9 padding path).
    img3 = jax.random.uniform(kc, (B, C, 10, 10), jnp.float32, 0.0, 255.0)
    img4 = jax.random.uniform(kd, (B, C, 10, 10), jnp.float32, 0.0, 255.0)
    out2 = jax.block_until_ready(mutual_information(img3, img4))
    ref2 = mutual_information_ref(img3, img4)
    assert jnp.allclose(out2, ref2, atol=1e-2, rtol=1e-2), (out2, ref2)

    # Case 3: multi-tile accumulation (64x64 image -> 2 tiles of 2048).
    img5 = jax.random.uniform(ke, (B, C, 64, 64), jnp.float32, 0.0, 255.0)
    img6 = jax.random.uniform(kf, (B, C, 64, 64), jnp.float32, 0.0, 255.0)
    out3 = jax.block_until_ready(mutual_information(img5, img6))
    ref3 = mutual_information_ref(img5, img6)
    assert jnp.allclose(out3, ref3, atol=1e-2, rtol=1e-2), (out3, ref3)

    print("KERNEL_OK")
</pallas_src>

<mosaic_0001>
module attributes {stable_mosaic.version = 11 : i64} {
  func.func @_mi_kernel(%arg0: i32, %arg1: i32, %arg2: memref<1x1x1x256xf32, #tpu.memory_space<vmem>>, %arg3: memref<1x1x1x256xf32, #tpu.memory_space<vmem>>, %arg4: memref<1x1x128xf32, #tpu.memory_space<vmem>>, %arg5: memref<256x256xf32, #tpu.memory_space<vmem>>, %arg6: memref<256x128xf32, #tpu.memory_space<vmem>>, %arg7: memref<256x128xf32, #tpu.memory_space<vmem>>) attributes {dimension_semantics = [#tpu.dimension_semantics<parallel>, #tpu.dimension_semantics<arbitrary>], iteration_bounds = array<i64: 2, 1>, scalar_prefetch = 0 : i64, scratch_operands = 3 : i64, tpu.core_type = #tpu.core_type<tc>, window_params = [{transform_indices = @transform_0, window_bounds = array<i64: 1, 1, 1, 256>}, {transform_indices = @transform_1, window_bounds = array<i64: 1, 1, 1, 256>}, {transform_indices = @transform_2, window_bounds = array<i64: 1, 1, 128>}]} {
    %c0_i32 = arith.constant 0 : i32
    %0 = arith.cmpi eq, %arg1, %c0_i32 : i32
    %1 = arith.extui %0 : i1 to i32
    %c0_i32_0 = arith.constant 0 : i32
    %2 = arith.cmpi ne, %1, %c0_i32_0 : i32
    scf.if %2 {
      %cst_25 = arith.constant 0.000000e+00 : f32
      %50 = vector.broadcast %cst_25 : f32 to vector<256x256xf32>
      %c0_26 = arith.constant 0 : index
      %c0_27 = arith.constant 0 : index
      %51 = vector.load %arg5[%c0_26, %c0_27] : memref<256x256xf32, #tpu.memory_space<vmem>>, vector<256x256xf32>
      tpu.vector_store %arg5[%c0_26, %c0_27], %50 {strides = array<i32>} : memref<256x256xf32, #tpu.memory_space<vmem>>, vector<256x256xf32>,
      %cst_28 = arith.constant 0.000000e+00 : f32
      %52 = vector.broadcast %cst_28 : f32 to vector<256x128xf32>
      %c0_29 = arith.constant 0 : index
      %c0_30 = arith.constant 0 : index
      %53 = vector.load %arg6[%c0_29, %c0_30] : memref<256x128xf32, #tpu.memory_space<vmem>>, vector<256x128xf32>
      tpu.vector_store %arg6[%c0_29, %c0_30], %52 {strides = array<i32>} : memref<256x128xf32, #tpu.memory_space<vmem>>, vector<256x128xf32>,
      %cst_31 = arith.constant 0.000000e+00 : f32
      %54 = vector.broadcast %cst_31 : f32 to vector<256x128xf32>
      %c0_32 = arith.constant 0 : index
      %c0_33 = arith.constant 0 : index
      %55 = vector.load %arg7[%c0_32, %c0_33] : memref<256x128xf32, #tpu.memory_space<vmem>>, vector<256x128xf32>
      tpu.vector_store %arg7[%c0_32, %c0_33], %54 {strides = array<i32>} : memref<256x128xf32, #tpu.memory_space<vmem>>, vector<256x128xf32>,
    } else {
    }
    %3 = tpu.iota {dimensions = array<i32: 0>} : vector<256x1xi32>
    %4 = arith.sitofp %3 : vector<256x1xi32> to vector<256x1xf32>
    %cst = arith.constant 1.000000e+00 : f32
    %5 = vector.broadcast %cst : f32 to vector<256x1xf32>
    %6 = arith.mulf %4, %5 : vector<256x1xf32>
    %c0 = arith.constant 0 : index
    %c0_1 = arith.constant 0 : index
    %c0_2 = arith.constant 0 : index
    %c0_3 = arith.constant 0 : index
    %7 = vector.load %arg2[%c0, %c0_1, %c0_2, %c0_3] : memref<1x1x1x256xf32, #tpu.memory_space<vmem>>, vector<1x1x1x256xf32>
    %8 = vector.shape_cast %7 : vector<1x1x1x256xf32> to vector<1x256xf32>
    %c0_4 = arith.constant 0 : index
    %c0_5 = arith.constant 0 : index
    %c0_6 = arith.constant 0 : index
    %c0_7 = arith.constant 0 : index
    %9 = vector.load %arg3[%c0_4, %c0_5, %c0_6, %c0_7] : memref<1x1x1x256xf32, #tpu.memory_space<vmem>>, vector<1x1x1x256xf32>
    %10 = vector.shape_cast %9 : vector<1x1x1x256xf32> to vector<1x256xf32>
    %11 = vector.broadcast %8 : vector<1x256xf32> to vector<256x256xf32>
    %12 = vector.broadcast %6 : vector<256x1xf32> to vector<256x256xf32>
    %13 = arith.subf %11, %12 : vector<256x256xf32>
    %14 = vector.broadcast %10 : vector<1x256xf32> to vector<256x256xf32>
    %15 = vector.broadcast %6 : vector<256x1xf32> to vector<256x256xf32>
    %16 = arith.subf %14, %15 : vector<256x256xf32>
    %17 = arith.mulf %13, %13 : vector<256x256xf32>
    %cst_8 = arith.constant -5.000000e+01 : f32
    %18 = vector.broadcast %cst_8 : f32 to vector<256x256xf32>
    %19 = arith.mulf %18, %17 : vector<256x256xf32>
    %20 = math.exp %19 : vector<256x256xf32>
    %21 = arith.truncf %20 : vector<256x256xf32> to vector<256x256xbf16>
    %22 = arith.mulf %16, %16 : vector<256x256xf32>
    %cst_9 = arith.constant -5.000000e+01 : f32
    %23 = vector.broadcast %cst_9 : f32 to vector<256x256xf32>
    %24 = arith.mulf %23, %22 : vector<256x256xf32>
    %25 = math.exp %24 : vector<256x256xf32>
    %26 = arith.truncf %25 : vector<256x256xf32> to vector<256x256xbf16>
    %c0_10 = arith.constant 0 : index
    %c0_11 = arith.constant 0 : index
    %27 = vector.load %arg6[%c0_10, %c0_11] : memref<256x128xf32, #tpu.memory_space<vmem>>, vector<256x128xf32>
    %28 = vector.extract_strided_slice %21 {offsets = [0, 0], sizes = [256, 128], strides = [1, 1]} : vector<256x256xbf16> to vector<256x128xbf16>
    %29 = arith.extf %28 : vector<256x128xbf16> to vector<256x128xf32>
    %30 = vector.extract_strided_slice %21 {offsets = [0, 128], sizes = [256, 128], strides = [1, 1]} : vector<256x256xbf16> to vector<256x128xbf16>
    %31 = arith.extf %30 : vector<256x128xbf16> to vector<256x128xf32>
    %32 = arith.addf %29, %31 : vector<256x128xf32>
    %33 = arith.addf %27, %32 : vector<256x128xf32>
    %c0_12 = arith.constant 0 : index
    %c0_13 = arith.constant 0 : index
    %34 = vector.load %arg6[%c0_12, %c0_13] : memref<256x128xf32, #tpu.memory_space<vmem>>, vector<256x128xf32>
    tpu.vector_store %arg6[%c0_12, %c0_13], %33 {strides = array<i32>} : memref<256x128xf32, #tpu.memory_space<vmem>>, vector<256x128xf32>,
    %c0_14 = arith.constant 0 : index
    %c0_15 = arith.constant 0 : index
    %35 = vector.load %arg7[%c0_14, %c0_15] : memref<256x128xf32, #tpu.memory_space<vmem>>, vector<256x128xf32>
    %36 = vector.extract_strided_slice %26 {offsets = [0, 0], sizes = [256, 128], strides = [1, 1]} : vector<256x256xbf16> to vector<256x128xbf16>
    %37 = arith.extf %36 : vector<256x128xbf16> to vector<256x128xf32>
    %38 = vector.extract_strided_slice %26 {offsets = [0, 128], sizes = [256, 128], strides = [1, 1]} : vector<256x256xbf16> to vector<256x128xbf16>
    %39 = arith.extf %38 : vector<256x128xbf16> to vector<256x128xf32>
    %40 = arith.addf %37, %39 : vector<256x128xf32>
    %41 = arith.addf %35, %40 : vector<256x128xf32>
    %c0_16 = arith.constant 0 : index
    %c0_17 = arith.constant 0 : index
    %42 = vector.load %arg7[%c0_16, %c0_17] : memref<256x128xf32, #tpu.memory_space<vmem>>, vector<256x128xf32>
    tpu.vector_store %arg7[%c0_16, %c0_17], %41 {strides = array<i32>} : memref<256x128xf32, #tpu.memory_space<vmem>>, vector<256x128xf32>,
    %c0_18 = arith.constant 0 : index
    %c0_19 = arith.constant 0 : index
    %43 = vector.load %arg5[%c0_18, %c0_19] : memref<256x256xf32, #tpu.memory_space<vmem>>, vector<256x256xf32>
    %cst_20 = arith.constant dense<0.000000e+00> : vector<256x256xf32>
    %44 = tpu.matmul %21, %26, %cst_20 {dimension_numbers = #tpu.dot_dimension_numbers<[1], [1], [0], [0], [0, 0, 1, 0], [], []>} : vector<256x256xbf16>, vector<256x256xbf16>, vector<256x256xf32> -> vector<256x256xf32>
    %45 = arith.addf %43, %44 : vector<256x256xf32>
    %c0_21 = arith.constant 0 : index
    %c0_22 = arith.constant 0 : index
    %46 = vector.load %arg5[%c0_21, %c0_22] : memref<256x256xf32, #tpu.memory_space<vmem>>, vector<256x256xf32>
    tpu.vector_store %arg5[%c0_21, %c0_22], %45 {strides = array<i32>} : memref<256x256xf32, #tpu.memory_space<vmem>>, vector<256x256xf32>,
    %c0_i32_23 = arith.constant 0 : i32
    %47 = arith.cmpi eq, %arg1, %c0_i32_23 : i32
    %48 = arith.extui %47 : i1 to i32
    %c0_i32_24 = arith.constant 0 : i32
    %49 = arith.cmpi ne, %48, %c0_i32_24 : i32
    scf.if %49 {
      %c0_25 = arith.constant 0 : index
      %c0_26 = arith.constant 0 : index
      %50 = vector.load %arg6[%c0_25, %c0_26] : memref<256x128xf32, #tpu.memory_space<vmem>>, vector<256x128xf32>
      %cst_27 = arith.constant dense<0.000000e+00> : vector<256xf32>
      %51 = vector.multi_reduction <add>, %50, %cst_27 [1] : vector<256x128xf32> to vector<256xf32>
      %52 = vector.shape_cast %51 : vector<256xf32> to vector<256x1xf32>
      %c0_28 = arith.constant 0 : index
      %c0_29 = arith.constant 0 : index
      %53 = vector.load %arg7[%c0_28, %c0_29] : memref<256x128xf32, #tpu.memory_space<vmem>>, vector<256x128xf32>
      %cst_30 = arith.constant dense<0.000000e+00> : vector<256xf32>
      %54 = vector.multi_reduction <add>, %53, %cst_30 [1] : vector<256x128xf32> to vector<256xf32>
      %55 = vector.shape_cast %54 : vector<256xf32> to vector<256x1xf32>
      %cst_31 = arith.constant 3.906250e-03 : f32
      %56 = vector.broadcast %cst_31 : f32 to vector<256x1xf32>
      %57 = arith.mulf %52, %56 : vector<256x1xf32>
      %cst_32 = arith.constant 3.906250e-03 : f32
      %58 = vector.broadcast %cst_32 : f32 to vector<256x1xf32>
      %59 = arith.mulf %55, %58 : vector<256x1xf32>
      %60 = vector.shape_cast %57 : vector<256x1xf32> to vector<1x256x1xf32>
      %cst_33 = arith.constant dense<0.000000e+00> : vector<1xf32>
      %61 = vector.multi_reduction <add>, %60, %cst_33 [1, 2] : vector<1x256x1xf32> to vector<1xf32>
      %62 = vector.shape_cast %61 : vector<1xf32> to vector<1x1x1xf32>
      %63 = vector.extract %62[0, 0, 0] : f32 from vector<1x1x1xf32>
      %cst_34 = arith.constant 1.000000e-10 : f32
      %64 = arith.addf %63, %cst_34 : f32
      %65 = vector.broadcast %64 : f32 to vector<256x1xf32>
      %66 = arith.divf %57, %65 : vector<256x1xf32>
      %67 = vector.shape_cast %59 : vector<256x1xf32> to vector<1x256x1xf32>
      %cst_35 = arith.constant dense<0.000000e+00> : vector<1xf32>
      %68 = vector.multi_reduction <add>, %67, %cst_35 [1, 2] : vector<1x256x1xf32> to vector<1xf32>
      %69 = vector.shape_cast %68 : vector<1xf32> to vector<1x1x1xf32>
      %70 = vector.extract %69[0, 0, 0] : f32 from vector<1x1x1xf32>
      %cst_36 = arith.constant 1.000000e-10 : f32
      %71 = arith.addf %70, %cst_36 : f32
      %72 = vector.broadcast %71 : f32 to vector<256x1xf32>
      %73 = arith.divf %59, %72 : vector<256x1xf32>
      %c0_37 = arith.constant 0 : index
      %c0_38 = arith.constant 0 : index
      %74 = vector.load %arg5[%c0_37, %c0_38] : memref<256x256xf32, #tpu.memory_space<vmem>>, vector<256x256xf32>
      %75 = vector.shape_cast %74 : vector<256x256xf32> to vector<1x256x256xf32>
      %cst_39 = arith.constant dense<0.000000e+00> : vector<1xf32>
      %76 = vector.multi_reduction <add>, %75, %cst_39 [1, 2] : vector<1x256x256xf32> to vector<1xf32>
      %77 = vector.shape_cast %76 : vector<1xf32> to vector<1x1x1xf32>
      %78 = vector.extract %77[0, 0, 0] : f32 from vector<1x1x1xf32>
      %cst_40 = arith.constant 1.000000e-10 : f32
      %79 = arith.addf %78, %cst_40 : f32
      %80 = vector.broadcast %79 : f32 to vector<256x256xf32>
      %81 = arith.divf %74, %80 : vector<256x256xf32>
      %cst_41 = arith.constant 1.000000e-10 : f32
      %82 = vector.broadcast %cst_41 : f32 to vector<256x1xf32>
      %83 = arith.addf %66, %82 : vector<256x1xf32>
      %84 = math.log %83 : vector<256x1xf32>
      %cst_42 = arith.constant 2.000000e+00 : f32
      %85 = math.log %cst_42 : f32
      %86 = vector.broadcast %85 : f32 to vector<256x1xf32>
      %87 = arith.divf %84, %86 : vector<256x1xf32>
      %88 = arith.mulf %66, %87 : vector<256x1xf32>
      %89 = vector.shape_cast %88 : vector<256x1xf32> to vector<1x256x1xf32>
      %cst_43 = arith.constant dense<0.000000e+00> : vector<1xf32>
      %90 = vector.multi_reduction <add>, %89, %cst_43 [1, 2] : vector<1x256x1xf32> to vector<1xf32>
      %91 = vector.shape_cast %90 : vector<1xf32> to vector<1x1x1xf32>
      %92 = vector.extract %91[0, 0, 0] : f32 from vector<1x1x1xf32>
      %cst_44 = arith.constant 0.000000e+00 : f32
      %93 = arith.subf %cst_44, %92 : f32
      %cst_45 = arith.constant 1.000000e-10 : f32
      %94 = vector.broadcast %cst_45 : f32 to vector<256x1xf32>
      %95 = arith.addf %73, %94 : vector<256x1xf32>
      %96 = math.log %95 : vector<256x1xf32>
      %cst_46 = arith.constant 2.000000e+00 : f32
      %97 = math.log %cst_46 : f32
      %98 = vector.broadcast %97 : f32 to vector<256x1xf32>
      %99 = arith.divf %96, %98 : vector<256x1xf32>
      %100 = arith.mulf %73, %99 : vector<256x1xf32>
      %101 = vector.shape_cast %100 : vector<256x1xf32> to vector<1x256x1xf32>
      %cst_47 = arith.constant dense<0.000000e+00> : vector<1xf32>
      %102 = vector.multi_reduction <add>, %101, %cst_47 [1, 2] : vector<1x256x1xf32> to vector<1xf32>
      %103 = vector.shape_cast %102 : vector<1xf32> to vector<1x1x1xf32>
      %104 = vector.extract %103[0, 0, 0] : f32 from vector<1x1x1xf32>
      %cst_48 = arith.constant 0.000000e+00 : f32
      %105 = arith.subf %cst_48, %104 : f32
      %cst_49 = arith.constant 1.000000e-10 : f32
      %106 = vector.broadcast %cst_49 : f32 to vector<256x256xf32>
      %107 = arith.addf %81, %106 : vector<256x256xf32>
      %108 = math.log %107 : vector<256x256xf32>
      %cst_50 = arith.constant 2.000000e+00 : f32
      %109 = math.log %cst_50 : f32
      %110 = vector.broadcast %109 : f32 to vector<256x256xf32>
      %111 = arith.divf %108, %110 : vector<256x256xf32>
      %112 = arith.mulf %81, %111 : vector<256x256xf32>
      %113 = vector.shape_cast %112 : vector<256x256xf32> to vector<1x256x256xf32>
      %cst_51 = arith.constant dense<0.000000e+00> : vector<1xf32>
      %114 = vector.multi_reduction <add>, %113, %cst_51 [1, 2] : vector<1x256x256xf32> to vector<1xf32>
      %115 = vector.shape_cast %114 : vector<1xf32> to vector<1x1x1xf32>
      %116 = vector.extract %115[0, 0, 0] : f32 from vector<1x1x1xf32>
      %cst_52 = arith.constant 0.000000e+00 : f32
      %117 = arith.subf %cst_52, %116 : f32
      %118 = arith.addf %93, %105 : f32
      %119 = arith.subf %118, %117 : f32
      %cst_53 = arith.constant 2.000000e+00 : f32
      %120 = arith.mulf %cst_53, %119 : f32
      %121 = arith.addf %93, %105 : f32
      %122 = arith.divf %120, %121 : f32
      %123 = vector.broadcast %122 : f32 to vector<1x128xf32>
      %c0_54 = arith.constant 0 : index
      %c0_55 = arith.constant 0 : index
      %c0_56 = arith.constant 0 : index
      %124 = vector.load %arg4[%c0_54, %c0_55, %c0_56] : memref<1x1x128xf32, #tpu.memory_space<vmem>>, vector<1x1x128xf32>
      %125 = vector.shape_cast %124 : vector<1x1x128xf32> to vector<1x128xf32>
      %126 = vector.shape_cast %123 : vector<1x128xf32> to vector<1x1x128xf32>
      tpu.vector_store %arg4[%c0_54, %c0_55, %c0_56], %126 {strides = array<i32>} : memref<1x1x128xf32, #tpu.memory_space<vmem>>, vector<1x1x128xf32>,
    } else {
    }
    return
  }
  func.func @transform_0(%arg0: i32, %arg1: i32) -> (i32, i32, i32, i32) {
    %c0_i32 = arith.constant 0 : i32
    %c0_i32_0 = arith.constant 0 : i32
    %c0_i32_1 = arith.constant 0 : i32
    return %arg0, %arg1, %c0_i32, %c0_i32_0 : i32, i32, i32, i32
  }
  func.func @transform_1(%arg0: i32, %arg1: i32) -> (i32, i32, i32, i32) {
    %c0_i32 = arith.constant 0 : i32
    %c0_i32_0 = arith.constant 0 : i32
    %c0_i32_1 = arith.constant 0 : i32
    return %arg0, %arg1, %c0_i32, %c0_i32_0 : i32, i32, i32, i32
  }
  func.func @transform_2(%arg0: i32, %arg1: i32) -> (i32, i32, i32) {
    %c0_i32 = arith.constant 0 : i32
    %c0_i32_0 = arith.constant 0 : i32
    %c0_i32_1 = arith.constant 0 : i32
    return %arg0, %c0_i32, %c0_i32_0 : i32, i32, i32
  }
}

</mosaic_0001>

<llo_original>
// kernel: tpu_custom_call.1
$region0: #{tpu_custom_call.1}
  #allocation0 [shape = 'u32[]', space=smem, size = 0x4, offset = 0x4, fixed_abs, tag = 'smem constant byte address 0x4 - core index']
  #allocation1 [shape = 'u32[144,128]{1,0:T(1,128)}', space=vmem, size = 0x12000, scoped, tag = 'internal scratch']
  #allocation2 [shape = 'f32[256,256]{1,0:T(8,128)}', space=vmem, size = 0x40000, scoped, tag = 'scratch operand']
  #allocation3 [shape = 'f32[256,128]{1,0:T(8,128)}', space=vmem, size = 0x20000, scoped, tag = 'scratch operand']
  #allocation4 [shape = 'f32[256,128]{1,0:T(8,128)}', space=vmem, size = 0x20000, scoped, tag = 'scratch operand']
  %s0 = inlined_call_operand.hbm [shape: f32[2,1,1,256], index: 0, kind: input, shape index: {}]
  %s1 = inlined_call_operand.hbm [shape: f32[2,1,1,256], index: 1, kind: input, shape index: {}]
  %s2 = inlined_call_operand.hbm [shape: f32[2,1,128], index: 2, kind: output, shape index: {}]
  %s3 = sld [smem:[#allocation0]]
  $region57: #{tpu_custom_call.1} parent=0
    _
  %s5 = ssub.s32 1, %s3
  %s6 = scalar_select 0, %s5, %s3
  $region1: #{tpu_custom_call.1} parent=0
    #allocation5 [shape = 'u8[2048]{0}', space=vmem, size = 0x800, scoped, tag = 'input window, operand 0']
    #allocation6 [shape = 's32[2]{0}', space=sflag, size = 0x8, scoped, tag = 'scoped memory for tpu_custom_call.1']
    #allocation7 [shape = 's32[2]{0}', space=sflag, size = 0x8, scoped, tag = 'scoped memory for tpu_custom_call.1']
    #allocation8 [shape = 'u8[2048]{0}', space=vmem, size = 0x800, scoped, tag = 'input window, operand 1']
    #allocation9 [shape = 's32[2]{0}', space=sflag, size = 0x8, scoped, tag = 'scoped memory for tpu_custom_call.1']
    #allocation10 [shape = 'u8[1024]{0}', space=vmem, size = 0x400, scoped, tag = 'output window, operand 0']
    %7 = vsyncpa [#allocation6], 0
    %s8 = scalar_lea.sflag [#allocation6], 1
    %9 = vsyncpa %s8, 0
    %10 = vsyncpa [#allocation9], 0
    %s11 = scalar_lea.sflag [#allocation9], 1
    %12 = vsyncpa %s11, 0
    %13 = vsyncpa [#allocation7], 0
    %s14 = scalar_lea.sflag [#allocation7], 1
    %15 = vsyncpa %s14, 0
    loop: start=0, step=1, limit=4
    $region2: #{tpu_custom_call.1} parent=1 // loop_pre_header
      _
    $region3: #{tpu_custom_call.1} parent=1 // loop_header
      %s17 = sphi 0, %s21
      %p18 = scmp.ge.s32.totalorder %s17, 4
      %s24 = sphi 0, %s36
      %s25 = sphi 0, %s32
      %s26 = sphi 0, %s24
      %s27 = sphi 0, %s25
      %s28 = sphi 0, %s26
      %s29 = sphi 0, %s27
      %s41 = sphi 0, %s43
      %s44 = sphi 0, %s41
      %s45 = sphi 0, %s44
      %s61 = sphi 0, %s45
      %s69 = sphi 0, %s71
      %s72 = sphi 0, %s69
      %s73 = sphi 0, %s72
      %s89 = sphi 0, %s73
      %s95 = sphi 0, %s97
      %s98 = sphi 0, %s95
      %s99 = sphi 0, %s98
      %s115 = sphi 0, %s99
    $region4: #{tpu_custom_call.1} parent=1 // loop_header_branch
      %20 = sbr.rel (%p18) target = $region8
    $region5: #{tpu_custom_call.1} parent=1 // loop_body
      %s22 = ssub.s32 %s17, 1
      %s23 = ssub.s32 %s17, 2
      %s30 = sadd.s32 1, %s25
      %p31 = scmp.ge.s32.totalorder %s30, 1
      %s32 = scalar_select %p31, 0, %s30
      %s33 = sadd.s32 1, %s24
      %s34 = scalar_select %p31, %s33, %s24
      %p35 = scmp.ge.s32.totalorder %s34, 2
      %s36 = scalar_select %p35, 0, %s34
      %s37 = ssub.s32 %s24, %s36
      %s38 = ssub.s32 %s25, %s32
      %s39 = sor.u32 %s37, %s38
      %p40 = scmp.eq.s32.totalorder %s39, 0
      %s42 = sadd.s32 %s41, 1
      %s43 = scalar_select %p40, %s41, %s42
      %p46 = pneg %p40
      %p47 = scmp.eq.s32.totalorder %s17, 1
      %p48 = por %p46, %p47
      %p49 = scmp.ne.s32.totalorder %s41, %s44
      %p50 = scmp.eq.s32.totalorder %s17, 0
      %p51 = por %p49, %p50
      %p52 = scmp.ne.s32.totalorder %s41, %s44
      %p53 = scmp.eq.s32.totalorder %s22, 1
      %p54 = por %p52, %p53
      %p55 = scmp.ne.s32.totalorder %s44, %s45
      %p56 = scmp.eq.s32.totalorder %s22, 0
      %p57 = por %p55, %p56
      %p58 = scmp.ne.s32.totalorder %s44, %s45
      %p59 = scmp.eq.s32.totalorder %s23, 1
      %p60 = por %p58, %p59
      %p62 = scmp.ne.s32.totalorder %s45, %s61
      %p63 = scmp.eq.s32.totalorder %s23, 0
      %p64 = por %p62, %p63
      %s65 = ssub.s32 %s24, %s36
      %s66 = ssub.s32 %s25, %s32
      %s67 = sor.u32 %s65, %s66
      %p68 = scmp.eq.s32.totalorder %s67, 0
      %s70 = sadd.s32 %s69, 1
      %s71 = scalar_select %p68, %s69, %s70
      %p74 = pneg %p68
      %p75 = scmp.eq.s32.totalorder %s17, 1
      %p76 = por %p74, %p75
      %p77 = scmp.ne.s32.totalorder %s69, %s72
      %p78 = scmp.eq.s32.totalorder %s17, 0
      %p79 = por %p77, %p78
      %p80 = scmp.ne.s32.totalorder %s69, %s72
      %p81 = scmp.eq.s32.totalorder %s22, 1
      %p82 = por %p80, %p81
      %p83 = scmp.ne.s32.totalorder %s72, %s73
      %p84 = scmp.eq.s32.totalorder %s22, 0
      %p85 = por %p83, %p84
      %p86 = scmp.ne.s32.totalorder %s72, %s73
      %p87 = scmp.eq.s32.totalorder %s23, 1
      %p88 = por %p86, %p87
      %p90 = scmp.ne.s32.totalorder %s73, %s89
      %p91 = scmp.eq.s32.totalorder %s23, 0
      %p92 = por %p90, %p91
      %s93 = ssub.s32 %s24, %s36
      %p94 = scmp.eq.s32.totalorder %s93, 0
      %s96 = sadd.s32 %s95, 1
      %s97 = scalar_select %p94, %s95, %s96
      %p100 = pneg %p94
      %p101 = scmp.eq.s32.totalorder %s17, 1
      %p102 = por %p100, %p101
      %p103 = scmp.ne.s32.totalorder %s95, %s98
      %p104 = scmp.eq.s32.totalorder %s17, 0
      %p105 = por %p103, %p104
      %p106 = scmp.ne.s32.totalorder %s95, %s98
      %p107 = scmp.eq.s32.totalorder %s22, 1
      %p108 = por %p106, %p107
      %p109 = scmp.ne.s32.totalorder %s98, %s99
      %p110 = scmp.eq.s32.totalorder %s22, 0
      %p111 = por %p109, %p110
      %p112 = scmp.ne.s32.totalorder %s98, %s99
      %p113 = scmp.eq.s32.totalorder %s23, 1
      %p114 = por %p112, %p113
      %p116 = scmp.ne.s32.totalorder %s99, %s115
      %p117 = scmp.eq.s32.totalorder %s23, 0
      %p118 = por %p116, %p117
      %p119 = scmp.le.s32.totalorder 1, %s17
      %p120 = scmp.lt.s32.totalorder %s17, 3
      %p121 = pnand %p119, %p120
      %p122 = pneg %p121
      // Predicated region
      $region9: #{tpu_custom_call.1} parent=5 // pred_check
        _
      $region10: #{tpu_custom_call.1} parent=5 // pred_check_branch
        %124 = sbr.rel (%p121) target = $region12
      $region11: #{tpu_custom_call.1} parent=5 // pred_region
        %s125 = ssub.s32 %s17, 1
      $region12: #{tpu_custom_call.1} parent=5 // pred_fallthru
        _
      %p126 = scmp.lt.s32.totalorder %s17, 2
      // Predicated region
      $region13: #{tpu_custom_call.1} parent=5 // pred_check
        %p127 = pneg %p126
      $region14: #{tpu_custom_call.1} parent=5 // pred_check_branch
        %129 = sbr.rel (%p127) target = $region16
      $region15: #{tpu_custom_call.1} parent=5 // pred_region
        // Predicated region
        $region17: #{tpu_custom_call.1} parent=15 // pred_check
          %p130 = pneg %p51
        $region18: #{tpu_custom_call.1} parent=15 // pred_check_branch
          %132 = sbr.rel (%p130) target = $region20
        $region19: #{tpu_custom_call.1} parent=15 // pred_region
          %s133 = sand.u32 %s41, 1
          %s134 = scalar_lea.sflag [#allocation6], %s133
          %s135 = sand.u32 %s41, 1
          %s136 = smul.addr %s135, 2
          %s137 = scalar_lea.vmem [#allocation5], %s136
          %s139 = ssub.s32 32, 32
          %140 = vsyncadd %s134, %s139
          %s141 = smul.addr %s25, 2
          %s142 = smul.addr %s24, 2
          %s143 = sadd.s32 %s141, %s142
          %s144 = smul.addr %s143, 16
          %s145 = scalar_lea.hbm %s0, %s144
          %s147 = sshll.u32 %s137, 4
          %s148 = int_to_ptr.vmem [resolvable:$true] %s147
          %150 = dma.hbm_to_vmem [thread:$0]  %s145, 32, %s148, %s134
        $region20: #{tpu_custom_call.1} parent=15 // pred_fallthru
          _
        // Predicated region
        $region21: #{tpu_custom_call.1} parent=15 // pred_check
          %p151 = pneg %p79
        $region22: #{tpu_custom_call.1} parent=15 // pred_check_branch
          %153 = sbr.rel (%p151) target = $region24
        $region23: #{tpu_custom_call.1} parent=15 // pred_region
          %s154 = sand.u32 %s69, 1
          %s155 = scalar_lea.sflag [#allocation9], %s154
          %s156 = sand.u32 %s69, 1
          %s157 = smul.addr %s156, 2
          %s158 = scalar_lea.vmem [#allocation8], %s157
          %s160 = ssub.s32 32, 32
          %161 = vsyncadd %s155, %s160
          %s162 = smul.addr %s25, 2
          %s163 = smul.addr %s24, 2
          %s164 = sadd.s32 %s162, %s163
          %s165 = smul.addr %s164, 16
          %s166 = scalar_lea.hbm %s1, %s165
          %s168 = sshll.u32 %s158, 4
          %s169 = int_to_ptr.vmem [resolvable:$true] %s168
          %171 = dma.hbm_to_vmem [thread:$0]  %s166, 32, %s169, %s155
        $region24: #{tpu_custom_call.1} parent=15 // pred_fallthru
          _
      $region16: #{tpu_custom_call.1} parent=5 // pred_fallthru
        _
      %p172 = scmp.le.s32.totalorder 1, %s17
      %p173 = scmp.lt.s32.totalorder %s17, 3
      %p174 = pnand %p172, %p173
      %p175 = pneg %p174
      // Predicated region
      $region25: #{tpu_custom_call.1} parent=5 // pred_check
        _
      $region26: #{tpu_custom_call.1} parent=5 // pred_check_branch
        %177 = sbr.rel (%p174) target = $region28
      $region27: #{tpu_custom_call.1} parent=5 // pred_region
        %s178 = ssub.s32 %s17, 1
        %s179 = sand.u32 %s44, 1
        %s180 = scalar_lea.sflag [#allocation6], %s179
        %s181 = sand.u32 %s44, 1
        %s182 = smul.addr %s181, 2
        %s183 = scalar_lea.vmem [#allocation5], %s182
        // Predicated region
        $region29: #{tpu_custom_call.1} parent=27 // pred_check
          %p184 = pneg %p57
        $region30: #{tpu_custom_call.1} parent=27 // pred_check_branch
          %186 = sbr.rel (%p184) target = $region32
        $region31: #{tpu_custom_call.1} parent=27 // pred_region
          %187 = dma.done %s180, 32
        $region32: #{tpu_custom_call.1} parent=27 // pred_fallthru
          _
        %s188 = sand.u32 %s72, 1
        %s189 = scalar_lea.sflag [#allocation9], %s188
        %s190 = sand.u32 %s72, 1
        %s191 = smul.addr %s190, 2
        %s192 = scalar_lea.vmem [#allocation8], %s191
        // Predicated region
        $region33: #{tpu_custom_call.1} parent=27 // pred_check
          %p193 = pneg %p85
        $region34: #{tpu_custom_call.1} parent=27 // pred_check_branch
          %195 = sbr.rel (%p193) target = $region36
        $region35: #{tpu_custom_call.1} parent=27 // pred_region
          %196 = dma.done %s189, 32
        $region36: #{tpu_custom_call.1} parent=27 // pred_fallthru
          _
        %s197 = sand.u32 %s44, 1
        %s198 = scalar_lea.sflag [#allocation6], %s197
        %s199 = sand.u32 %s44, 1
        %s200 = smul.addr %s199, 2
        %s201 = scalar_lea.vmem [#allocation5], %s200
        %p202 = pneg %p57
        %p203 = pneg %p54
        %s204 = sand.u32 %s72, 1
        %s205 = scalar_lea.sflag [#allocation9], %s204
        %s206 = sand.u32 %s72, 1
        %s207 = smul.addr %s206, 2
        %s208 = scalar_lea.vmem [#allocation8], %s207
        %p209 = pneg %p85
        %p210 = pneg %p82
        %p211 = pneg %p111
        %p212 = pneg %p108
        %s213 = sand.u32 %s98, 1
        %s214 = scalar_lea.sflag [#allocation7], %s213
        %s215 = sand.u32 %s98, 1
        %s216 = scalar_lea.vmem [#allocation10], %s215
        %p217 = scmp.eq.s32.totalorder %s27, 0
        // Predicated region
        $region37: #{tpu_custom_call.1} parent=27 // pred_check
          %p218 = pneg %p217
        $region38: #{tpu_custom_call.1} parent=27 // pred_check_branch
          %220 = sbr.rel (%p218) target = $region40
        $region39: #{tpu_custom_call.1} parent=27 // pred_region
          %221 = vst [vmem:[#allocation2] sm:$0xff] 0.0
          %222 = vst [vmem:[#allocation2 + $0x8] sm:$0xff] 0.0
          %223 = vst [vmem:[#allocation2 + $0x10] sm:$0xff] 0.0
          %224 = vst [vmem:[#allocation2 + $0x18] sm:$0xff] 0.0
          %225 = vst [vmem:[#allocation2 + $0x20] sm:$0xff] 0.0
          %226 = vst [vmem:[#allocation2 + $0x28] sm:$0xff] 0.0
          %227 = vst [vmem:[#allocation2 + $0x30] sm:$0xff] 0.0
          %228 = vst [vmem:[#allocation2 + $0x38] sm:$0xff] 0.0
          %229 = vst [vmem:[#allocation2 + $0x40] sm:$0xff] 0.0
          %230 = vst [vmem:[#allocation2 + $0x48] sm:$0xff] 0.0
          %231 = vst [vmem:[#allocation2 + $0x50] sm:$0xff] 0.0
          %232 = vst [vmem:[#allocation2 + $0x58] sm:$0xff] 0.0
          %233 = vst [vmem:[#allocation2 + $0x60] sm:$0xff] 0.0
          %234 = vst [vmem:[#allocation2 + $0x68] sm:$0xff] 0.0
          %235 = vst [vmem:[#allocation2 + $0x70] sm:$0xff] 0.0
          %236 = vst [vmem:[#allocation2 + $0x78] sm:$0xff] 0.0
          %237 = vst [vmem:[#allocation2 + $0x80] sm:$0xff] 0.0
          %238 = vst [vmem:[#allocation2 + $0x88] sm:$0xff] 0.0
          %239 = vst [vmem:[#allocation2 + $0x90] sm:$0xff] 0.0
          %240 = vst [vmem:[#allocation2 + $0x98] sm:$0xff] 0.0
          %241 = vst [vmem:[#allocation2 + $0xa0] sm:$0xff] 0.0
          %242 = vst [vmem:[#allocation2 + $0xa8] sm:$0xff] 0.0
          %243 = vst [vmem:[#allocation2 + $0xb0] sm:$0xff] 0.0
          %244 = vst [vmem:[#allocation2 + $0xb8] sm:$0xff] 0.0
          %245 = vst [vmem:[#allocation2 + $0xc0] sm:$0xff] 0.0
          %246 = vst [vmem:[#allocation2 + $0xc8] sm:$0xff] 0.0
          %247 = vst [vmem:[#allocation2 + $0xd0] sm:$0xff] 0.0
          %248 = vst [vmem:[#allocation2 + $0xd8] sm:$0xff] 0.0
          %249 = vst [vmem:[#allocation2 + $0xe0] sm:$0xff] 0.0
          %250 = vst [vmem:[#allocation2 + $0xe8] sm:$0xff] 0.0
          %251 = vst [vmem:[#allocation2 + $0xf0] sm:$0xff] 0.0
          %252 = vst [vmem:[#allocation2 + $0xf8] sm:$0xff] 0.0
          %253 = vst [vmem:[#allocation2 + $0x100] sm:$0xff] 0.0
          %254 = vst [vmem:[#allocation2 + $0x108] sm:$0xff] 0.0
          %255 = vst [vmem:[#allocation2 + $0x110] sm:$0xff] 0.0
          %256 = vst [vmem:[#allocation2 + $0x118] sm:$0xff] 0.0
          %257 = vst [vmem:[#allocation2 + $0x120] sm:$0xff] 0.0
          %258 = vst [vmem:[#allocation2 + $0x128] sm:$0xff] 0.0
          %259 = vst [vmem:[#allocation2 + $0x130] sm:$0xff] 0.0
          %260 = vst [vmem:[#allocation2 + $0x138] sm:$0xff] 0.0
          %261 = vst [vmem:[#allocation2 + $0x140] sm:$0xff] 0.0
          %262 = vst [vmem:[#allocation2 + $0x148] sm:$0xff] 0.0
          %263 = vst [vmem:[#allocation2 + $0x150] sm:$0xff] 0.0
          %264 = vst [vmem:[#allocation2 + $0x158] sm:$0xff] 0.0
          %265 = vst [vmem:[#allocation2 + $0x160] sm:$0xff] 0.0
          %266 = vst [vmem:[#allocation2 + $0x168] sm:$0xff] 0.0
          %267 = vst [vmem:[#allocation2 + $0x170] sm:$0xff] 0.0
          %268 = vst [vmem:[#allocation2 + $0x178] sm:$0xff] 0.0
          %269 = vst [vmem:[#allocation2 + $0x180] sm:$0xff] 0.0
          %270 = vst [vmem:[#allocation2 + $0x188] sm:$0xff] 0.0
          %271 = vst [vmem:[#allocation2 + $0x190] sm:$0xff] 0.0
          %272 = vst [vmem:[#allocation2 + $0x198] sm:$0xff] 0.0
          %273 = vst [vmem:[#allocation2 + $0x1a0] sm:$0xff] 0.0
          %274 = vst [vmem:[#allocation2 + $0x1a8] sm:$0xff] 0.0
          %275 = vst [vmem:[#allocation2 + $0x1b0] sm:$0xff] 0.0
          %276 = vst [vmem:[#allocation2 + $0x1b8] sm:$0xff] 0.0
          %277 = vst [vmem:[#allocation2 + $0x1c0] sm:$0xff] 0.0
          %278 = vst [vmem:[#allocation2 + $0x1c8] sm:$0xff] 0.0
          %279 = vst [vmem:[#allocation2 + $0x1d0] sm:$0xff] 0.0
          %280 = vst [vmem:[#allocation2 + $0x1d8] sm:$0xff] 0.0
          %281 = vst [vmem:[#allocation2 + $0x1e0] sm:$0xff] 0.0
          %282 = vst [vmem:[#allocation2 + $0x1e8] sm:$0xff] 0.0
          %283 = vst [vmem:[#allocation2 + $0x1f0] sm:$0xff] 0.0
          %284 = vst [vmem:[#allocation2 + $0x1f8] sm:$0xff] 0.0
          %285 = vst [vmem:[#allocation3] sm:$0xff] 0.0
          %286 = vst [vmem:[#allocation3 + $0x8] sm:$0xff] 0.0
          %287 = vst [vmem:[#allocation3 + $0x10] sm:$0xff] 0.0
          %288 = vst [vmem:[#allocation3 + $0x18] sm:$0xff] 0.0
          %289 = vst [vmem:[#allocation3 + $0x20] sm:$0xff] 0.0
          %290 = vst [vmem:[#allocation3 + $0x28] sm:$0xff] 0.0
          %291 = vst [vmem:[#allocation3 + $0x30] sm:$0xff] 0.0
          %292 = vst [vmem:[#allocation3 + $0x38] sm:$0xff] 0.0
          %293 = vst [vmem:[#allocation3 + $0x40] sm:$0xff] 0.0
          %294 = vst [vmem:[#allocation3 + $0x48] sm:$0xff] 0.0
          %295 = vst [vmem:[#allocation3 + $0x50] sm:$0xff] 0.0
          %296 = vst [vmem:[#allocation3 + $0x58] sm:$0xff] 0.0
          %297 = vst [vmem:[#allocation3 + $0x60] sm:$0xff] 0.0
          %298 = vst [vmem:[#allocation3 + $0x68] sm:$0xff] 0.0
          %299 = vst [vmem:[#allocation3 + $0x70] sm:$0xff] 0.0
          %300 = vst [vmem:[#allocation3 + $0x78] sm:$0xff] 0.0
          %301 = vst [vmem:[#allocation3 + $0x80] sm:$0xff] 0.0
          %302 = vst [vmem:[#allocation3 + $0x88] sm:$0xff] 0.0
          %303 = vst [vmem:[#allocation3 + $0x90] sm:$0xff] 0.0
          %304 = vst [vmem:[#allocation3 + $0x98] sm:$0xff] 0.0
          %305 = vst [vmem:[#allocation3 + $0xa0] sm:$0xff] 0.0
          %306 = vst [vmem:[#allocation3 + $0xa8] sm:$0xff] 0.0
          %307 = vst [vmem:[#allocation3 + $0xb0] sm:$0xff] 0.0
          %308 = vst [vmem:[#allocation3 + $0xb8] sm:$0xff] 0.0
          %309 = vst [vmem:[#allocation3 + $0xc0] sm:$0xff] 0.0
          %310 = vst [vmem:[#allocation3 + $0xc8] sm:$0xff] 0.0
          %311 = vst [vmem:[#allocation3 + $0xd0] sm:$0xff] 0.0
          %312 = vst [vmem:[#allocation3 + $0xd8] sm:$0xff] 0.0
          %313 = vst [vmem:[#allocation3 + $0xe0] sm:$0xff] 0.0
          %314 = vst [vmem:[#allocation3 + $0xe8] sm:$0xff] 0.0
          %315 = vst [vmem:[#allocation3 + $0xf0] sm:$0xff] 0.0
          %316 = vst [vmem:[#allocation3 + $0xf8] sm:$0xff] 0.0
          %317 = vst [vmem:[#allocation4] sm:$0xff] 0.0
          %318 = vst [vmem:[#allocation4 + $0x8] sm:$0xff] 0.0
          %319 = vst [vmem:[#allocation4 + $0x10] sm:$0xff] 0.0
          %320 = vst [vmem:[#allocation4 + $0x18] sm:$0xff] 0.0
          %321 = vst [vmem:[#allocation4 + $0x20] sm:$0xff] 0.0
          %322 = vst [vmem:[#allocation4 + $0x28] sm:$0xff] 0.0
          %323 = vst [vmem:[#allocation4 + $0x30] sm:$0xff] 0.0
          %324 = vst [vmem:[#allocation4 + $0x38] sm:$0xff] 0.0
          %325 = vst [vmem:[#allocation4 + $0x40] sm:$0xff] 0.0
          %326 = vst [vmem:[#allocation4 + $0x48] sm:$0xff] 0.0
          %327 = vst [vmem:[#allocation4 + $0x50] sm:$0xff] 0.0
          %328 = vst [vmem:[#allocation4 + $0x58] sm:$0xff] 0.0
          %329 = vst [vmem:[#allocation4 + $0x60] sm:$0xff] 0.0
          %330 = vst [vmem:[#allocation4 + $0x68] sm:$0xff] 0.0
          %331 = vst [vmem:[#allocation4 + $0x70] sm:$0xff] 0.0
          %332 = vst [vmem:[#allocation4 + $0x78] sm:$0xff] 0.0
          %333 = vst [vmem:[#allocation4 + $0x80] sm:$0xff] 0.0
          %334 = vst [vmem:[#allocation4 + $0x88] sm:$0xff] 0.0
          %335 = vst [vmem:[#allocation4 + $0x90] sm:$0xff] 0.0
          %336 = vst [vmem:[#allocation4 + $0x98] sm:$0xff] 0.0
          %337 = vst [vmem:[#allocation4 + $0xa0] sm:$0xff] 0.0
          %338 = vst [vmem:[#allocation4 + $0xa8] sm:$0xff] 0.0
          %339 = vst [vmem:[#allocation4 + $0xb0] sm:$0xff] 0.0
          %340 = vst [vmem:[#allocation4 + $0xb8] sm:$0xff] 0.0
          %341 = vst [vmem:[#allocation4 + $0xc0] sm:$0xff] 0.0
          %342 = vst [vmem:[#allocation4 + $0xc8] sm:$0xff] 0.0
          %343 = vst [vmem:[#allocation4 + $0xd0] sm:$0xff] 0.0
          %344 = vst [vmem:[#allocation4 + $0xd8] sm:$0xff] 0.0
          %345 = vst [vmem:[#allocation4 + $0xe0] sm:$0xff] 0.0
          %346 = vst [vmem:[#allocation4 + $0xe8] sm:$0xff] 0.0
          %347 = vst [vmem:[#allocation4 + $0xf0] sm:$0xff] 0.0
          %348 = vst [vmem:[#allocation4 + $0xf8] sm:$0xff] 0.0
        $region40: #{tpu_custom_call.1} parent=27 // pred_fallthru
          _
        %v349 = vlaneseq
        %v350 = vshrl.u32 %v349, 7
        %v351 = vadd.s32 %v350, 8
        %v352 = vadd.s32 %v350, 16
        %v353 = vadd.s32 %v350, 24
        %v354 = vadd.s32 %v350, 32
        %v355 = vadd.s32 %v350, 40
        %v356 = vadd.s32 %v350, 48
        %v357 = vadd.s32 %v350, 56
        %v358 = vadd.s32 %v350, 64
        %v359 = vadd.s32 %v350, 72
        %v360 = vadd.s32 %v350, 80
        %v361 = vadd.s32 %v350, 88
        %v362 = vadd.s32 %v350, 96
        %v363 = vadd.s32 %v350, 104
        %v364 = vadd.s32 %v350, 112
        %v365 = vadd.s32 %v350, 120
        %v366 = vadd.s32 %v350, 128
        %v367 = vadd.s32 %v350, 136
        %v368 = vadd.s32 %v350, 144
        %v369 = vadd.s32 %v350, 152
        %v370 = vadd.s32 %v350, 160
        %v371 = vadd.s32 %v350, 168
        %v372 = vadd.s32 %v350, 176
        %v373 = vadd.s32 %v350, 184
        %v374 = vadd.s32 %v350, 192
        %v375 = vadd.s32 %v350, 200
        %v376 = vadd.s32 %v350, 208
        %v377 = vadd.s32 %v350, 216
        %v378 = vadd.s32 %v350, 224
        %v379 = vadd.s32 %v350, 232
        %v380 = vadd.s32 %v350, 240
        %v381 = vadd.s32 %v350, 248
        %v382 = vcvt.s32.f32 %v350
        %v383 = vcvt.s32.f32 %v351
        %v384 = vcvt.s32.f32 %v352
        %v385 = vcvt.s32.f32 %v353
        %v386 = vcvt.s32.f32 %v354
        %v387 = vcvt.s32.f32 %v355
        %v388 = vcvt.s32.f32 %v356
        %v389 = vcvt.s32.f32 %v357
        %v390 = vcvt.s32.f32 %v358
        %v391 = vcvt.s32.f32 %v359
        %v392 = vcvt.s32.f32 %v360
        %v393 = vcvt.s32.f32 %v361
        %v394 = vcvt.s32.f32 %v362
        %v395 = vcvt.s32.f32 %v363
        %v396 = vcvt.s32.f32 %v364
        %v397 = vcvt.s32.f32 %v365
        %v398 = vcvt.s32.f32 %v366
        %v399 = vcvt.s32.f32 %v367
        %v400 = vcvt.s32.f32 %v368
        %v401 = vcvt.s32.f32 %v369
        %v402 = vcvt.s32.f32 %v370
        %v403 = vcvt.s32.f32 %v371
        %v404 = vcvt.s32.f32 %v372
        %v405 = vcvt.s32.f32 %v373
        %v406 = vcvt.s32.f32 %v374
        %v407 = vcvt.s32.f32 %v375
        %v408 = vcvt.s32.f32 %v376
        %v409 = vcvt.s32.f32 %v377
        %v410 = vcvt.s32.f32 %v378
        %v411 = vcvt.s32.f32 %v379
        %v412 = vcvt.s32.f32 %v380
        %v413 = vcvt.s32.f32 %v381
        %v414 = vld [vmem:[%s183] sm:$0x3]
        %v415 = vld [vmem:[%s192] sm:$0x3]
        %v417 = vlaneseq
        %v418 = vshrl.u32 %v417, 7
        %v419 = vsub.s32 0, %v418
        %v420 = vrot.slane %v414, %v419
        %v421 = vlaneseq
        %v422 = vshrl.u32 %v421, 7
        %v423 = vsub.s32 1, %v422
        %v424 = vrot.slane %v414, %v423
        %v427 = vsub.f32 %v420, %v382
        %v428 = vsub.f32 %v424, %v382
        %v429 = vsub.f32 %v420, %v383
        %v430 = vsub.f32 %v424, %v383
        %v431 = vsub.f32 %v420, %v384
        %v432 = vsub.f32 %v424, %v384
        %v433 = vsub.f32 %v420, %v385
        %v434 = vsub.f32 %v424, %v385
        %v435 = vsub.f32 %v420, %v386
        %v436 = vsub.f32 %v424, %v386
        %v437 = vsub.f32 %v420, %v387
        %v438 = vsub.f32 %v424, %v387
        %v439 = vsub.f32 %v420, %v388
        %v440 = vsub.f32 %v424, %v388
        %v441 = vsub.f32 %v420, %v389
        %v442 = vsub.f32 %v424, %v389
        %v443 = vsub.f32 %v420, %v390
        %v444 = vsub.f32 %v424, %v390
        %v445 = vsub.f32 %v420, %v391
        %v446 = vsub.f32 %v424, %v391
        %v447 = vsub.f32 %v420, %v392
        %v448 = vsub.f32 %v424, %v392
        %v449 = vsub.f32 %v420, %v393
        %v450 = vsub.f32 %v424, %v393
        %v451 = vsub.f32 %v420, %v394
        %v452 = vsub.f32 %v424, %v394
        %v453 = vsub.f32 %v420, %v395
        %v454 = vsub.f32 %v424, %v395
        %v455 = vsub.f32 %v420, %v396
        %v456 = vsub.f32 %v424, %v396
        %v457 = vsub.f32 %v420, %v397
        %v458 = vsub.f32 %v424, %v397
        %v459 = vsub.f32 %v420, %v398
        %v460 = vsub.f32 %v424, %v398
        %v461 = vsub.f32 %v420, %v399
        %v462 = vsub.f32 %v424, %v399
        %v463 = vsub.f32 %v420, %v400
        %v464 = vsub.f32 %v424, %v400
        %v465 = vsub.f32 %v420, %v401
        %v466 = vsub.f32 %v424, %v401
        %v467 = vsub.f32 %v420, %v402
        %v468 = vsub.f32 %v424, %v402
        %v469 = vsub.f32 %v420, %v403
        %v470 = vsub.f32 %v424, %v403
        %v471 = vsub.f32 %v420, %v404
        %v472 = vsub.f32 %v424, %v404
        %v473 = vsub.f32 %v420, %v405
        %v474 = vsub.f32 %v424, %v405
        %v475 = vsub.f32 %v420, %v406
        %v476 = vsub.f32 %v424, %v406
        %v477 = vsub.f32 %v420, %v407
        %v478 = vsub.f32 %v424, %v407
        %v479 = vsub.f32 %v420, %v408
        %v480 = vsub.f32 %v424, %v408
        %v481 = vsub.f32 %v420, %v409
        %v482 = vsub.f32 %v424, %v409
        %v483 = vsub.f32 %v420, %v410
        %v484 = vsub.f32 %v424, %v410
        %v485 = vsub.f32 %v420, %v411
        %v486 = vsub.f32 %v424, %v411
        %v487 = vsub.f32 %v420, %v412
        %v488 = vsub.f32 %v424, %v412
        %v489 = vsub.f32 %v420, %v413
        %v490 = vsub.f32 %v424, %v413
        %v492 = vlaneseq
        %v493 = vshrl.u32 %v492, 7
        %v494 = vsub.s32 0, %v493
        %v495 = vrot.slane %v415, %v494
        %v496 = vlaneseq
        %v497 = vshrl.u32 %v496, 7
        %v498 = vsub.s32 1, %v497
        %v499 = vrot.slane %v415, %v498
        %v502 = vsub.f32 %v495, %v382
        %v503 = vsub.f32 %v499, %v382
        %v504 = vsub.f32 %v495, %v383
        %v505 = vsub.f32 %v499, %v383
        %v506 = vsub.f32 %v495, %v384
        %v507 = vsub.f32 %v499, %v384
        %v508 = vsub.f32 %v495, %v385
        %v509 = vsub.f32 %v499, %v385
        %v510 = vsub.f32 %v495, %v386
        %v511 = vsub.f32 %v499, %v386
        %v512 = vsub.f32 %v495, %v387
        %v513 = vsub.f32 %v499, %v387
        %v514 = vsub.f32 %v495, %v388
        %v515 = vsub.f32 %v499, %v388
        %v516 = vsub.f32 %v495, %v389
        %v517 = vsub.f32 %v499, %v389
        %v518 = vsub.f32 %v495, %v390
        %v519 = vsub.f32 %v499, %v390
        %v520 = vsub.f32 %v495, %v391
        %v521 = vsub.f32 %v499, %v391
        %v522 = vsub.f32 %v495, %v392
        %v523 = vsub.f32 %v499, %v392
        %v524 = vsub.f32 %v495, %v393
        %v525 = vsub.f32 %v499, %v393
        %v526 = vsub.f32 %v495, %v394
        %v527 = vsub.f32 %v499, %v394
        %v528 = vsub.f32 %v495, %v395
        %v529 = vsub.f32 %v499, %v395
        %v530 = vsub.f32 %v495, %v396
        %v531 = vsub.f32 %v499, %v396
        %v532 = vsub.f32 %v495, %v397
        %v533 = vsub.f32 %v499, %v397
        %v534 = vsub.f32 %v495, %v398
        %v535 = vsub.f32 %v499, %v398
        %v536 = vsub.f32 %v495, %v399
        %v537 = vsub.f32 %v499, %v399
        %v538 = vsub.f32 %v495, %v400
        %v539 = vsub.f32 %v499, %v400
        %v540 = vsub.f32 %v495, %v401
        %v541 = vsub.f32 %v499, %v401
        %v542 = vsub.f32 %v495, %v402
        %v543 = vsub.f32 %v499, %v402
        %v544 = vsub.f32 %v495, %v403
        %v545 = vsub.f32 %v499, %v403
        %v546 = vsub.f32 %v495, %v404
        %v547 = vsub.f32 %v499, %v404
        %v548 = vsub.f32 %v495, %v405
        %v549 = vsub.f32 %v499, %v405
        %v550 = vsub.f32 %v495, %v406
        %v551 = vsub.f32 %v499, %v406
        %v552 = vsub.f32 %v495, %v407
        %v553 = vsub.f32 %v499, %v407
        %v554 = vsub.f32 %v495, %v408
        %v555 = vsub.f32 %v499, %v408
        %v556 = vsub.f32 %v495, %v409
        %v557 = vsub.f32 %v499, %v409
        %v558 = vsub.f32 %v495, %v410
        %v559 = vsub.f32 %v499, %v410
        %v560 = vsub.f32 %v495, %v411
        %v561 = vsub.f32 %v499, %v411
        %v562 = vsub.f32 %v495, %v412
        %v563 = vsub.f32 %v499, %v412
        %v564 = vsub.f32 %v495, %v413
        %v565 = vsub.f32 %v499, %v413
        %v566 = vmul.f32 %v427, %v427
        %v567 = vmul.f32 %v428, %v428
        %v568 = vmul.f32 %v429, %v429
        %v569 = vmul.f32 %v430, %v430
        %v570 = vmul.f32 %v431, %v431
        %v571 = vmul.f32 %v432, %v432
        %v572 = vmul.f32 %v433, %v433
        %v573 = vmul.f32 %v434, %v434
        %v574 = vmul.f32 %v435, %v435
        %v575 = vmul.f32 %v436, %v436
        %v576 = vmul.f32 %v437, %v437
        %v577 = vmul.f32 %v438, %v438
        %v578 = vmul.f32 %v439, %v439
        %v579 = vmul.f32 %v440, %v440
        %v580 = vmul.f32 %v441, %v441
        %v581 = vmul.f32 %v442, %v442
        %v582 = vmul.f32 %v443, %v443
        %v583 = vmul.f32 %v444, %v444
        %v584 = vmul.f32 %v445, %v445
        %v585 = vmul.f32 %v446, %v446
        %v586 = vmul.f32 %v447, %v447
        %v587 = vmul.f32 %v448, %v448
        %v588 = vmul.f32 %v449, %v449
        %v589 = vmul.f32 %v450, %v450
        %v590 = vmul.f32 %v451, %v451
        %v591 = vmul.f32 %v452, %v452
        %v592 = vmul.f32 %v453, %v453
        %v593 = vmul.f32 %v454, %v454
        %v594 = vmul.f32 %v455, %v455
        %v595 = vmul.f32 %v456, %v456
        %v596 = vmul.f32 %v457, %v457
        %v597 = vmul.f32 %v458, %v458
        %v598 = vmul.f32 %v459, %v459
        %v599 = vmul.f32 %v460, %v460
        %v600 = vmul.f32 %v461, %v461
        %v601 = vmul.f32 %v462, %v462
        %v602 = vmul.f32 %v463, %v463
        %v603 = vmul.f32 %v464, %v464
        %v604 = vmul.f32 %v465, %v465
        %v605 = vmul.f32 %v466, %v466
        %v606 = vmul.f32 %v467, %v467
        %v607 = vmul.f32 %v468, %v468
        %v608 = vmul.f32 %v469, %v469
        %v609 = vmul.f32 %v470, %v470
        %v610 = vmul.f32 %v471, %v471
        %v611 = vmul.f32 %v472, %v472
        %v612 = vmul.f32 %v473, %v473
        %v613 = vmul.f32 %v474, %v474
        %v614 = vmul.f32 %v475, %v475
        %v615 = vmul.f32 %v476, %v476
        %v616 = vmul.f32 %v477, %v477
        %v617 = vmul.f32 %v478, %v478
        %v618 = vmul.f32 %v479, %v479
        %v619 = vmul.f32 %v480, %v480
        %v620 = vmul.f32 %v481, %v481
        %v621 = vmul.f32 %v482, %v482
        %v622 = vmul.f32 %v483, %v483
        %v623 = vmul.f32 %v484, %v484
        %v624 = vmul.f32 %v485, %v485
        %v625 = vmul.f32 %v486, %v486
        %v626 = vmul.f32 %v487, %v487
        %v627 = vmul.f32 %v488, %v488
        %v628 = vmul.f32 %v489, %v489
        %v629 = vmul.f32 %v490, %v490
        %v630 = vmul.f32 %v566, -50.0
        %v631 = vmul.f32 %v567, -50.0
        %v632 = vmul.f32 %v568, -50.0
        %v633 = vmul.f32 %v569, -50.0
        %v634 = vmul.f32 %v570, -50.0
        %v635 = vmul.f32 %v571, -50.0
        %v636 = vmul.f32 %v572, -50.0
        %v637 = vmul.f32 %v573, -50.0
        %v638 = vmul.f32 %v574, -50.0
        %v639 = vmul.f32 %v575, -50.0
        %v640 = vmul.f32 %v576, -50.0
        %v641 = vmul.f32 %v577, -50.0
        %v642 = vmul.f32 %v578, -50.0
        %v643 = vmul.f32 %v579, -50.0
        %v644 = vmul.f32 %v580, -50.0
        %v645 = vmul.f32 %v581, -50.0
        %v646 = vmul.f32 %v582, -50.0
        %v647 = vmul.f32 %v583, -50.0
        %v648 = vmul.f32 %v584, -50.0
        %v649 = vmul.f32 %v585, -50.0
        %v650 = vmul.f32 %v586, -50.0
        %v651 = vmul.f32 %v587, -50.0
        %v652 = vmul.f32 %v588, -50.0
        %v653 = vmul.f32 %v589, -50.0
        %v654 = vmul.f32 %v590, -50.0
        %v655 = vmul.f32 %v591, -50.0
        %v656 = vmul.f32 %v592, -50.0
        %v657 = vmul.f32 %v593, -50.0
        %v658 = vmul.f32 %v594, -50.0
        %v659 = vmul.f32 %v595, -50.0
        %v660 = vmul.f32 %v596, -50.0
        %v661 = vmul.f32 %v597, -50.0
        %v662 = vmul.f32 %v598, -50.0
        %v663 = vmul.f32 %v599, -50.0
        %v664 = vmul.f32 %v600, -50.0
        %v665 = vmul.f32 %v601, -50.0
        %v666 = vmul.f32 %v602, -50.0
        %v667 = vmul.f32 %v603, -50.0
        %v668 = vmul.f32 %v604, -50.0
        %v669 = vmul.f32 %v605, -50.0
        %v670 = vmul.f32 %v606, -50.0
        %v671 = vmul.f32 %v607, -50.0
        %v672 = vmul.f32 %v608, -50.0
        %v673 = vmul.f32 %v609, -50.0
        %v674 = vmul.f32 %v610, -50.0
        %v675 = vmul.f32 %v611, -50.0
        %v676 = vmul.f32 %v612, -50.0
        %v677 = vmul.f32 %v613, -50.0
        %v678 = vmul.f32 %v614, -50.0
        %v679 = vmul.f32 %v615, -50.0
        %v680 = vmul.f32 %v616, -50.0
        %v681 = vmul.f32 %v617, -50.0
        %v682 = vmul.f32 %v618, -50.0
        %v683 = vmul.f32 %v619, -50.0
        %v684 = vmul.f32 %v620, -50.0
        %v685 = vmul.f32 %v621, -50.0
        %v686 = vmul.f32 %v622, -50.0
        %v687 = vmul.f32 %v623, -50.0
        %v688 = vmul.f32 %v624, -50.0
        %v689 = vmul.f32 %v625, -50.0
        %v690 = vmul.f32 %v626, -50.0
        %v691 = vmul.f32 %v627, -50.0
        %v692 = vmul.f32 %v628, -50.0
        %v693 = vmul.f32 %v629, -50.0
        %v694 = vmul.f32 %v630, 1.442695
        %v695 = vpow.pop %v694
        %v696 = vmul.f32 %v631, 1.442695
        %v697 = vpow.pop %v696
        %v698 = vmul.f32 %v632, 1.442695
        %v699 = vpow.pop %v698
        %v700 = vmul.f32 %v633, 1.442695
        %v701 = vpow.pop %v700
        %v702 = vmul.f32 %v634, 1.442695
        %v703 = vpow.pop %v702
        %v704 = vmul.f32 %v635, 1.442695
        %v705 = vpow.pop %v704
        %v706 = vmul.f32 %v636, 1.442695
        %v707 = vpow.pop %v706
        %v708 = vmul.f32 %v637, 1.442695
        %v709 = vpow.pop %v708
        %v710 = vmul.f32 %v638, 1.442695
        %v711 = vpow.pop %v710
        %v712 = vmul.f32 %v639, 1.442695
        %v713 = vpow.pop %v712
        %v714 = vmul.f32 %v640, 1.442695
        %v715 = vpow.pop %v714
        %v716 = vmul.f32 %v641, 1.442695
        %v717 = vpow.pop %v716
        %v718 = vmul.f32 %v642, 1.442695
        %v719 = vpow.pop %v718
        %v720 = vmul.f32 %v643, 1.442695
        %v721 = vpow.pop %v720
        %v722 = vmul.f32 %v644, 1.442695
        %v723 = vpow.pop %v722
        %v724 = vmul.f32 %v645, 1.442695
        %v725 = vpow.pop %v724
        %v726 = vmul.f32 %v646, 1.442695
        %v727 = vpow.pop %v726
        %v728 = vmul.f32 %v647, 1.442695
        %v729 = vpow.pop %v728
        %v730 = vmul.f32 %v648, 1.442695
        %v731 = vpow.pop %v730
        %v732 = vmul.f32 %v649, 1.442695
        %v733 = vpow.pop %v732
        %v734 = vmul.f32 %v650, 1.442695
        %v735 = vpow.pop %v734
        %v736 = vmul.f32 %v651, 1.442695
        %v737 = vpow.pop %v736
        %v738 = vmul.f32 %v652, 1.442695
        %v739 = vpow.pop %v738
        %v740 = vmul.f32 %v653, 1.442695
        %v741 = vpow.pop %v740
        %v742 = vmul.f32 %v654, 1.442695
        %v743 = vpow.pop %v742
        %v744 = vmul.f32 %v655, 1.442695
        %v745 = vpow.pop %v744
        %v746 = vmul.f32 %v656, 1.442695
        %v747 = vpow.pop %v746
        %v748 = vmul.f32 %v657, 1.442695
        %v749 = vpow.pop %v748
        %v750 = vmul.f32 %v658, 1.442695
        %v751 = vpow.pop %v750
        %v752 = vmul.f32 %v659, 1.442695
        %v753 = vpow.pop %v752
        %v754 = vmul.f32 %v660, 1.442695
        %v755 = vpow.pop %v754
        %v756 = vmul.f32 %v661, 1.442695
        %v757 = vpow.pop %v756
        %v758 = vmul.f32 %v662, 1.442695
        %v759 = vpow.pop %v758
        %v760 = vmul.f32 %v663, 1.442695
        %v761 = vpow.pop %v760
        %v762 = vmul.f32 %v664, 1.442695
        %v763 = vpow.pop %v762
        %v764 = vmul.f32 %v665, 1.442695
        %v765 = vpow.pop %v764
        %v766 = vmul.f32 %v666, 1.442695
        %v767 = vpow.pop %v766
        %v768 = vmul.f32 %v667, 1.442695
        %v769 = vpow.pop %v768
        %v770 = vmul.f32 %v668, 1.442695
        %v771 = vpow.pop %v770
        %v772 = vmul.f32 %v669, 1.442695
        %v773 = vpow.pop %v772
        %v774 = vmul.f32 %v670, 1.442695
        %v775 = vpow.pop %v774
        %v776 = vmul.f32 %v671, 1.442695
        %v777 = vpow.pop %v776
        %v778 = vmul.f32 %v672, 1.442695
        %v779 = vpow.pop %v778
        %v780 = vmul.f32 %v673, 1.442695
        %v781 = vpow.pop %v780
        %v782 = vmul.f32 %v674, 1.442695
        %v783 = vpow.pop %v782
        %v784 = vmul.f32 %v675, 1.442695
        %v785 = vpow.pop %v784
        %v786 = vmul.f32 %v676, 1.442695
        %v787 = vpow.pop %v786
        %v788 = vmul.f32 %v677, 1.442695
        %v789 = vpow.pop %v788
        %v790 = vmul.f32 %v678, 1.442695
        %v791 = vpow.pop %v790
        %v792 = vmul.f32 %v679, 1.442695
        %v793 = vpow.pop %v792
        %v794 = vmul.f32 %v680, 1.442695
        %v795 = vpow.pop %v794
        %v796 = vmul.f32 %v681, 1.442695
        %v797 = vpow.pop %v796
        %v798 = vmul.f32 %v682, 1.442695
        %v799 = vpow.pop %v798
        %v800 = vmul.f32 %v683, 1.442695
        %v801 = vpow.pop %v800
        %v802 = vmul.f32 %v684, 1.442695
        %v803 = vpow.pop %v802
        %v804 = vmul.f32 %v685, 1.442695
        %v805 = vpow.pop %v804
        %v806 = vmul.f32 %v686, 1.442695
        %v807 = vpow.pop %v806
        %v808 = vmul.f32 %v687, 1.442695
        %v809 = vpow.pop %v808
        %v810 = vmul.f32 %v688, 1.442695
        %v811 = vpow.pop %v810
        %v812 = vmul.f32 %v689, 1.442695
        %v813 = vpow.pop %v812
        %v814 = vmul.f32 %v690, 1.442695
        %v815 = vpow.pop %v814
        %v816 = vmul.f32 %v691, 1.442695
        %v817 = vpow.pop %v816
        %v818 = vmul.f32 %v692, 1.442695
        %v819 = vpow.pop %v818
        %v820 = vmul.f32 %v693, 1.442695
        %v821 = vpow.pop %v820
        %v822 = vpack.c.bf16 %v699, %v695
        %v823 = vpack.c.bf16 %v701, %v697
        %v824 = vpack.c.bf16 %v707, %v703
        %v825 = vpack.c.bf16 %v709, %v705
        %v826 = vpack.c.bf16 %v715, %v711
        %v827 = vpack.c.bf16 %v717, %v713
        %v828 = vpack.c.bf16 %v723, %v719
        %v829 = vpack.c.bf16 %v725, %v721
        %v830 = vpack.c.bf16 %v731, %v727
        %v831 = vpack.c.bf16 %v733, %v729
        %v832 = vpack.c.bf16 %v739, %v735
        %v833 = vpack.c.bf16 %v741, %v737
        %v834 = vpack.c.bf16 %v747, %v743
        %v835 = vpack.c.bf16 %v749, %v745
        %v836 = vpack.c.bf16 %v755, %v751
        %v837 = vpack.c.bf16 %v757, %v753
        %v838 = vpack.c.bf16 %v763, %v759
        %v839 = vpack.c.bf16 %v765, %v761
        %v840 = vpack.c.bf16 %v771, %v767
        %v841 = vpack.c.bf16 %v773, %v769
        %v842 = vpack.c.bf16 %v779, %v775
        %v843 = vpack.c.bf16 %v781, %v777
        %v844 = vpack.c.bf16 %v787, %v783
        %v845 = vpack.c.bf16 %v789, %v785
        %v846 = vpack.c.bf16 %v795, %v791
        %v847 = vpack.c.bf16 %v797, %v793
        %v848 = vpack.c.bf16 %v803, %v799
        %v849 = vpack.c.bf16 %v805, %v801
        %v850 = vpack.c.bf16 %v811, %v807
        %v851 = vpack.c.bf16 %v813, %v809
        %v852 = vpack.c.bf16 %v819, %v815
        %v853 = vpack.c.bf16 %v821, %v817
        %v854 = vmul.f32 %v502, %v502
        %v855 = vmul.f32 %v503, %v503
        %v856 = vmul.f32 %v504, %v504
        %v857 = vmul.f32 %v505, %v505
        %v858 = vmul.f32 %v506, %v506
        %v859 = vmul.f32 %v507, %v507
        %v860 = vmul.f32 %v508, %v508
        %v861 = vmul.f32 %v509, %v509
        %v862 = vmul.f32 %v510, %v510
        %v863 = vmul.f32 %v511, %v511
        %v864 = vmul.f32 %v512, %v512
        %v865 = vmul.f32 %v513, %v513
        %v866 = vmul.f32 %v514, %v514
        %v867 = vmul.f32 %v515, %v515
        %v868 = vmul.f32 %v516, %v516
        %v869 = vmul.f32 %v517, %v517
        %v870 = vmul.f32 %v518, %v518
        %v871 = vmul.f32 %v519, %v519
        %v872 = vmul.f32 %v520, %v520
        %v873 = vmul.f32 %v521, %v521
        %v874 = vmul.f32 %v522, %v522
        %v875 = vmul.f32 %v523, %v523
        %v876 = vmul.f32 %v524, %v524
        %v877 = vmul.f32 %v525, %v525
        %v878 = vmul.f32 %v526, %v526
        %v879 = vmul.f32 %v527, %v527
        %v880 = vmul.f32 %v528, %v528
        %v881 = vmul.f32 %v529, %v529
        %v882 = vmul.f32 %v530, %v530
        %v883 = vmul.f32 %v531, %v531
        %v884 = vmul.f32 %v532, %v532
        %v885 = vmul.f32 %v533, %v533
        %v886 = vmul.f32 %v534, %v534
        %v887 = vmul.f32 %v535, %v535
        %v888 = vmul.f32 %v536, %v536
        %v889 = vmul.f32 %v537, %v537
        %v890 = vmul.f32 %v538, %v538
        %v891 = vmul.f32 %v539, %v539
        %v892 = vmul.f32 %v540, %v540
        %v893 = vmul.f32 %v541, %v541
        %v894 = vmul.f32 %v542, %v542
        %v895 = vmul.f32 %v543, %v543
        %v896 = vmul.f32 %v544, %v544
        %v897 = vmul.f32 %v545, %v545
        %v898 = vmul.f32 %v546, %v546
        %v899 = vmul.f32 %v547, %v547
        %v900 = vmul.f32 %v548, %v548
        %v901 = vmul.f32 %v549, %v549
        %v902 = vmul.f32 %v550, %v550
        %v903 = vmul.f32 %v551, %v551
        %v904 = vmul.f32 %v552, %v552
        %v905 = vmul.f32 %v553, %v553
        %v906 = vmul.f32 %v554, %v554
        %v907 = vmul.f32 %v555, %v555
        %v908 = vmul.f32 %v556, %v556
        %v909 = vmul.f32 %v557, %v557
        %v910 = vmul.f32 %v558, %v558
        %v911 = vmul.f32 %v559, %v559
        %v912 = vmul.f32 %v560, %v560
        %v913 = vmul.f32 %v561, %v561
        %v914 = vmul.f32 %v562, %v562
        %v915 = vmul.f32 %v563, %v563
        %v916 = vmul.f32 %v564, %v564
        %v917 = vmul.f32 %v565, %v565
        %v918 = vmul.f32 %v854, -50.0
        %v919 = vmul.f32 %v855, -50.0
        %v920 = vmul.f32 %v856, -50.0
        %v921 = vmul.f32 %v857, -50.0
        %v922 = vmul.f32 %v858, -50.0
        %v923 = vmul.f32 %v859, -50.0
        %v924 = vmul.f32 %v860, -50.0
        %v925 = vmul.f32 %v861, -50.0
        %v926 = vmul.f32 %v862, -50.0
        %v927 = vmul.f32 %v863, -50.0
        %v928 = vmul.f32 %v864, -50.0
        %v929 = vmul.f32 %v865, -50.0
        %v930 = vmul.f32 %v866, -50.0
        %v931 = vmul.f32 %v867, -50.0
        %v932 = vmul.f32 %v868, -50.0
        %v933 = vmul.f32 %v869, -50.0
        %v934 = vmul.f32 %v870, -50.0
        %v935 = vmul.f32 %v871, -50.0
        %v936 = vmul.f32 %v872, -50.0
        %v937 = vmul.f32 %v873, -50.0
        %v938 = vmul.f32 %v874, -50.0
        %v939 = vmul.f32 %v875, -50.0
        %v940 = vmul.f32 %v876, -50.0
        %v941 = vmul.f32 %v877, -50.0
        %v942 = vmul.f32 %v878, -50.0
        %v943 = vmul.f32 %v879, -50.0
        %v944 = vmul.f32 %v880, -50.0
        %v945 = vmul.f32 %v881, -50.0
        %v946 = vmul.f32 %v882, -50.0
        %v947 = vmul.f32 %v883, -50.0
        %v948 = vmul.f32 %v884, -50.0
        %v949 = vmul.f32 %v885, -50.0
        %v950 = vmul.f32 %v886, -50.0
        %v951 = vmul.f32 %v887, -50.0
        %v952 = vmul.f32 %v888, -50.0
        %v953 = vmul.f32 %v889, -50.0
        %v954 = vmul.f32 %v890, -50.0
        %v955 = vmul.f32 %v891, -50.0
        %v956 = vmul.f32 %v892, -50.0
        %v957 = vmul.f32 %v893, -50.0
        %v958 = vmul.f32 %v894, -50.0
        %v959 = vmul.f32 %v895, -50.0
        %v960 = vmul.f32 %v896, -50.0
        %v961 = vmul.f32 %v897, -50.0
        %v962 = vmul.f32 %v898, -50.0
        %v963 = vmul.f32 %v899, -50.0
        %v964 = vmul.f32 %v900, -50.0
        %v965 = vmul.f32 %v901, -50.0
        %v966 = vmul.f32 %v902, -50.0
        %v967 = vmul.f32 %v903, -50.0
        %v968 = vmul.f32 %v904, -50.0
        %v969 = vmul.f32 %v905, -50.0
        %v970 = vmul.f32 %v906, -50.0
        %v971 = vmul.f32 %v907, -50.0
        %v972 = vmul.f32 %v908, -50.0
        %v973 = vmul.f32 %v909, -50.0
        %v974 = vmul.f32 %v910, -50.0
        %v975 = vmul.f32 %v911, -50.0
        %v976 = vmul.f32 %v912, -50.0
        %v977 = vmul.f32 %v913, -50.0
        %v978 = vmul.f32 %v914, -50.0
        %v979 = vmul.f32 %v915, -50.0
        %v980 = vmul.f32 %v916, -50.0
        %v981 = vmul.f32 %v917, -50.0
        %v982 = vmul.f32 %v918, 1.442695
        %v983 = vpow.pop %v982
        %v984 = vmul.f32 %v919, 1.442695
        %v985 = vpow.pop %v984
        %v986 = vmul.f32 %v920, 1.442695
        %v987 = vpow.pop %v986
        %v988 = vmul.f32 %v921, 1.442695
        %v989 = vpow.pop %v988
        %v990 = vmul.f32 %v922, 1.442695
        %v991 = vpow.pop %v990
        %v992 = vmul.f32 %v923, 1.442695
        %v993 = vpow.pop %v992
        %v994 = vmul.f32 %v924, 1.442695
        %v995 = vpow.pop %v994
        %v996 = vmul.f32 %v925, 1.442695
        %v997 = vpow.pop %v996
        %v998 = vmul.f32 %v926, 1.442695
        %v999 = vpow.pop %v998
        %v1000 = vmul.f32 %v927, 1.442695
        %v1001 = vpow.pop %v1000
        %v1002 = vmul.f32 %v928, 1.442695
        %v1003 = vpow.pop %v1002
        %v1004 = vmul.f32 %v929, 1.442695
        %v1005 = vpow.pop %v1004
        %v1006 = vmul.f32 %v930, 1.442695
        %v1007 = vpow.pop %v1006
        %v1008 = vmul.f32 %v931, 1.442695
        %v1009 = vpow.pop %v1008
        %v1010 = vmul.f32 %v932, 1.442695
        %v1011 = vpow.pop %v1010
        %v1012 = vmul.f32 %v933, 1.442695
        %v1013 = vpow.pop %v1012
        %v1014 = vmul.f32 %v934, 1.442695
        %v1015 = vpow.pop %v1014
        %v1016 = vmul.f32 %v935, 1.442695
        %v1017 = vpow.pop %v1016
        %v1018 = vmul.f32 %v936, 1.442695
        %v1019 = vpow.pop %v1018
        %v1020 = vmul.f32 %v937, 1.442695
        %v1021 = vpow.pop %v1020
        %v1022 = vmul.f32 %v938, 1.442695
        %v1023 = vpow.pop %v1022
        %v1024 = vmul.f32 %v939, 1.442695
        %v1025 = vpow.pop %v1024
        %v1026 = vmul.f32 %v940, 1.442695
        %v1027 = vpow.pop %v1026
        %v1028 = vmul.f32 %v941, 1.442695
        %v1029 = vpow.pop %v1028
        %v1030 = vmul.f32 %v942, 1.442695
        %v1031 = vpow.pop %v1030
        %v1032 = vmul.f32 %v943, 1.442695
        %v1033 = vpow.pop %v1032
        %v1034 = vmul.f32 %v944, 1.442695
        %v1035 = vpow.pop %v1034
        %v1036 = vmul.f32 %v945, 1.442695
        %v1037 = vpow.pop %v1036
        %v1038 = vmul.f32 %v946, 1.442695
        %v1039 = vpow.pop %v1038
        %v1040 = vmul.f32 %v947, 1.442695
        %v1041 = vpow.pop %v1040
        %v1042 = vmul.f32 %v948, 1.442695
        %v1043 = vpow.pop %v1042
        %v1044 = vmul.f32 %v949, 1.442695
        %v1045 = vpow.pop %v1044
        %v1046 = vmul.f32 %v950, 1.442695
        %v1047 = vpow.pop %v1046
        %v1048 = vmul.f32 %v951, 1.442695
        %v1049 = vpow.pop %v1048
        %v1050 = vmul.f32 %v952, 1.442695
        %v1051 = vpow.pop %v1050
        %v1052 = vmul.f32 %v953, 1.442695
        %v1053 = vpow.pop %v1052
        %v1054 = vmul.f32 %v954, 1.442695
        %v1055 = vpow.pop %v1054
        %v1056 = vmul.f32 %v955, 1.442695
        %v1057 = vpow.pop %v1056
        %v1058 = vmul.f32 %v956, 1.442695
        %v1059 = vpow.pop %v1058
        %v1060 = vmul.f32 %v957, 1.442695
        %v1061 = vpow.pop %v1060
        %v1062 = vmul.f32 %v958, 1.442695
        %v1063 = vpow.pop %v1062
        %v1064 = vmul.f32 %v959, 1.442695
        %v1065 = vpow.pop %v1064
        %v1066 = vmul.f32 %v960, 1.442695
        %v1067 = vpow.pop %v1066
        %v1068 = vmul.f32 %v961, 1.442695
        %v1069 = vpow.pop %v1068
        %v1070 = vmul.f32 %v962, 1.442695
        %v1071 = vpow.pop %v1070
        %v1072 = vmul.f32 %v963, 1.442695
        %v1073 = vpow.pop %v1072
        %v1074 = vmul.f32 %v964, 1.442695
        %v1075 = vpow.pop %v1074
        %v1076 = vmul.f32 %v965, 1.442695
        %v1077 = vpow.pop %v1076
        %v1078 = vmul.f32 %v966, 1.442695
        %v1079 = vpow.pop %v1078
        %v1080 = vmul.f32 %v967, 1.442695
        %v1081 = vpow.pop %v1080
        %v1082 = vmul.f32 %v968, 1.442695
        %v1083 = vpow.pop %v1082
        %v1084 = vmul.f32 %v969, 1.442695
        %v1085 = vpow.pop %v1084
        %v1086 = vmul.f32 %v970, 1.442695
        %v1087 = vpow.pop %v1086
        %v1088 = vmul.f32 %v971, 1.442695
        %v1089 = vpow.pop %v1088
        %v1090 = vmul.f32 %v972, 1.442695
        %v1091 = vpow.pop %v1090
        %v1092 = vmul.f32 %v973, 1.442695
        %v1093 = vpow.pop %v1092
        %v1094 = vmul.f32 %v974, 1.442695
        %v1095 = vpow.pop %v1094
        %v1096 = vmul.f32 %v975, 1.442695
        %v1097 = vpow.pop %v1096
        %v1098 = vmul.f32 %v976, 1.442695
        %v1099 = vpow.pop %v1098
        %v1100 = vmul.f32 %v977, 1.442695
        %v1101 = vpow.pop %v1100
        %v1102 = vmul.f32 %v978, 1.442695
        %v1103 = vpow.pop %v1102
        %v1104 = vmul.f32 %v979, 1.442695
        %v1105 = vpow.pop %v1104
        %v1106 = vmul.f32 %v980, 1.442695
        %v1107 = vpow.pop %v1106
        %v1108 = vmul.f32 %v981, 1.442695
        %v1109 = vpow.pop %v1108
        %v1110 = vpack.c.bf16 %v987, %v983
        %v1111 = vpack.c.bf16 %v989, %v985
        %v1112 = vpack.c.bf16 %v995, %v991
        %v1113 = vpack.c.bf16 %v997, %v993
        %v1114 = vpack.c.bf16 %v1003, %v999
        %v1115 = vpack.c.bf16 %v1005, %v1001
        %v1116 = vpack.c.bf16 %v1011, %v1007
        %v1117 = vpack.c.bf16 %v1013, %v1009
        %v1118 = vpack.c.bf16 %v1019, %v1015
        %v1119 = vpack.c.bf16 %v1021, %v1017
        %v1120 = vpack.c.bf16 %v1027, %v1023
        %v1121 = vpack.c.bf16 %v1029, %v1025
        %v1122 = vpack.c.bf16 %v1035, %v1031
        %v1123 = vpack.c.bf16 %v1037, %v1033
        %v1124 = vpack.c.bf16 %v1043, %v1039
        %v1125 = vpack.c.bf16 %v1045, %v1041
        %v1126 = vpack.c.bf16 %v1051, %v1047
        %v1127 = vpack.c.bf16 %v1053, %v1049
        %v1128 = vpack.c.bf16 %v1059, %v1055
        %v1129 = vpack.c.bf16 %v1061, %v1057
        %v1130 = vpack.c.bf16 %v1067, %v1063
        %v1131 = vpack.c.bf16 %v1069, %v1065
        %v1132 = vpack.c.bf16 %v1075, %v1071
        %v1133 = vpack.c.bf16 %v1077, %v1073
        %v1134 = vpack.c.bf16 %v1083, %v1079
        %v1135 = vpack.c.bf16 %v1085, %v1081
        %v1136 = vpack.c.bf16 %v1091, %v1087
        %v1137 = vpack.c.bf16 %v1093, %v1089
        %v1138 = vpack.c.bf16 %v1099, %v1095
        %v1139 = vpack.c.bf16 %v1101, %v1097
        %v1140 = vpack.c.bf16 %v1107, %v1103
        %v1141 = vpack.c.bf16 %v1109, %v1105
        %v1142 = vld [vmem:[#allocation3] sm:$0xff]
        %v1143 = vld [vmem:[#allocation3 + $0x8] sm:$0xff]
        %v1144 = vld [vmem:[#allocation3 + $0x10] sm:$0xff]
        %v1145 = vld [vmem:[#allocation3 + $0x18] sm:$0xff]
        %v1146 = vld [vmem:[#allocation3 + $0x20] sm:$0xff]
        %v1147 = vld [vmem:[#allocation3 + $0x28] sm:$0xff]
        %v1148 = vld [vmem:[#allocation3 + $0x30] sm:$0xff]
        %v1149 = vld [vmem:[#allocation3 + $0x38] sm:$0xff]
        %v1150 = vld [vmem:[#allocation3 + $0x40] sm:$0xff]
        %v1151 = vld [vmem:[#allocation3 + $0x48] sm:$0xff]
        %v1152 = vld [vmem:[#allocation3 + $0x50] sm:$0xff]
        %v1153 = vld [vmem:[#allocation3 + $0x58] sm:$0xff]
        %v1154 = vld [vmem:[#allocation3 + $0x60] sm:$0xff]
        %v1155 = vld [vmem:[#allocation3 + $0x68] sm:$0xff]
        %v1156 = vld [vmem:[#allocation3 + $0x70] sm:$0xff]
        %v1157 = vld [vmem:[#allocation3 + $0x78] sm:$0xff]
        %v1158 = vld [vmem:[#allocation3 + $0x80] sm:$0xff]
        %v1159 = vld [vmem:[#allocation3 + $0x88] sm:$0xff]
        %v1160 = vld [vmem:[#allocation3 + $0x90] sm:$0xff]
        %v1161 = vld [vmem:[#allocation3 + $0x98] sm:$0xff]
        %v1162 = vld [vmem:[#allocation3 + $0xa0] sm:$0xff]
        %v1163 = vld [vmem:[#allocation3 + $0xa8] sm:$0xff]
        %v1164 = vld [vmem:[#allocation3 + $0xb0] sm:$0xff]
        %v1165 = vld [vmem:[#allocation3 + $0xb8] sm:$0xff]
        %v1166 = vld [vmem:[#allocation3 + $0xc0] sm:$0xff]
        %v1167 = vld [vmem:[#allocation3 + $0xc8] sm:$0xff]
        %v1168 = vld [vmem:[#allocation3 + $0xd0] sm:$0xff]
        %v1169 = vld [vmem:[#allocation3 + $0xd8] sm:$0xff]
        %v1170 = vld [vmem:[#allocation3 + $0xe0] sm:$0xff]
        %v1171 = vld [vmem:[#allocation3 + $0xe8] sm:$0xff]
        %v1172 = vld [vmem:[#allocation3 + $0xf0] sm:$0xff]
        %v1173 = vld [vmem:[#allocation3 + $0xf8] sm:$0xff]
        %v1174 = vunpack.c.l.bf16 %v822
        %v1175 = vunpack.c.h.bf16 %v822
        %v1176 = vunpack.c.l.bf16 %v824
        %v1177 = vunpack.c.h.bf16 %v824
        %v1178 = vunpack.c.l.bf16 %v826
        %v1179 = vunpack.c.h.bf16 %v826
        %v1180 = vunpack.c.l.bf16 %v828
        %v1181 = vunpack.c.h.bf16 %v828
        %v1182 = vunpack.c.l.bf16 %v830
        %v1183 = vunpack.c.h.bf16 %v830
        %v1184 = vunpack.c.l.bf16 %v832
        %v1185 = vunpack.c.h.bf16 %v832
        %v1186 = vunpack.c.l.bf16 %v834
        %v1187 = vunpack.c.h.bf16 %v834
        %v1188 = vunpack.c.l.bf16 %v836
        %v1189 = vunpack.c.h.bf16 %v836
        %v1190 = vunpack.c.l.bf16 %v838
        %v1191 = vunpack.c.h.bf16 %v838
        %v1192 = vunpack.c.l.bf16 %v840
        %v1193 = vunpack.c.h.bf16 %v840
        %v1194 = vunpack.c.l.bf16 %v842
        %v1195 = vunpack.c.h.bf16 %v842
        %v1196 = vunpack.c.l.bf16 %v844
        %v1197 = vunpack.c.h.bf16 %v844
        %v1198 = vunpack.c.l.bf16 %v846
        %v1199 = vunpack.c.h.bf16 %v846
        %v1200 = vunpack.c.l.bf16 %v848
        %v1201 = vunpack.c.h.bf16 %v848
        %v1202 = vunpack.c.l.bf16 %v850
        %v1203 = vunpack.c.h.bf16 %v850
        %v1204 = vunpack.c.l.bf16 %v852
        %v1205 = vunpack.c.h.bf16 %v852
        %v1206 = vunpack.c.l.bf16 %v823
        %v1207 = vunpack.c.h.bf16 %v823
        %v1208 = vunpack.c.l.bf16 %v825
        %v1209 = vunpack.c.h.bf16 %v825
        %v1210 = vunpack.c.l.bf16 %v827
        %v1211 = vunpack.c.h.bf16 %v827
        %v1212 = vunpack.c.l.bf16 %v829
        %v1213 = vunpack.c.h.bf16 %v829
        %v1214 = vunpack.c.l.bf16 %v831
        %v1215 = vunpack.c.h.bf16 %v831
        %v1216 = vunpack.c.l.bf16 %v833
        %v1217 = vunpack.c.h.bf16 %v833
        %v1218 = vunpack.c.l.bf16 %v835
        %v1219 = vunpack.c.h.bf16 %v835
        %v1220 = vunpack.c.l.bf16 %v837
        %v1221 = vunpack.c.h.bf16 %v837
        %v1222 = vunpack.c.l.bf16 %v839
        %v1223 = vunpack.c.h.bf16 %v839
        %v1224 = vunpack.c.l.bf16 %v841
        %v1225 = vunpack.c.h.bf16 %v841
        %v1226 = vunpack.c.l.bf16 %v843
        %v1227 = vunpack.c.h.bf16 %v843
        %v1228 = vunpack.c.l.bf16 %v845
        %v1229 = vunpack.c.h.bf16 %v845
        %v1230 = vunpack.c.l.bf16 %v847
        %v1231 = vunpack.c.h.bf16 %v847
        %v1232 = vunpack.c.l.bf16 %v849
        %v1233 = vunpack.c.h.bf16 %v849
        %v1234 = vunpack.c.l.bf16 %v851
        %v1235 = vunpack.c.h.bf16 %v851
        %v1236 = vunpack.c.l.bf16 %v853
        %v1237 = vunpack.c.h.bf16 %v853
        %v1238 = vadd.f32 %v1174, %v1206
        %v1239 = vadd.f32 %v1175, %v1207
        %v1240 = vadd.f32 %v1176, %v1208
        %v1241 = vadd.f32 %v1177, %v1209
        %v1242 = vadd.f32 %v1178, %v1210
        %v1243 = vadd.f32 %v1179, %v1211
        %v1244 = vadd.f32 %v1180, %v1212
        %v1245 = vadd.f32 %v1181, %v1213
        %v1246 = vadd.f32 %v1182, %v1214
        %v1247 = vadd.f32 %v1183, %v1215
        %v1248 = vadd.f32 %v1184, %v1216
        %v1249 = vadd.f32 %v1185, %v1217
        %v1250 = vadd.f32 %v1186, %v1218
        %v1251 = vadd.f32 %v1187, %v1219
        %v1252 = vadd.f32 %v1188, %v1220
        %v1253 = vadd.f32 %v1189, %v1221
        %v1254 = vadd.f32 %v1190, %v1222
        %v1255 = vadd.f32 %v1191, %v1223
        %v1256 = vadd.f32 %v1192, %v1224
        %v1257 = vadd.f32 %v1193, %v1225
        %v1258 = vadd.f32 %v1194, %v1226
        %v1259 = vadd.f32 %v1195, %v1227
        %v1260 = vadd.f32 %v1196, %v1228
        %v1261 = vadd.f32 %v1197, %v1229
        %v1262 = vadd.f32 %v1198, %v1230
        %v1263 = vadd.f32 %v1199, %v1231
        %v1264 = vadd.f32 %v1200, %v1232
        %v1265 = vadd.f32 %v1201, %v1233
        %v1266 = vadd.f32 %v1202, %v1234
        %v1267 = vadd.f32 %v1203, %v1235
        %v1268 = vadd.f32 %v1204, %v1236
        %v1269 = vadd.f32 %v1205, %v1237
        %v1270 = vadd.f32 %v1142, %v1238
        %v1271 = vadd.f32 %v1143, %v1239
        %v1272 = vadd.f32 %v1144, %v1240
        %v1273 = vadd.f32 %v1145, %v1241
        %v1274 = vadd.f32 %v1146, %v1242
        %v1275 = vadd.f32 %v1147, %v1243
        %v1276 = vadd.f32 %v1148, %v1244
        %v1277 = vadd.f32 %v1149, %v1245
        %v1278 = vadd.f32 %v1150, %v1246
        %v1279 = vadd.f32 %v1151, %v1247
        %v1280 = vadd.f32 %v1152, %v1248
        %v1281 = vadd.f32 %v1153, %v1249
        %v1282 = vadd.f32 %v1154, %v1250
        %v1283 = vadd.f32 %v1155, %v1251
        %v1284 = vadd.f32 %v1156, %v1252
        %v1285 = vadd.f32 %v1157, %v1253
        %v1286 = vadd.f32 %v1158, %v1254
        %v1287 = vadd.f32 %v1159, %v1255
        %v1288 = vadd.f32 %v1160, %v1256
        %v1289 = vadd.f32 %v1161, %v1257
        %v1290 = vadd.f32 %v1162, %v1258
        %v1291 = vadd.f32 %v1163, %v1259
        %v1292 = vadd.f32 %v1164, %v1260
        %v1293 = vadd.f32 %v1165, %v1261
        %v1294 = vadd.f32 %v1166, %v1262
        %v1295 = vadd.f32 %v1167, %v1263
        %v1296 = vadd.f32 %v1168, %v1264
        %v1297 = vadd.f32 %v1169, %v1265
        %v1298 = vadd.f32 %v1170, %v1266
        %v1299 = vadd.f32 %v1171, %v1267
        %v1300 = vadd.f32 %v1172, %v1268
        %v1301 = vadd.f32 %v1173, %v1269
        %1302 = vst [vmem:[#allocation3] sm:$0xff] %v1270
        %1303 = vst [vmem:[#allocation3 + $0x8] sm:$0xff] %v1271
        %1304 = vst [vmem:[#allocation3 + $0x10] sm:$0xff] %v1272
        %1305 = vst [vmem:[#allocation3 + $0x18] sm:$0xff] %v1273
        %1306 = vst [vmem:[#allocation3 + $0x20] sm:$0xff] %v1274
        %1307 = vst [vmem:[#allocation3 + $0x28] sm:$0xff] %v1275
        %1308 = vst [vmem:[#allocation3 + $0x30] sm:$0xff] %v1276
        %1309 = vst [vmem:[#allocation3 + $0x38] sm:$0xff] %v1277
        %1310 = vst [vmem:[#allocation3 + $0x40] sm:$0xff] %v1278
        %1311 = vst [vmem:[#allocation3 + $0x48] sm:$0xff] %v1279
        %1312 = vst [vmem:[#allocation3 + $0x50] sm:$0xff] %v1280
        %1313 = vst [vmem:[#allocation3 + $0x58] sm:$0xff] %v1281
        %1314 = vst [vmem:[#allocation3 + $0x60] sm:$0xff] %v1282
        %1315 = vst [vmem:[#allocation3 + $0x68] sm:$0xff] %v1283
        %1316 = vst [vmem:[#allocation3 + $0x70] sm:$0xff] %v1284
        %1317 = vst [vmem:[#allocation3 + $0x78] sm:$0xff] %v1285
        %1318 = vst [vmem:[#allocation3 + $0x80] sm:$0xff] %v1286
        %1319 = vst [vmem:[#allocation3 + $0x88] sm:$0xff] %v1287
        %1320 = vst [vmem:[#allocation3 + $0x90] sm:$0xff] %v1288
        %1321 = vst [vmem:[#allocation3 + $0x98] sm:$0xff] %v1289
        %1322 = vst [vmem:[#allocation3 + $0xa0] sm:$0xff] %v1290
        %1323 = vst [vmem:[#allocation3 + $0xa8] sm:$0xff] %v1291
        %1324 = vst [vmem:[#allocation3 + $0xb0] sm:$0xff] %v1292
        %1325 = vst [vmem:[#allocation3 + $0xb8] sm:$0xff] %v1293
        %1326 = vst [vmem:[#allocation3 + $0xc0] sm:$0xff] %v1294
        %1327 = vst [vmem:[#allocation3 + $0xc8] sm:$0xff] %v1295
        %1328 = vst [vmem:[#allocation3 + $0xd0] sm:$0xff] %v1296
        %1329 = vst [vmem:[#allocation3 + $0xd8] sm:$0xff] %v1297
        %1330 = vst [vmem:[#allocation3 + $0xe0] sm:$0xff] %v1298
        %1331 = vst [vmem:[#allocation3 + $0xe8] sm:$0xff] %v1299
        %1332 = vst [vmem:[#allocation3 + $0xf0] sm:$0xff] %v1300
        %1333 = vst [vmem:[#allocation3 + $0xf8] sm:$0xff] %v1301
        %v1334 = vld [vmem:[#allocation4] sm:$0xff]
        %v1335 = vld [vmem:[#allocation4 + $0x8] sm:$0xff]
        %v1336 = vld [vmem:[#allocation4 + $0x10] sm:$0xff]
        %v1337 = vld [vmem:[#allocation4 + $0x18] sm:$0xff]
        %v1338 = vld [vmem:[#allocation4 + $0x20] sm:$0xff]
        %v1339 = vld [vmem:[#allocation4 + $0x28] sm:$0xff]
        %v1340 = vld [vmem:[#allocation4 + $0x30] sm:$0xff]
        %v1341 = vld [vmem:[#allocation4 + $0x38] sm:$0xff]
        %v1342 = vld [vmem:[#allocation4 + $0x40] sm:$0xff]
        %v1343 = vld [vmem:[#allocation4 + $0x48] sm:$0xff]
        %v1344 = vld [vmem:[#allocation4 + $0x50] sm:$0xff]
        %v1345 = vld [vmem:[#allocation4 + $0x58] sm:$0xff]
        %v1346 = vld [vmem:[#allocation4 + $0x60] sm:$0xff]
        %v1347 = vld [vmem:[#allocation4 + $0x68] sm:$0xff]
        %v1348 = vld [vmem:[#allocation4 + $0x70] sm:$0xff]
        %v1349 = vld [vmem:[#allocation4 + $0x78] sm:$0xff]
        %v1350 = vld [vmem:[#allocation4 + $0x80] sm:$0xff]
        %v1351 = vld [vmem:[#allocation4 + $0x88] sm:$0xff]
        %v1352 = vld [vmem:[#allocation4 + $0x90] sm:$0xff]
        %v1353 = vld [vmem:[#allocation4 + $0x98] sm:$0xff]
        %v1354 = vld [vmem:[#allocation4 + $0xa0] sm:$0xff]
        %v1355 = vld [vmem:[#allocation4 + $0xa8] sm:$0xff]
        %v1356 = vld [vmem:[#allocation4 + $0xb0] sm:$0xff]
        %v1357 = vld [vmem:[#allocation4 + $0xb8] sm:$0xff]
        %v1358 = vld [vmem:[#allocation4 + $0xc0] sm:$0xff]
        %v1359 = vld [vmem:[#allocation4 + $0xc8] sm:$0xff]
        %v1360 = vld [vmem:[#allocation4 + $0xd0] sm:$0xff]
        %v1361 = vld [vmem:[#allocation4 + $0xd8] sm:$0xff]
        %v1362 = vld [vmem:[#allocation4 + $0xe0] sm:$0xff]
        %v1363 = vld [vmem:[#allocation4 + $0xe8] sm:$0xff]
        %v1364 = vld [vmem:[#allocation4 + $0xf0] sm:$0xff]
        %v1365 = vld [vmem:[#allocation4 + $0xf8] sm:$0xff]
        %v1366 = vunpack.c.l.bf16 %v1110
        %v1367 = vunpack.c.h.bf16 %v1110
        %v1368 = vunpack.c.l.bf16 %v1112
        %v1369 = vunpack.c.h.bf16 %v1112
        %v1370 = vunpack.c.l.bf16 %v1114
        %v1371 = vunpack.c.h.bf16 %v1114
        %v1372 = vunpack.c.l.bf16 %v1116
        %v1373 = vunpack.c.h.bf16 %v1116
        %v1374 = vunpack.c.l.bf16 %v1118
        %v1375 = vunpack.c.h.bf16 %v1118
        %v1376 = vunpack.c.l.bf16 %v1120
        %v1377 = vunpack.c.h.bf16 %v1120
        %v1378 = vunpack.c.l.bf16 %v1122
        %v1379 = vunpack.c.h.bf16 %v1122
        %v1380 = vunpack.c.l.bf16 %v1124
        %v1381 = vunpack.c.h.bf16 %v1124
        %v1382 = vunpack.c.l.bf16 %v1126
        %v1383 = vunpack.c.h.bf16 %v1126
        %v1384 = vunpack.c.l.bf16 %v1128
        %v1385 = vunpack.c.h.bf16 %v1128
        %v1386 = vunpack.c.l.bf16 %v1130
        %v1387 = vunpack.c.h.bf16 %v1130
        %v1388 = vunpack.c.l.bf16 %v1132
        %v1389 = vunpack.c.h.bf16 %v1132
        %v1390 = vunpack.c.l.bf16 %v1134
        %v1391 = vunpack.c.h.bf16 %v1134
        %v1392 = vunpack.c.l.bf16 %v1136
        %v1393 = vunpack.c.h.bf16 %v1136
        %v1394 = vunpack.c.l.bf16 %v1138
        %v1395 = vunpack.c.h.bf16 %v1138
        %v1396 = vunpack.c.l.bf16 %v1140
        %v1397 = vunpack.c.h.bf16 %v1140
        %v1398 = vunpack.c.l.bf16 %v1111
        %v1399 = vunpack.c.h.bf16 %v1111
        %v1400 = vunpack.c.l.bf16 %v1113
        %v1401 = vunpack.c.h.bf16 %v1113
        %v1402 = vunpack.c.l.bf16 %v1115
        %v1403 = vunpack.c.h.bf16 %v1115
        %v1404 = vunpack.c.l.bf16 %v1117
        %v1405 = vunpack.c.h.bf16 %v1117
        %v1406 = vunpack.c.l.bf16 %v1119
        %v1407 = vunpack.c.h.bf16 %v1119
        %v1408 = vunpack.c.l.bf16 %v1121
        %v1409 = vunpack.c.h.bf16 %v1121
        %v1410 = vunpack.c.l.bf16 %v1123
        %v1411 = vunpack.c.h.bf16 %v1123
        %v1412 = vunpack.c.l.bf16 %v1125
        %v1413 = vunpack.c.h.bf16 %v1125
        %v1414 = vunpack.c.l.bf16 %v1127
        %v1415 = vunpack.c.h.bf16 %v1127
        %v1416 = vunpack.c.l.bf16 %v1129
        %v1417 = vunpack.c.h.bf16 %v1129
        %v1418 = vunpack.c.l.bf16 %v1131
        %v1419 = vunpack.c.h.bf16 %v1131
        %v1420 = vunpack.c.l.bf16 %v1133
        %v1421 = vunpack.c.h.bf16 %v1133
        %v1422 = vunpack.c.l.bf16 %v1135
        %v1423 = vunpack.c.h.bf16 %v1135
        %v1424 = vunpack.c.l.bf16 %v1137
        %v1425 = vunpack.c.h.bf16 %v1137
        %v1426 = vunpack.c.l.bf16 %v1139
        %v1427 = vunpack.c.h.bf16 %v1139
        %v1428 = vunpack.c.l.bf16 %v1141
        %v1429 = vunpack.c.h.bf16 %v1141
        %v1430 = vadd.f32 %v1366, %v1398
        %v1431 = vadd.f32 %v1367, %v1399
        %v1432 = vadd.f32 %v1368, %v1400
        %v1433 = vadd.f32 %v1369, %v1401
        %v1434 = vadd.f32 %v1370, %v1402
        %v1435 = vadd.f32 %v1371, %v1403
        %v1436 = vadd.f32 %v1372, %v1404
        %v1437 = vadd.f32 %v1373, %v1405
        %v1438 = vadd.f32 %v1374, %v1406
        %v1439 = vadd.f32 %v1375, %v1407
        %v1440 = vadd.f32 %v1376, %v1408
        %v1441 = vadd.f32 %v1377, %v1409
        %v1442 = vadd.f32 %v1378, %v1410
        %v1443 = vadd.f32 %v1379, %v1411
        %v1444 = vadd.f32 %v1380, %v1412
        %v1445 = vadd.f32 %v1381, %v1413
        %v1446 = vadd.f32 %v1382, %v1414
        %v1447 = vadd.f32 %v1383, %v1415
        %v1448 = vadd.f32 %v1384, %v1416
        %v1449 = vadd.f32 %v1385, %v1417
        %v1450 = vadd.f32 %v1386, %v1418
        %v1451 = vadd.f32 %v1387, %v1419
        %v1452 = vadd.f32 %v1388, %v1420
        %v1453 = vadd.f32 %v1389, %v1421
        %v1454 = vadd.f32 %v1390, %v1422
        %v1455 = vadd.f32 %v1391, %v1423
        %v1456 = vadd.f32 %v1392, %v1424
        %v1457 = vadd.f32 %v1393, %v1425
        %v1458 = vadd.f32 %v1394, %v1426
        %v1459 = vadd.f32 %v1395, %v1427
        %v1460 = vadd.f32 %v1396, %v1428
        %v1461 = vadd.f32 %v1397, %v1429
        %v1462 = vadd.f32 %v1334, %v1430
        %v1463 = vadd.f32 %v1335, %v1431
        %v1464 = vadd.f32 %v1336, %v1432
        %v1465 = vadd.f32 %v1337, %v1433
        %v1466 = vadd.f32 %v1338, %v1434
        %v1467 = vadd.f32 %v1339, %v1435
        %v1468 = vadd.f32 %v1340, %v1436
        %v1469 = vadd.f32 %v1341, %v1437
        %v1470 = vadd.f32 %v1342, %v1438
        %v1471 = vadd.f32 %v1343, %v1439
        %v1472 = vadd.f32 %v1344, %v1440
        %v1473 = vadd.f32 %v1345, %v1441
        %v1474 = vadd.f32 %v1346, %v1442
        %v1475 = vadd.f32 %v1347, %v1443
        %v1476 = vadd.f32 %v1348, %v1444
        %v1477 = vadd.f32 %v1349, %v1445
        %v1478 = vadd.f32 %v1350, %v1446
        %v1479 = vadd.f32 %v1351, %v1447
        %v1480 = vadd.f32 %v1352, %v1448
        %v1481 = vadd.f32 %v1353, %v1449
        %v1482 = vadd.f32 %v1354, %v1450
        %v1483 = vadd.f32 %v1355, %v1451
        %v1484 = vadd.f32 %v1356, %v1452
        %v1485 = vadd.f32 %v1357, %v1453
        %v1486 = vadd.f32 %v1358, %v1454
        %v1487 = vadd.f32 %v1359, %v1455
        %v1488 = vadd.f32 %v1360, %v1456
        %v1489 = vadd.f32 %v1361, %v1457
        %v1490 = vadd.f32 %v1362, %v1458
        %v1491 = vadd.f32 %v1363, %v1459
        %v1492 = vadd.f32 %v1364, %v1460
        %v1493 = vadd.f32 %v1365, %v1461
        %1494 = vst [vmem:[#allocation4] sm:$0xff] %v1462
        %1495 = vst [vmem:[#allocation4 + $0x8] sm:$0xff] %v1463
        %1496 = vst [vmem:[#allocation4 + $0x10] sm:$0xff] %v1464
        %1497 = vst [vmem:[#allocation4 + $0x18] sm:$0xff] %v1465
        %1498 = vst [vmem:[#allocation4 + $0x20] sm:$0xff] %v1466
        %1499 = vst [vmem:[#allocation4 + $0x28] sm:$0xff] %v1467
        %1500 = vst [vmem:[#allocation4 + $0x30] sm:$0xff] %v1468
        %1501 = vst [vmem:[#allocation4 + $0x38] sm:$0xff] %v1469
        %1502 = vst [vmem:[#allocation4 + $0x40] sm:$0xff] %v1470
        %1503 = vst [vmem:[#allocation4 + $0x48] sm:$0xff] %v1471
        %1504 = vst [vmem:[#allocation4 + $0x50] sm:$0xff] %v1472
        %1505 = vst [vmem:[#allocation4 + $0x58] sm:$0xff] %v1473
        %1506 = vst [vmem:[#allocation4 + $0x60] sm:$0xff] %v1474
        %1507 = vst [vmem:[#allocation4 + $0x68] sm:$0xff] %v1475
        %1508 = vst [vmem:[#allocation4 + $0x70] sm:$0xff] %v1476
        %1509 = vst [vmem:[#allocation4 + $0x78] sm:$0xff] %v1477
        %1510 = vst [vmem:[#allocation4 + $0x80] sm:$0xff] %v1478
        %1511 = vst [vmem:[#allocation4 + $0x88] sm:$0xff] %v1479
        %1512 = vst [vmem:[#allocation4 + $0x90] sm:$0xff] %v1480
        %1513 = vst [vmem:[#allocation4 + $0x98] sm:$0xff] %v1481
        %1514 = vst [vmem:[#allocation4 + $0xa0] sm:$0xff] %v1482
        %1515 = vst [vmem:[#allocation4 + $0xa8] sm:$0xff] %v1483
        %1516 = vst [vmem:[#allocation4 + $0xb0] sm:$0xff] %v1484
        %1517 = vst [vmem:[#allocation4 + $0xb8] sm:$0xff] %v1485
        %1518 = vst [vmem:[#allocation4 + $0xc0] sm:$0xff] %v1486
        %1519 = vst [vmem:[#allocation4 + $0xc8] sm:$0xff] %v1487
        %1520 = vst [vmem:[#allocation4 + $0xd0] sm:$0xff] %v1488
        %1521 = vst [vmem:[#allocation4 + $0xd8] sm:$0xff] %v1489
        %1522 = vst [vmem:[#allocation4 + $0xe0] sm:$0xff] %v1490
        %1523 = vst [vmem:[#allocation4 + $0xe8] sm:$0xff] %v1491
        %1524 = vst [vmem:[#allocation4 + $0xf0] sm:$0xff] %v1492
        %1525 = vst [vmem:[#allocation4 + $0xf8] sm:$0xff] %v1493
        %v1526 = vld [vmem:[#allocation2] sm:$0xff]
        %v1527 = vld [vmem:[#allocation2 + $0x8] sm:$0xff]
        %v1528 = vld [vmem:[#allocation2 + $0x10] sm:$0xff]
        %v1529 = vld [vmem:[#allocation2 + $0x18] sm:$0xff]
        %v1530 = vld [vmem:[#allocation2 + $0x20] sm:$0xff]
        %v1531 = vld [vmem:[#allocation2 + $0x28] sm:$0xff]
        %v1532 = vld [vmem:[#allocation2 + $0x30] sm:$0xff]
        %v1533 = vld [vmem:[#allocation2 + $0x38] sm:$0xff]
        %v1534 = vld [vmem:[#allocation2 + $0x40] sm:$0xff]
        %v1535 = vld [vmem:[#allocation2 + $0x48] sm:$0xff]
        %v1536 = vld [vmem:[#allocation2 + $0x50] sm:$0xff]
        %v1537 = vld [vmem:[#allocation2 + $0x58] sm:$0xff]
        %v1538 = vld [vmem:[#allocation2 + $0x60] sm:$0xff]
        %v1539 = vld [vmem:[#allocation2 + $0x68] sm:$0xff]
        %v1540 = vld [vmem:[#allocation2 + $0x70] sm:$0xff]
        %v1541 = vld [vmem:[#allocation2 + $0x78] sm:$0xff]
        %v1542 = vld [vmem:[#allocation2 + $0x80] sm:$0xff]
        %v1543 = vld [vmem:[#allocation2 + $0x88] sm:$0xff]
        %v1544 = vld [vmem:[#allocation2 + $0x90] sm:$0xff]
        %v1545 = vld [vmem:[#allocation2 + $0x98] sm:$0xff]
        %v1546 = vld [vmem:[#allocation2 + $0xa0] sm:$0xff]
        %v1547 = vld [vmem:[#allocation2 + $0xa8] sm:$0xff]
        %v1548 = vld [vmem:[#allocation2 + $0xb0] sm:$0xff]
        %v1549 = vld [vmem:[#allocation2 + $0xb8] sm:$0xff]
        %v1550 = vld [vmem:[#allocation2 + $0xc0] sm:$0xff]
        %v1551 = vld [vmem:[#allocation2 + $0xc8] sm:$0xff]
        %v1552 = vld [vmem:[#allocation2 + $0xd0] sm:$0xff]
        %v1553 = vld [vmem:[#allocation2 + $0xd8] sm:$0xff]
        %v1554 = vld [vmem:[#allocation2 + $0xe0] sm:$0xff]
        %v1555 = vld [vmem:[#allocation2 + $0xe8] sm:$0xff]
        %v1556 = vld [vmem:[#allocation2 + $0xf0] sm:$0xff]
        %v1557 = vld [vmem:[#allocation2 + $0xf8] sm:$0xff]
        %v1558 = vld [vmem:[#allocation2 + $0x100] sm:$0xff]
        %v1559 = vld [vmem:[#allocation2 + $0x108] sm:$0xff]
        %v1560 = vld [vmem:[#allocation2 + $0x110] sm:$0xff]
        %v1561 = vld [vmem:[#allocation2 + $0x118] sm:$0xff]
        %v1562 = vld [vmem:[#allocation2 + $0x120] sm:$0xff]
        %v1563 = vld [vmem:[#allocation2 + $0x128] sm:$0xff]
        %v1564 = vld [vmem:[#allocation2 + $0x130] sm:$0xff]
        %v1565 = vld [vmem:[#allocation2 + $0x138] sm:$0xff]
        %v1566 = vld [vmem:[#allocation2 + $0x140] sm:$0xff]
        %v1567 = vld [vmem:[#allocation2 + $0x148] sm:$0xff]
        %v1568 = vld [vmem:[#allocation2 + $0x150] sm:$0xff]
        %v1569 = vld [vmem:[#allocation2 + $0x158] sm:$0xff]
        %v1570 = vld [vmem:[#allocation2 + $0x160] sm:$0xff]
        %v1571 = vld [vmem:[#allocation2 + $0x168] sm:$0xff]
        %v1572 = vld [vmem:[#allocation2 + $0x170] sm:$0xff]
        %v1573 = vld [vmem:[#allocation2 + $0x178] sm:$0xff]
        %v1574 = vld [vmem:[#allocation2 + $0x180] sm:$0xff]
        %v1575 = vld [vmem:[#allocation2 + $0x188] sm:$0xff]
        %v1576 = vld [vmem:[#allocation2 + $0x190] sm:$0xff]
        %v1577 = vld [vmem:[#allocation2 + $0x198] sm:$0xff]
        %v1578 = vld [vmem:[#allocation2 + $0x1a0] sm:$0xff]
        %v1579 = vld [vmem:[#allocation2 + $0x1a8] sm:$0xff]
        %v1580 = vld [vmem:[#allocation2 + $0x1b0] sm:$0xff]
        %v1581 = vld [vmem:[#allocation2 + $0x1b8] sm:$0xff]
        %v1582 = vld [vmem:[#allocation2 + $0x1c0] sm:$0xff]
        %v1583 = vld [vmem:[#allocation2 + $0x1c8] sm:$0xff]
        %v1584 = vld [vmem:[#allocation2 + $0x1d0] sm:$0xff]
        %v1585 = vld [vmem:[#allocation2 + $0x1d8] sm:$0xff]
        %v1586 = vld [vmem:[#allocation2 + $0x1e0] sm:$0xff]
        %v1587 = vld [vmem:[#allocation2 + $0x1e8] sm:$0xff]
        %v1588 = vld [vmem:[#allocation2 + $0x1f0] sm:$0xff]
        %v1589 = vld [vmem:[#allocation2 + $0x1f8] sm:$0xff]
        %1590 = vmatprep.subr.bf16.mxu0 %v1111
        %1591 = vmatpush1.bf16.xpose.msra.mxu0 %v1110
        %1592 = vmatprep.subr.bf16.mxu0 %v1113
        %1593 = vmatpush1.bf16.xpose.msra.mxu0 %v1112
        %1594 = vmatprep.subr.bf16.mxu0 %v1115
        %1595 = vmatpush1.bf16.xpose.msra.mxu0 %v1114
        %1596 = vmatprep.subr.bf16.mxu0 %v1117
        %1597 = vmatpush1.bf16.xpose.msra.mxu0 %v1116
        %1598 = vmatprep.subr.bf16.mxu0 %v1119
        %1599 = vmatpush1.bf16.xpose.msra.mxu0 %v1118
        %1600 = vmatprep.subr.bf16.mxu0 %v1121
        %1601 = vmatpush1.bf16.xpose.msra.mxu0 %v1120
        %1602 = vmatprep.subr.bf16.mxu0 %v1123
        %1603 = vmatpush1.bf16.xpose.msra.mxu0 %v1122
        %1604 = vmatprep.subr.bf16.mxu0 %v1125
        %1605 = vmatpush1.bf16.xpose.msra.mxu0 %v1124
        %1606 = vmatprep.subr.bf16.mxu0 %v1127
        %1607 = vmatpush1.bf16.xpose.msra.mxu0 %v1126
        %1608 = vmatprep.subr.bf16.mxu0 %v1129
        %1609 = vmatpush1.bf16.xpose.msra.mxu0 %v1128
        %1610 = vmatprep.subr.bf16.mxu0 %v1131
        %1611 = vmatpush1.bf16.xpose.msra.mxu0 %v1130
        %1612 = vmatprep.subr.bf16.mxu0 %v1133
        %1613 = vmatpush1.bf16.xpose.msra.mxu0 %v1132
        %1614 = vmatprep.subr.bf16.mxu0 %v1135
        %1615 = vmatpush1.bf16.xpose.msra.mxu0 %v1134
        %1616 = vmatprep.subr.bf16.mxu0 %v1137
        %1617 = vmatpush1.bf16.xpose.msra.mxu0 %v1136
        %1618 = vmatprep.subr.bf16.mxu0 %v1139
        %1619 = vmatpush1.bf16.xpose.msra.mxu0 %v1138
        %1620 = vmatprep.subr.bf16.mxu0 %v1141
        %1621 = vmatpush1.bf16.xpose.msra.mxu0 %v1140
        %1622 = vmatprep.mubr.bf16.mxu0 %v823
        %1623 = vmatmul.mubr.bf16.gmra.mrb[0].mxu0 %v822
        %v1624 = vpop.f32.mrb[0].mxu0
        %v1625 = vadd.f32 0.0, %v1624
        %v1626 = vpop.f32.mrb[0].mxu0
        %v1627 = vadd.f32 0.0, %v1626
        %v1628 = vpop.f32.mrb[0].mxu0
        %v1629 = vadd.f32 0.0, %v1628
        %v1630 = vpop.f32.mrb[0].mxu0
        %v1631 = vadd.f32 0.0, %v1630
        %1632 = vmatprep.mubr.bf16.mxu0 %v825
        %1633 = vmatmul.mubr.bf16.gmra.mrb[0].mxu0 %v824
        %v1634 = vpop.f32.mrb[0].mxu0
        %v1635 = vadd.f32 0.0, %v1634
        %v1636 = vpop.f32.mrb[0].mxu0
        %v1637 = vadd.f32 0.0, %v1636
        %v1638 = vpop.f32.mrb[0].mxu0
        %v1639 = vadd.f32 0.0, %v1638
        %v1640 = vpop.f32.mrb[0].mxu0
        %v1641 = vadd.f32 0.0, %v1640
        %1642 = vmatprep.mubr.bf16.mxu0 %v827
        %1643 = vmatmul.mubr.bf16.gmra.mrb[0].mxu0 %v826
        %v1644 = vpop.f32.mrb[0].mxu0
        %v1645 = vadd.f32 0.0, %v1644
        %v1646 = vpop.f32.mrb[0].mxu0
        %v1647 = vadd.f32 0.0, %v1646
        %v1648 = vpop.f32.mrb[0].mxu0
        %v1649 = vadd.f32 0.0, %v1648
        %v1650 = vpop.f32.mrb[0].mxu0
        %v1651 = vadd.f32 0.0, %v1650
        %1652 = vmatprep.mubr.bf16.mxu0 %v829
        %1653 = vmatmul.mubr.bf16.gmra.mrb[0].mxu0 %v828
        %v1654 = vpop.f32.mrb[0].mxu0
        %v1655 = vadd.f32 0.0, %v1654
        %v1656 = vpop.f32.mrb[0].mxu0
        %v1657 = vadd.f32 0.0, %v1656
        %v1658 = vpop.f32.mrb[0].mxu0
        %v1659 = vadd.f32 0.0, %v1658
        %v1660 = vpop.f32.mrb[0].mxu0
        %v1661 = vadd.f32 0.0, %v1660
        %1662 = vmatprep.mubr.bf16.mxu0 %v831
        %1663 = vmatmul.mubr.bf16.gmra.mrb[0].mxu0 %v830
        %v1664 = vpop.f32.mrb[0].mxu0
        %v1665 = vadd.f32 0.0, %v1664
        %v1666 = vpop.f32.mrb[0].mxu0
        %v1667 = vadd.f32 0.0, %v1666
        %v1668 = vpop.f32.mrb[0].mxu0
        %v1669 = vadd.f32 0.0, %v1668
        %v1670 = vpop.f32.mrb[0].mxu0
        %v1671 = vadd.f32 0.0, %v1670
        %1672 = vmatprep.mubr.bf16.mxu0 %v833
        %1673 = vmatmul.mubr.bf16.gmra.mrb[0].mxu0 %v832
        %v1674 = vpop.f32.mrb[0].mxu0
        %v1675 = vadd.f32 0.0, %v1674
        %v1676 = vpop.f32.mrb[0].mxu0
        %v1677 = vadd.f32 0.0, %v1676
        %v1678 = vpop.f32.mrb[0].mxu0
        %v1679 = vadd.f32 0.0, %v1678
        %v1680 = vpop.f32.mrb[0].mxu0
        %v1681 = vadd.f32 0.0, %v1680
        %1682 = vmatprep.mubr.bf16.mxu0 %v835
        %1683 = vmatmul.mubr.bf16.gmra.mrb[0].mxu0 %v834
        %v1684 = vpop.f32.mrb[0].mxu0
        %v1685 = vadd.f32 0.0, %v1684
        %v1686 = vpop.f32.mrb[0].mxu0
        %v1687 = vadd.f32 0.0, %v1686
        %v1688 = vpop.f32.mrb[0].mxu0
        %v1689 = vadd.f32 0.0, %v1688
        %v1690 = vpop.f32.mrb[0].mxu0
        %v1691 = vadd.f32 0.0, %v1690
        %1692 = vmatprep.mubr.bf16.mxu0 %v837
        %1693 = vmatmul.mubr.bf16.gmra.mrb[0].mxu0 %v836
        %v1694 = vpop.f32.mrb[0].mxu0
        %v1695 = vadd.f32 0.0, %v1694
        %v1696 = vpop.f32.mrb[0].mxu0
        %v1697 = vadd.f32 0.0, %v1696
        %v1698 = vpop.f32.mrb[0].mxu0
        %v1699 = vadd.f32 0.0, %v1698
        %v1700 = vpop.f32.mrb[0].mxu0
        %v1701 = vadd.f32 0.0, %v1700
        %1702 = vmatprep.mubr.bf16.mxu0 %v839
        %1703 = vmatmul.mubr.bf16.gmra.mrb[0].mxu0 %v838
        %v1704 = vpop.f32.mrb[0].mxu0
        %v1705 = vadd.f32 0.0, %v1704
        %v1706 = vpop.f32.mrb[0].mxu0
        %v1707 = vadd.f32 0.0, %v1706
        %v1708 = vpop.f32.mrb[0].mxu0
        %v1709 = vadd.f32 0.0, %v1708
        %v1710 = vpop.f32.mrb[0].mxu0
        %v1711 = vadd.f32 0.0, %v1710
        %1712 = vmatprep.mubr.bf16.mxu0 %v841
        %1713 = vmatmul.mubr.bf16.gmra.mrb[0].mxu0 %v840
        %v1714 = vpop.f32.mrb[0].mxu0
        %v1715 = vadd.f32 0.0, %v1714
        %v1716 = vpop.f32.mrb[0].mxu0
        %v1717 = vadd.f32 0.0, %v1716
        %v1718 = vpop.f32.mrb[0].mxu0
        %v1719 = vadd.f32 0.0, %v1718
        %v1720 = vpop.f32.mrb[0].mxu0
        %v1721 = vadd.f32 0.0, %v1720
        %1722 = vmatprep.mubr.bf16.mxu0 %v843
        %1723 = vmatmul.mubr.bf16.gmra.mrb[0].mxu0 %v842
        %v1724 = vpop.f32.mrb[0].mxu0
        %v1725 = vadd.f32 0.0, %v1724
        %v1726 = vpop.f32.mrb[0].mxu0
        %v1727 = vadd.f32 0.0, %v1726
        %v1728 = vpop.f32.mrb[0].mxu0
        %v1729 = vadd.f32 0.0, %v1728
        %v1730 = vpop.f32.mrb[0].mxu0
        %v1731 = vadd.f32 0.0, %v1730
        %1732 = vmatprep.mubr.bf16.mxu0 %v845
        %1733 = vmatmul.mubr.bf16.gmra.mrb[0].mxu0 %v844
        %v1734 = vpop.f32.mrb[0].mxu0
        %v1735 = vadd.f32 0.0, %v1734
        %v1736 = vpop.f32.mrb[0].mxu0
        %v1737 = vadd.f32 0.0, %v1736
        %v1738 = vpop.f32.mrb[0].mxu0
        %v1739 = vadd.f32 0.0, %v1738
        %v1740 = vpop.f32.mrb[0].mxu0
        %v1741 = vadd.f32 0.0, %v1740
        %1742 = vmatprep.mubr.bf16.mxu0 %v847
        %1743 = vmatmul.mubr.bf16.gmra.mrb[0].mxu0 %v846
        %v1744 = vpop.f32.mrb[0].mxu0
        %v1745 = vadd.f32 0.0, %v1744
        %v1746 = vpop.f32.mrb[0].mxu0
        %v1747 = vadd.f32 0.0, %v1746
        %v1748 = vpop.f32.mrb[0].mxu0
        %v1749 = vadd.f32 0.0, %v1748
        %v1750 = vpop.f32.mrb[0].mxu0
        %v1751 = vadd.f32 0.0, %v1750
        %1752 = vmatprep.mubr.bf16.mxu0 %v849
        %1753 = vmatmul.mubr.bf16.gmra.mrb[0].mxu0 %v848
        %v1754 = vpop.f32.mrb[0].mxu0
        %v1755 = vadd.f32 0.0, %v1754
        %v1756 = vpop.f32.mrb[0].mxu0
        %v1757 = vadd.f32 0.0, %v1756
        %v1758 = vpop.f32.mrb[0].mxu0
        %v1759 = vadd.f32 0.0, %v1758
        %v1760 = vpop.f32.mrb[0].mxu0
        %v1761 = vadd.f32 0.0, %v1760
        %1762 = vmatprep.mubr.bf16.mxu0 %v851
        %1763 = vmatmul.mubr.bf16.gmra.mrb[0].mxu0 %v850
        %v1764 = vpop.f32.mrb[0].mxu0
        %v1765 = vadd.f32 0.0, %v1764
        %v1766 = vpop.f32.mrb[0].mxu0
        %v1767 = vadd.f32 0.0, %v1766
        %v1768 = vpop.f32.mrb[0].mxu0
        %v1769 = vadd.f32 0.0, %v1768
        %v1770 = vpop.f32.mrb[0].mxu0
        %v1771 = vadd.f32 0.0, %v1770
        %1772 = vmatprep.mubr.bf16.mxu0 %v853
        %1773 = vmatmul.mubr.bf16.gmra.mrb[0].mxu0 %v852
        %v1774 = vpop.f32.mrb[0].mxu0
        %v1775 = vadd.f32 0.0, %v1774
        %v1776 = vpop.f32.mrb[0].mxu0
        %v1777 = vadd.f32 0.0, %v1776
        %v1778 = vpop.f32.mrb[0].mxu0
        %v1779 = vadd.f32 0.0, %v1778
        %v1780 = vpop.f32.mrb[0].mxu0
        %v1781 = vadd.f32 0.0, %v1780
        %1782 = vdwg.mxu0
        %v1783 = vadd.f32 %v1526, %v1625
        %v1784 = vadd.f32 %v1527, %v1627
        %v1785 = vadd.f32 %v1528, %v1629
        %v1786 = vadd.f32 %v1529, %v1631
        %v1787 = vadd.f32 %v1530, %v1635
        %v1788 = vadd.f32 %v1531, %v1637
        %v1789 = vadd.f32 %v1532, %v1639
        %v1790 = vadd.f32 %v1533, %v1641
        %v1791 = vadd.f32 %v1534, %v1645
        %v1792 = vadd.f32 %v1535, %v1647
        %v1793 = vadd.f32 %v1536, %v1649
        %v1794 = vadd.f32 %v1537, %v1651
        %v1795 = vadd.f32 %v1538, %v1655
        %v1796 = vadd.f32 %v1539, %v1657
        %v1797 = vadd.f32 %v1540, %v1659
        %v1798 = vadd.f32 %v1541, %v1661
        %v1799 = vadd.f32 %v1542, %v1665
        %v1800 = vadd.f32 %v1543, %v1667
        %v1801 = vadd.f32 %v1544, %v1669
        %v1802 = vadd.f32 %v1545, %v1671
        %v1803 = vadd.f32 %v1546, %v1675
        %v1804 = vadd.f32 %v1547, %v1677
        %v1805 = vadd.f32 %v1548, %v1679
        %v1806 = vadd.f32 %v1549, %v1681
        %v1807 = vadd.f32 %v1550, %v1685
        %v1808 = vadd.f32 %v1551, %v1687
        %v1809 = vadd.f32 %v1552, %v1689
        %v1810 = vadd.f32 %v1553, %v1691
        %v1811 = vadd.f32 %v1554, %v1695
        %v1812 = vadd.f32 %v1555, %v1697
        %v1813 = vadd.f32 %v1556, %v1699
        %v1814 = vadd.f32 %v1557, %v1701
        %v1815 = vadd.f32 %v1558, %v1705
        %v1816 = vadd.f32 %v1559, %v1707
        %v1817 = vadd.f32 %v1560, %v1709
        %v1818 = vadd.f32 %v1561, %v1711
        %v1819 = vadd.f32 %v1562, %v1715
        %v1820 = vadd.f32 %v1563, %v1717
        %v1821 = vadd.f32 %v1564, %v1719
        %v1822 = vadd.f32 %v1565, %v1721
        %v1823 = vadd.f32 %v1566, %v1725
        %v1824 = vadd.f32 %v1567, %v1727
        %v1825 = vadd.f32 %v1568, %v1729
        %v1826 = vadd.f32 %v1569, %v1731
        %v1827 = vadd.f32 %v1570, %v1735
        %v1828 = vadd.f32 %v1571, %v1737
        %v1829 = vadd.f32 %v1572, %v1739
        %v1830 = vadd.f32 %v1573, %v1741
        %v1831 = vadd.f32 %v1574, %v1745
        %v1832 = vadd.f32 %v1575, %v1747
        %v1833 = vadd.f32 %v1576, %v1749
        %v1834 = vadd.f32 %v1577, %v1751
        %v1835 = vadd.f32 %v1578, %v1755
        %v1836 = vadd.f32 %v1579, %v1757
        %v1837 = vadd.f32 %v1580, %v1759
        %v1838 = vadd.f32 %v1581, %v1761
        %v1839 = vadd.f32 %v1582, %v1765
        %v1840 = vadd.f32 %v1583, %v1767
        %v1841 = vadd.f32 %v1584, %v1769
        %v1842 = vadd.f32 %v1585, %v1771
        %v1843 = vadd.f32 %v1586, %v1775
        %v1844 = vadd.f32 %v1587, %v1777
        %v1845 = vadd.f32 %v1588, %v1779
        %v1846 = vadd.f32 %v1589, %v1781
        %1847 = vst [vmem:[#allocation2] sm:$0xff] %v1783
        %1848 = vst [vmem:[#allocation2 + $0x8] sm:$0xff] %v1784
        %1849 = vst [vmem:[#allocation2 + $0x10] sm:$0xff] %v1785
        %1850 = vst [vmem:[#allocation2 + $0x18] sm:$0xff] %v1786
        %1851 = vst [vmem:[#allocation2 + $0x20] sm:$0xff] %v1787
        %1852 = vst [vmem:[#allocation2 + $0x28] sm:$0xff] %v1788
        %1853 = vst [vmem:[#allocation2 + $0x30] sm:$0xff] %v1789
        %1854 = vst [vmem:[#allocation2 + $0x38] sm:$0xff] %v1790
        %1855 = vst [vmem:[#allocation2 + $0x40] sm:$0xff] %v1791
        %1856 = vst [vmem:[#allocation2 + $0x48] sm:$0xff] %v1792
        %1857 = vst [vmem:[#allocation2 + $0x50] sm:$0xff] %v1793
        %1858 = vst [vmem:[#allocation2 + $0x58] sm:$0xff] %v1794
        %1859 = vst [vmem:[#allocation2 + $0x60] sm:$0xff] %v1795
        %1860 = vst [vmem:[#allocation2 + $0x68] sm:$0xff] %v1796
        %1861 = vst [vmem:[#allocation2 + $0x70] sm:$0xff] %v1797
        %1862 = vst [vmem:[#allocation2 + $0x78] sm:$0xff] %v1798
        %1863 = vst [vmem:[#allocation2 + $0x80] sm:$0xff] %v1799
        %1864 = vst [vmem:[#allocation2 + $0x88] sm:$0xff] %v1800
        %1865 = vst [vmem:[#allocation2 + $0x90] sm:$0xff] %v1801
        %1866 = vst [vmem:[#allocation2 + $0x98] sm:$0xff] %v1802
        %1867 = vst [vmem:[#allocation2 + $0xa0] sm:$0xff] %v1803
        %1868 = vst [vmem:[#allocation2 + $0xa8] sm:$0xff] %v1804
        %1869 = vst [vmem:[#allocation2 + $0xb0] sm:$0xff] %v1805
        %1870 = vst [vmem:[#allocation2 + $0xb8] sm:$0xff] %v1806
        %1871 = vst [vmem:[#allocation2 + $0xc0] sm:$0xff] %v1807
        %1872 = vst [vmem:[#allocation2 + $0xc8] sm:$0xff] %v1808
        %1873 = vst [vmem:[#allocation2 + $0xd0] sm:$0xff] %v1809
        %1874 = vst [vmem:[#allocation2 + $0xd8] sm:$0xff] %v1810
        %1875 = vst [vmem:[#allocation2 + $0xe0] sm:$0xff] %v1811
        %1876 = vst [vmem:[#allocation2 + $0xe8] sm:$0xff] %v1812
        %1877 = vst [vmem:[#allocation2 + $0xf0] sm:$0xff] %v1813
        %1878 = vst [vmem:[#allocation2 + $0xf8] sm:$0xff] %v1814
        %1879 = vst [vmem:[#allocation2 + $0x100] sm:$0xff] %v1815
        %1880 = vst [vmem:[#allocation2 + $0x108] sm:$0xff] %v1816
        %1881 = vst [vmem:[#allocation2 + $0x110] sm:$0xff] %v1817
        %1882 = vst [vmem:[#allocation2 + $0x118] sm:$0xff] %v1818
        %1883 = vst [vmem:[#allocation2 + $0x120] sm:$0xff] %v1819
        %1884 = vst [vmem:[#allocation2 + $0x128] sm:$0xff] %v1820
        %1885 = vst [vmem:[#allocation2 + $0x130] sm:$0xff] %v1821
        %1886 = vst [vmem:[#allocation2 + $0x138] sm:$0xff] %v1822
        %1887 = vst [vmem:[#allocation2 + $0x140] sm:$0xff] %v1823
        %1888 = vst [vmem:[#allocation2 + $0x148] sm:$0xff] %v1824
        %1889 = vst [vmem:[#allocation2 + $0x150] sm:$0xff] %v1825
        %1890 = vst [vmem:[#allocation2 + $0x158] sm:$0xff] %v1826
        %1891 = vst [vmem:[#allocation2 + $0x160] sm:$0xff] %v1827
        %1892 = vst [vmem:[#allocation2 + $0x168] sm:$0xff] %v1828
        %1893 = vst [vmem:[#allocation2 + $0x170] sm:$0xff] %v1829
        %1894 = vst [vmem:[#allocation2 + $0x178] sm:$0xff] %v1830
        %1895 = vst [vmem:[#allocation2 + $0x180] sm:$0xff] %v1831
        %1896 = vst [vmem:[#allocation2 + $0x188] sm:$0xff] %v1832
        %1897 = vst [vmem:[#allocation2 + $0x190] sm:$0xff] %v1833
        %1898 = vst [vmem:[#allocation2 + $0x198] sm:$0xff] %v1834
        %1899 = vst [vmem:[#allocation2 + $0x1a0] sm:$0xff] %v1835
        %1900 = vst [vmem:[#allocation2 + $0x1a8] sm:$0xff] %v1836
        %1901 = vst [vmem:[#allocation2 + $0x1b0] sm:$0xff] %v1837
        %1902 = vst [vmem:[#allocation2 + $0x1b8] sm:$0xff] %v1838
        %1903 = vst [vmem:[#allocation2 + $0x1c0] sm:$0xff] %v1839
        %1904 = vst [vmem:[#allocation2 + $0x1c8] sm:$0xff] %v1840
        %1905 = vst [vmem:[#allocation2 + $0x1d0] sm:$0xff] %v1841
        %1906 = vst [vmem:[#allocation2 + $0x1d8] sm:$0xff] %v1842
        %1907 = vst [vmem:[#allocation2 + $0x1e0] sm:$0xff] %v1843
        %1908 = vst [vmem:[#allocation2 + $0x1e8] sm:$0xff] %v1844
        %1909 = vst [vmem:[#allocation2 + $0x1f0] sm:$0xff] %v1845
        %1910 = vst [vmem:[#allocation2 + $0x1f8] sm:$0xff] %v1846
        // Predicated region
        $region41: #{tpu_custom_call.1} parent=27 // pred_check
          %p1911 = pneg %p217
        $region42: #{tpu_custom_call.1} parent=27 // pred_check_branch
          %1913 = sbr.rel (%p1911) target = $region44
        $region43: #{tpu_custom_call.1} parent=27 // pred_region
          %v1914 = vld [vmem:[#allocation3] sm:$0xff]
          %v1915 = vld [vmem:[#allocation3 + $0x8] sm:$0xff]
          %v1916 = vld [vmem:[#allocation3 + $0x10] sm:$0xff]
          %v1917 = vld [vmem:[#allocation3 + $0x18] sm:$0xff]
          %v1918 = vld [vmem:[#allocation3 + $0x20] sm:$0xff]
          %v1919 = vld [vmem:[#allocation3 + $0x28] sm:$0xff]
          %v1920 = vld [vmem:[#allocation3 + $0x30] sm:$0xff]
          %v1921 = vld [vmem:[#allocation3 + $0x38] sm:$0xff]
          %v1922 = vld [vmem:[#allocation3 + $0x40] sm:$0xff]
          %v1923 = vld [vmem:[#allocation3 + $0x48] sm:$0xff]
          %v1924 = vld [vmem:[#allocation3 + $0x50] sm:$0xff]
          %v1925 = vld [vmem:[#allocation3 + $0x58] sm:$0xff]
          %v1926 = vld [vmem:[#allocation3 + $0x60] sm:$0xff]
          %v1927 = vld [vmem:[#allocation3 + $0x68] sm:$0xff]
          %v1928 = vld [vmem:[#allocation3 + $0x70] sm:$0xff]
          %v1929 = vld [vmem:[#allocation3 + $0x78] sm:$0xff]
          %v1930 = vld [vmem:[#allocation3 + $0x80] sm:$0xff]
          %v1931 = vld [vmem:[#allocation3 + $0x88] sm:$0xff]
          %v1932 = vld [vmem:[#allocation3 + $0x90] sm:$0xff]
          %v1933 = vld [vmem:[#allocation3 + $0x98] sm:$0xff]
          %v1934 = vld [vmem:[#allocation3 + $0xa0] sm:$0xff]
          %v1935 = vld [vmem:[#allocation3 + $0xa8] sm:$0xff]
          %v1936 = vld [vmem:[#allocation3 + $0xb0] sm:$0xff]
          %v1937 = vld [vmem:[#allocation3 + $0xb8] sm:$0xff]
          %v1938 = vld [vmem:[#allocation3 + $0xc0] sm:$0xff]
          %v1939 = vld [vmem:[#allocation3 + $0xc8] sm:$0xff]
          %v1940 = vld [vmem:[#allocation3 + $0xd0] sm:$0xff]
          %v1941 = vld [vmem:[#allocation3 + $0xd8] sm:$0xff]
          %v1942 = vld [vmem:[#allocation3 + $0xe0] sm:$0xff]
          %v1943 = vld [vmem:[#allocation3 + $0xe8] sm:$0xff]
          %v1944 = vld [vmem:[#allocation3 + $0xf0] sm:$0xff]
          %v1945 = vld [vmem:[#allocation3 + $0xf8] sm:$0xff]
          %1946 = vadd.xlane.f32.xlu0 %v1914
          %v1947 = vpop.xlane.xlu0 %1946
          %1948 = vadd.xlane.f32.xlu0 %v1915
          %v1949 = vpop.xlane.xlu0 %1948
          %1950 = vadd.xlane.f32.xlu0 %v1916
          %v1951 = vpop.xlane.xlu0 %1950
          %1952 = vadd.xlane.f32.xlu0 %v1917
          %v1953 = vpop.xlane.xlu0 %1952
          %1954 = vadd.xlane.f32.xlu0 %v1918
          %v1955 = vpop.xlane.xlu0 %1954
          %1956 = vadd.xlane.f32.xlu0 %v1919
          %v1957 = vpop.xlane.xlu0 %1956
          %1958 = vadd.xlane.f32.xlu0 %v1920
          %v1959 = vpop.xlane.xlu0 %1958
          %1960 = vadd.xlane.f32.xlu0 %v1921
          %v1961 = vpop.xlane.xlu0 %1960
          %1962 = vadd.xlane.f32.xlu0 %v1922
          %v1963 = vpop.xlane.xlu0 %1962
          %1964 = vadd.xlane.f32.xlu0 %v1923
          %v1965 = vpop.xlane.xlu0 %1964
          %1966 = vadd.xlane.f32.xlu0 %v1924
          %v1967 = vpop.xlane.xlu0 %1966
          %1968 = vadd.xlane.f32.xlu0 %v1925
          %v1969 = vpop.xlane.xlu0 %1968
          %1970 = vadd.xlane.f32.xlu0 %v1926
          %v1971 = vpop.xlane.xlu0 %1970
          %1972 = vadd.xlane.f32.xlu0 %v1927
          %v1973 = vpop.xlane.xlu0 %1972
          %1974 = vadd.xlane.f32.xlu0 %v1928
          %v1975 = vpop.xlane.xlu0 %1974
          %1976 = vadd.xlane.f32.xlu0 %v1929
          %v1977 = vpop.xlane.xlu0 %1976
          %1978 = vadd.xlane.f32.xlu0 %v1930
          %v1979 = vpop.xlane.xlu0 %1978
          %1980 = vadd.xlane.f32.xlu0 %v1931
          %v1981 = vpop.xlane.xlu0 %1980
          %1982 = vadd.xlane.f32.xlu0 %v1932
          %v1983 = vpop.xlane.xlu0 %1982
          %1984 = vadd.xlane.f32.xlu0 %v1933
          %v1985 = vpop.xlane.xlu0 %1984
          %1986 = vadd.xlane.f32.xlu0 %v1934
          %v1987 = vpop.xlane.xlu0 %1986
          %1988 = vadd.xlane.f32.xlu0 %v1935
          %v1989 = vpop.xlane.xlu0 %1988
          %1990 = vadd.xlane.f32.xlu0 %v1936
          %v1991 = vpop.xlane.xlu0 %1990
          %1992 = vadd.xlane.f32.xlu0 %v1937
          %v1993 = vpop.xlane.xlu0 %1992
          %1994 = vadd.xlane.f32.xlu0 %v1938
          %v1995 = vpop.xlane.xlu0 %1994
          %1996 = vadd.xlane.f32.xlu0 %v1939
          %v1997 = vpop.xlane.xlu0 %1996
          %1998 = vadd.xlane.f32.xlu0 %v1940
          %v1999 = vpop.xlane.xlu0 %1998
          %2000 = vadd.xlane.f32.xlu0 %v1941
          %v2001 = vpop.xlane.xlu0 %2000
          %2002 = vadd.xlane.f32.xlu0 %v1942
          %v2003 = vpop.xlane.xlu0 %2002
          %2004 = vadd.xlane.f32.xlu0 %v1943
          %v2005 = vpop.xlane.xlu0 %2004
          %2006 = vadd.xlane.f32.xlu0 %v1944
          %v2007 = vpop.xlane.xlu0 %2006
          %2008 = vadd.xlane.f32.xlu0 %v1945
          %v2009 = vpop.xlane.xlu0 %2008
          %v2010 = vld [vmem:[#allocation4] sm:$0xff]
          %v2011 = vld [vmem:[#allocation4 + $0x8] sm:$0xff]
          %v2012 = vld [vmem:[#allocation4 + $0x10] sm:$0xff]
          %v2013 = vld [vmem:[#allocation4 + $0x18] sm:$0xff]
          %v2014 = vld [vmem:[#allocation4 + $0x20] sm:$0xff]
          %v2015 = vld [vmem:[#allocation4 + $0x28] sm:$0xff]
          %v2016 = vld [vmem:[#allocation4 + $0x30] sm:$0xff]
          %v2017 = vld [vmem:[#allocation4 + $0x38] sm:$0xff]
          %v2018 = vld [vmem:[#allocation4 + $0x40] sm:$0xff]
          %v2019 = vld [vmem:[#allocation4 + $0x48] sm:$0xff]
          %v2020 = vld [vmem:[#allocation4 + $0x50] sm:$0xff]
          %v2021 = vld [vmem:[#allocation4 + $0x58] sm:$0xff]
          %v2022 = vld [vmem:[#allocation4 + $0x60] sm:$0xff]
          %v2023 = vld [vmem:[#allocation4 + $0x68] sm:$0xff]
          %v2024 = vld [vmem:[#allocation4 + $0x70] sm:$0xff]
          %v2025 = vld [vmem:[#allocation4 + $0x78] sm:$0xff]
          %v2026 = vld [vmem:[#allocation4 + $0x80] sm:$0xff]
          %v2027 = vld [vmem:[#allocation4 + $0x88] sm:$0xff]
          %v2028 = vld [vmem:[#allocation4 + $0x90] sm:$0xff]
          %v2029 = vld [vmem:[#allocation4 + $0x98] sm:$0xff]
          %v2030 = vld [vmem:[#allocation4 + $0xa0] sm:$0xff]
          %v2031 = vld [vmem:[#allocation4 + $0xa8] sm:$0xff]
          %v2032 = vld [vmem:[#allocation4 + $0xb0] sm:$0xff]
          %v2033 = vld [vmem:[#allocation4 + $0xb8] sm:$0xff]
          %v2034 = vld [vmem:[#allocation4 + $0xc0] sm:$0xff]
          %v2035 = vld [vmem:[#allocation4 + $0xc8] sm:$0xff]
          %v2036 = vld [vmem:[#allocation4 + $0xd0] sm:$0xff]
          %v2037 = vld [vmem:[#allocation4 + $0xd8] sm:$0xff]
          %v2038 = vld [vmem:[#allocation4 + $0xe0] sm:$0xff]
          %v2039 = vld [vmem:[#allocation4 + $0xe8] sm:$0xff]
          %v2040 = vld [vmem:[#allocation4 + $0xf0] sm:$0xff]
          %v2041 = vld [vmem:[#allocation4 + $0xf8] sm:$0xff]
          %2042 = vadd.xlane.f32.xlu0 %v2010
          %v2043 = vpop.xlane.xlu0 %2042
          %2044 = vadd.xlane.f32.xlu0 %v2011
          %v2045 = vpop.xlane.xlu0 %2044
          %2046 = vadd.xlane.f32.xlu0 %v2012
          %v2047 = vpop.xlane.xlu0 %2046
          %2048 = vadd.xlane.f32.xlu0 %v2013
          %v2049 = vpop.xlane.xlu0 %2048
          %2050 = vadd.xlane.f32.xlu0 %v2014
          %v2051 = vpop.xlane.xlu0 %2050
          %2052 = vadd.xlane.f32.xlu0 %v2015
          %v2053 = vpop.xlane.xlu0 %2052
          %2054 = vadd.xlane.f32.xlu0 %v2016
          %v2055 = vpop.xlane.xlu0 %2054
          %2056 = vadd.xlane.f32.xlu0 %v2017
          %v2057 = vpop.xlane.xlu0 %2056
          %2058 = vadd.xlane.f32.xlu0 %v2018
          %v2059 = vpop.xlane.xlu0 %2058
          %2060 = vadd.xlane.f32.xlu0 %v2019
          %v2061 = vpop.xlane.xlu0 %2060
          %2062 = vadd.xlane.f32.xlu0 %v2020
          %v2063 = vpop.xlane.xlu0 %2062
          %2064 = vadd.xlane.f32.xlu0 %v2021
          %v2065 = vpop.xlane.xlu0 %2064
          %2066 = vadd.xlane.f32.xlu0 %v2022
          %v2067 = vpop.xlane.xlu0 %2066
          %2068 = vadd.xlane.f32.xlu0 %v2023
          %v2069 = vpop.xlane.xlu0 %2068
          %2070 = vadd.xlane.f32.xlu0 %v2024
          %v2071 = vpop.xlane.xlu0 %2070
          %2072 = vadd.xlane.f32.xlu0 %v2025
          %v2073 = vpop.xlane.xlu0 %2072
          %2074 = vadd.xlane.f32.xlu0 %v2026
          %v2075 = vpop.xlane.xlu0 %2074
          %2076 = vadd.xlane.f32.xlu0 %v2027
          %v2077 = vpop.xlane.xlu0 %2076
          %2078 = vadd.xlane.f32.xlu0 %v2028
          %v2079 = vpop.xlane.xlu0 %2078
          %2080 = vadd.xlane.f32.xlu0 %v2029
          %v2081 = vpop.xlane.xlu0 %2080
          %2082 = vadd.xlane.f32.xlu0 %v2030
          %v2083 = vpop.xlane.xlu0 %2082
          %2084 = vadd.xlane.f32.xlu0 %v2031
          %v2085 = vpop.xlane.xlu0 %2084
          %2086 = vadd.xlane.f32.xlu0 %v2032
          %v2087 = vpop.xlane.xlu0 %2086
          %2088 = vadd.xlane.f32.xlu0 %v2033
          %v2089 = vpop.xlane.xlu0 %2088
          %2090 = vadd.xlane.f32.xlu0 %v2034
          %v2091 = vpop.xlane.xlu0 %2090
          %2092 = vadd.xlane.f32.xlu0 %v2035
          %v2093 = vpop.xlane.xlu0 %2092
          %2094 = vadd.xlane.f32.xlu0 %v2036
          %v2095 = vpop.xlane.xlu0 %2094
          %2096 = vadd.xlane.f32.xlu0 %v2037
          %v2097 = vpop.xlane.xlu0 %2096
          %2098 = vadd.xlane.f32.xlu0 %v2038
          %v2099 = vpop.xlane.xlu0 %2098
          %2100 = vadd.xlane.f32.xlu0 %v2039
          %v2101 = vpop.xlane.xlu0 %2100
          %2102 = vadd.xlane.f32.xlu0 %v2040
          %v2103 = vpop.xlane.xlu0 %2102
          %2104 = vadd.xlane.f32.xlu0 %v2041
          %v2105 = vpop.xlane.xlu0 %2104
          %v2106 = vmul.f32 %v1947, 0.00390625
          %v2107 = vmul.f32 %v1949, 0.00390625
          %v2108 = vmul.f32 %v1951, 0.00390625
          %v2109 = vmul.f32 %v1953, 0.00390625
          %v2110 = vmul.f32 %v1955, 0.00390625
          %v2111 = vmul.f32 %v1957, 0.00390625
          %v2112 = vmul.f32 %v1959, 0.00390625
          %v2113 = vmul.f32 %v1961, 0.00390625
          %v2114 = vmul.f32 %v1963, 0.00390625
          %v2115 = vmul.f32 %v1965, 0.00390625
          %v2116 = vmul.f32 %v1967, 0.00390625
          %v2117 = vmul.f32 %v1969, 0.00390625
          %v2118 = vmul.f32 %v1971, 0.00390625
          %v2119 = vmul.f32 %v1973, 0.00390625
          %v2120 = vmul.f32 %v1975, 0.00390625
          %v2121 = vmul.f32 %v1977, 0.00390625
          %v2122 = vmul.f32 %v1979, 0.00390625
          %v2123 = vmul.f32 %v1981, 0.00390625
          %v2124 = vmul.f32 %v1983, 0.00390625
          %v2125 = vmul.f32 %v1985, 0.00390625
          %v2126 = vmul.f32 %v1987, 0.00390625
          %v2127 = vmul.f32 %v1989, 0.00390625
          %v2128 = vmul.f32 %v1991, 0.00390625
          %v2129 = vmul.f32 %v1993, 0.00390625
          %v2130 = vmul.f32 %v1995, 0.00390625
          %v2131 = vmul.f32 %v1997, 0.00390625
          %v2132 = vmul.f32 %v1999, 0.00390625
          %v2133 = vmul.f32 %v2001, 0.00390625
          %v2134 = vmul.f32 %v2003, 0.00390625
          %v2135 = vmul.f32 %v2005, 0.00390625
          %v2136 = vmul.f32 %v2007, 0.00390625
          %v2137 = vmul.f32 %v2009, 0.00390625
          %v2138 = vmul.f32 %v2043, 0.00390625
          %v2139 = vmul.f32 %v2045, 0.00390625
          %v2140 = vmul.f32 %v2047, 0.00390625
          %v2141 = vmul.f32 %v2049, 0.00390625
          %v2142 = vmul.f32 %v2051, 0.00390625
          %v2143 = vmul.f32 %v2053, 0.00390625
          %v2144 = vmul.f32 %v2055, 0.00390625
          %v2145 = vmul.f32 %v2057, 0.00390625
          %v2146 = vmul.f32 %v2059, 0.00390625
          %v2147 = vmul.f32 %v2061, 0.00390625
          %v2148 = vmul.f32 %v2063, 0.00390625
          %v2149 = vmul.f32 %v2065, 0.00390625
          %v2150 = vmul.f32 %v2067, 0.00390625
          %v2151 = vmul.f32 %v2069, 0.00390625
          %v2152 = vmul.f32 %v2071, 0.00390625
          %v2153 = vmul.f32 %v2073, 0.00390625
          %v2154 = vmul.f32 %v2075, 0.00390625
          %v2155 = vmul.f32 %v2077, 0.00390625
          %v2156 = vmul.f32 %v2079, 0.00390625
          %v2157 = vmul.f32 %v2081, 0.00390625
          %v2158 = vmul.f32 %v2083, 0.00390625
          %v2159 = vmul.f32 %v2085, 0.00390625
          %v2160 = vmul.f32 %v2087, 0.00390625
          %v2161 = vmul.f32 %v2089, 0.00390625
          %v2162 = vmul.f32 %v2091, 0.00390625
          %v2163 = vmul.f32 %v2093, 0.00390625
          %v2164 = vmul.f32 %v2095, 0.00390625
          %v2165 = vmul.f32 %v2097, 0.00390625
          %v2166 = vmul.f32 %v2099, 0.00390625
          %v2167 = vmul.f32 %v2101, 0.00390625
          %v2168 = vmul.f32 %v2103, 0.00390625
          %v2169 = vmul.f32 %v2105, 0.00390625
          %vm2170 = vcmask 7168
          %v2171 = vsel %vm2170, %v2106, 0.0
          %v2172 = vsel %vm2170, %v2107, 0.0
          %v2173 = vadd.f32 %v2171, %v2172
          %v2174 = vsel %vm2170, %v2108, 0.0
          %v2175 = vadd.f32 %v2173, %v2174
          %v2176 = vsel %vm2170, %v2109, 0.0
          %v2177 = vadd.f32 %v2175, %v2176
          %v2178 = vsel %vm2170, %v2110, 0.0
          %v2179 = vadd.f32 %v2177, %v2178
          %v2180 = vsel %vm2170, %v2111, 0.0
          %v2181 = vadd.f32 %v2179, %v2180
          %v2182 = vsel %vm2170, %v2112, 0.0
          %v2183 = vadd.f32 %v2181, %v2182
          %v2184 = vsel %vm2170, %v2113, 0.0
          %v2185 = vadd.f32 %v2183, %v2184
          %v2186 = vsel %vm2170, %v2114, 0.0
          %v2187 = vadd.f32 %v2185, %v2186
          %v2188 = vsel %vm2170, %v2115, 0.0
          %v2189 = vadd.f32 %v2187, %v2188
          %v2190 = vsel %vm2170, %v2116, 0.0
          %v2191 = vadd.f32 %v2189, %v2190
          %v2192 = vsel %vm2170, %v2117, 0.0
          %v2193 = vadd.f32 %v2191, %v2192
          %v2194 = vsel %vm2170, %v2118, 0.0
          %v2195 = vadd.f32 %v2193, %v2194
          %v2196 = vsel %vm2170, %v2119, 0.0
          %v2197 = vadd.f32 %v2195, %v2196
          %v2198 = vsel %vm2170, %v2120, 0.0
          %v2199 = vadd.f32 %v2197, %v2198
          %v2200 = vsel %vm2170, %v2121, 0.0
          %v2201 = vadd.f32 %v2199, %v2200
          %v2202 = vsel %vm2170, %v2122, 0.0
          %v2203 = vadd.f32 %v2201, %v2202
          %v2204 = vsel %vm2170, %v2123, 0.0
          %v2205 = vadd.f32 %v2203, %v2204
          %v2206 = vsel %vm2170, %v2124, 0.0
          %v2207 = vadd.f32 %v2205, %v2206
          %v2208 = vsel %vm2170, %v2125, 0.0
          %v2209 = vadd.f32 %v2207, %v2208
          %v2210 = vsel %vm2170, %v2126, 0.0
          %v2211 = vadd.f32 %v2209, %v2210
          %v2212 = vsel %vm2170, %v2127, 0.0
          %v2213 = vadd.f32 %v2211, %v2212
          %v2214 = vsel %vm2170, %v2128, 0.0
          %v2215 = vadd.f32 %v2213, %v2214
          %v2216 = vsel %vm2170, %v2129, 0.0
          %v2217 = vadd.f32 %v2215, %v2216
          %v2218 = vsel %vm2170, %v2130, 0.0
          %v2219 = vadd.f32 %v2217, %v2218
          %v2220 = vsel %vm2170, %v2131, 0.0
          %v2221 = vadd.f32 %v2219, %v2220
          %v2222 = vsel %vm2170, %v2132, 0.0
          %v2223 = vadd.f32 %v2221, %v2222
          %v2224 = vsel %vm2170, %v2133, 0.0
          %v2225 = vadd.f32 %v2223, %v2224
          %v2226 = vsel %vm2170, %v2134, 0.0
          %v2227 = vadd.f32 %v2225, %v2226
          %v2228 = vsel %vm2170, %v2135, 0.0
          %v2229 = vadd.f32 %v2227, %v2228
          %v2230 = vsel %vm2170, %v2136, 0.0
          %v2231 = vadd.f32 %v2229, %v2230
          %v2232 = vsel %vm2170, %v2137, 0.0
          %v2233 = vadd.f32 %v2231, %v2232
          %2234 = vadd.xlane.f32.xlu0 %v2233
          %v2235 = vpop.xlane.xlu0 %2234
          %v2236 = vrot.slane %v2235, 4
          %v2237 = vadd.f32 %v2235, %v2236
          %v2238 = vrot.slane %v2237, 2
          %v2239 = vadd.f32 %v2237, %v2238
          %v2240 = vrot.slane %v2239, 1
          %v2241 = vadd.f32 %v2239, %v2240
          %s2242 = vtos %v2241
          %s2243 = sadd.f32 %s2242, 1e-10
          %v2244 = vstv %s2243
          %v2245 = vrcp.pop %v2244
          %v2246 = vmul.f32 %v2106, %v2245
          %v2247 = vmul.f32 %v2107, %v2245
          %v2248 = vmul.f32 %v2108, %v2245
          %v2249 = vmul.f32 %v2109, %v2245
          %v2250 = vmul.f32 %v2110, %v2245
          %v2251 = vmul.f32 %v2111, %v2245
          %v2252 = vmul.f32 %v2112, %v2245
          %v2253 = vmul.f32 %v2113, %v2245
          %v2254 = vmul.f32 %v2114, %v2245
          %v2255 = vmul.f32 %v2115, %v2245
          %v2256 = vmul.f32 %v2116, %v2245
          %v2257 = vmul.f32 %v2117, %v2245
          %v2258 = vmul.f32 %v2118, %v2245
          %v2259 = vmul.f32 %v2119, %v2245
          %v2260 = vmul.f32 %v2120, %v2245
          %v2261 = vmul.f32 %v2121, %v2245
          %v2262 = vmul.f32 %v2122, %v2245
          %v2263 = vmul.f32 %v2123, %v2245
          %v2264 = vmul.f32 %v2124, %v2245
          %v2265 = vmul.f32 %v2125, %v2245
          %v2266 = vmul.f32 %v2126, %v2245
          %v2267 = vmul.f32 %v2127, %v2245
          %v2268 = vmul.f32 %v2128, %v2245
          %v2269 = vmul.f32 %v2129, %v2245
          %v2270 = vmul.f32 %v2130, %v2245
          %v2271 = vmul.f32 %v2131, %v2245
          %v2272 = vmul.f32 %v2132, %v2245
          %v2273 = vmul.f32 %v2133, %v2245
          %v2274 = vmul.f32 %v2134, %v2245
          %v2275 = vmul.f32 %v2135, %v2245
          %v2276 = vmul.f32 %v2136, %v2245
          %v2277 = vmul.f32 %v2137, %v2245
          %v2278 = vsel %vm2170, %v2138, 0.0
          %v2279 = vsel %vm2170, %v2139, 0.0
          %v2280 = vadd.f32 %v2278, %v2279
          %v2281 = vsel %vm2170, %v2140, 0.0
          %v2282 = vadd.f32 %v2280, %v2281
          %v2283 = vsel %vm2170, %v2141, 0.0
          %v2284 = vadd.f32 %v2282, %v2283
          %v2285 = vsel %vm2170, %v2142, 0.0
          %v2286 = vadd.f32 %v2284, %v2285
          %v2287 = vsel %vm2170, %v2143, 0.0
          %v2288 = vadd.f32 %v2286, %v2287
          %v2289 = vsel %vm2170, %v2144, 0.0
          %v2290 = vadd.f32 %v2288, %v2289
          %v2291 = vsel %vm2170, %v2145, 0.0
          %v2292 = vadd.f32 %v2290, %v2291
          %v2293 = vsel %vm2170, %v2146, 0.0
          %v2294 = vadd.f32 %v2292, %v2293
          %v2295 = vsel %vm2170, %v2147, 0.0
          %v2296 = vadd.f32 %v2294, %v2295
          %v2297 = vsel %vm2170, %v2148, 0.0
          %v2298 = vadd.f32 %v2296, %v2297
          %v2299 = vsel %vm2170, %v2149, 0.0
          %v2300 = vadd.f32 %v2298, %v2299
          %v2301 = vsel %vm2170, %v2150, 0.0
          %v2302 = vadd.f32 %v2300, %v2301
          %v2303 = vsel %vm2170, %v2151, 0.0
          %v2304 = vadd.f32 %v2302, %v2303
          %v2305 = vsel %vm2170, %v2152, 0.0
          %v2306 = vadd.f32 %v2304, %v2305
          %v2307 = vsel %vm2170, %v2153, 0.0
          %v2308 = vadd.f32 %v2306, %v2307
          %v2309 = vsel %vm2170, %v2154, 0.0
          %v2310 = vadd.f32 %v2308, %v2309
          %v2311 = vsel %vm2170, %v2155, 0.0
          %v2312 = vadd.f32 %v2310, %v2311
          %v2313 = vsel %vm2170, %v2156, 0.0
          %v2314 = vadd.f32 %v2312, %v2313
          %v2315 = vsel %vm2170, %v2157, 0.0
          %v2316 = vadd.f32 %v2314, %v2315
          %v2317 = vsel %vm2170, %v2158, 0.0
          %v2318 = vadd.f32 %v2316, %v2317
          %v2319 = vsel %vm2170, %v2159, 0.0
          %v2320 = vadd.f32 %v2318, %v2319
          %v2321 = vsel %vm2170, %v2160, 0.0
          %v2322 = vadd.f32 %v2320, %v2321
          %v2323 = vsel %vm2170, %v2161, 0.0
          %v2324 = vadd.f32 %v2322, %v2323
          %v2325 = vsel %vm2170, %v2162, 0.0
          %v2326 = vadd.f32 %v2324, %v2325
          %v2327 = vsel %vm2170, %v2163, 0.0
          %v2328 = vadd.f32 %v2326, %v2327
          %v2329 = vsel %vm2170, %v2164, 0.0
          %v2330 = vadd.f32 %v2328, %v2329
          %v2331 = vsel %vm2170, %v2165, 0.0
          %v2332 = vadd.f32 %v2330, %v2331
          %v2333 = vsel %vm2170, %v2166, 0.0
          %v2334 = vadd.f32 %v2332, %v2333
          %v2335 = vsel %vm2170, %v2167, 0.0
          %v2336 = vadd.f32 %v2334, %v2335
          %v2337 = vsel %vm2170, %v2168, 0.0
          %v2338 = vadd.f32 %v2336, %v2337
          %v2339 = vsel %vm2170, %v2169, 0.0
          %v2340 = vadd.f32 %v2338, %v2339
          %2341 = vadd.xlane.f32.xlu0 %v2340
          %v2342 = vpop.xlane.xlu0 %2341
          %v2343 = vrot.slane %v2342, 4
          %v2344 = vadd.f32 %v2342, %v2343
          %v2345 = vrot.slane %v2344, 2
          %v2346 = vadd.f32 %v2344, %v2345
          %v2347 = vrot.slane %v2346, 1
          %v2348 = vadd.f32 %v2346, %v2347
          %s2349 = vtos %v2348
          %s2350 = sadd.f32 %s2349, 1e-10
          %v2351 = vstv %s2350
          %v2352 = vrcp.pop %v2351
          %v2353 = vmul.f32 %v2138, %v2352
          %v2354 = vmul.f32 %v2139, %v2352
          %v2355 = vmul.f32 %v2140, %v2352
          %v2356 = vmul.f32 %v2141, %v2352
          %v2357 = vmul.f32 %v2142, %v2352
          %v2358 = vmul.f32 %v2143, %v2352
          %v2359 = vmul.f32 %v2144, %v2352
          %v2360 = vmul.f32 %v2145, %v2352
          %v2361 = vmul.f32 %v2146, %v2352
          %v2362 = vmul.f32 %v2147, %v2352
          %v2363 = vmul.f32 %v2148, %v2352
          %v2364 = vmul.f32 %v2149, %v2352
          %v2365 = vmul.f32 %v2150, %v2352
          %v2366 = vmul.f32 %v2151, %v2352
          %v2367 = vmul.f32 %v2152, %v2352
          %v2368 = vmul.f32 %v2153, %v2352
          %v2369 = vmul.f32 %v2154, %v2352
          %v2370 = vmul.f32 %v2155, %v2352
          %v2371 = vmul.f32 %v2156, %v2352
          %v2372 = vmul.f32 %v2157, %v2352
          %v2373 = vmul.f32 %v2158, %v2352
          %v2374 = vmul.f32 %v2159, %v2352
          %v2375 = vmul.f32 %v2160, %v2352
          %v2376 = vmul.f32 %v2161, %v2352
          %v2377 = vmul.f32 %v2162, %v2352
          %v2378 = vmul.f32 %v2163, %v2352
          %v2379 = vmul.f32 %v2164, %v2352
          %v2380 = vmul.f32 %v2165, %v2352
          %v2381 = vmul.f32 %v2166, %v2352
          %v2382 = vmul.f32 %v2167, %v2352
          %v2383 = vmul.f32 %v2168, %v2352
          %v2384 = vmul.f32 %v2169, %v2352
          %v2385 = vld [vmem:[#allocation2] sm:$0xff]
          %v2386 = vld [vmem:[#allocation2 + $0x8] sm:$0xff]
          %v2387 = vld [vmem:[#allocation2 + $0x10] sm:$0xff]
          %v2388 = vld [vmem:[#allocation2 + $0x18] sm:$0xff]
          %v2389 = vld [vmem:[#allocation2 + $0x20] sm:$0xff]
          %v2390 = vld [vmem:[#allocation2 + $0x28] sm:$0xff]
          %v2391 = vld [vmem:[#allocation2 + $0x30] sm:$0xff]
          %v2392 = vld [vmem:[#allocation2 + $0x38] sm:$0xff]
          %v2393 = vld [vmem:[#allocation2 + $0x40] sm:$0xff]
          %v2394 = vld [vmem:[#allocation2 + $0x48] sm:$0xff]
          %v2395 = vld [vmem:[#allocation2 + $0x50] sm:$0xff]
          %v2396 = vld [vmem:[#allocation2 + $0x58] sm:$0xff]
          %v2397 = vld [vmem:[#allocation2 + $0x60] sm:$0xff]
          %v2398 = vld [vmem:[#allocation2 + $0x68] sm:$0xff]
          %v2399 = vld [vmem:[#allocation2 + $0x70] sm:$0xff]
          %v2400 = vld [vmem:[#allocation2 + $0x78] sm:$0xff]
          %v2401 = vld [vmem:[#allocation2 + $0x80] sm:$0xff]
          %v2402 = vld [vmem:[#allocation2 + $0x88] sm:$0xff]
          %v2403 = vld [vmem:[#allocation2 + $0x90] sm:$0xff]
          %v2404 = vld [vmem:[#allocation2 + $0x98] sm:$0xff]
          %v2405 = vld [vmem:[#allocation2 + $0xa0] sm:$0xff]
          %v2406 = vld [vmem:[#allocation2 + $0xa8] sm:$0xff]
          %v2407 = vld [vmem:[#allocation2 + $0xb0] sm:$0xff]
          %v2408 = vld [vmem:[#allocation2 + $0xb8] sm:$0xff]
          %v2409 = vld [vmem:[#allocation2 + $0xc0] sm:$0xff]
          %v2410 = vld [vmem:[#allocation2 + $0xc8] sm:$0xff]
          %v2411 = vld [vmem:[#allocation2 + $0xd0] sm:$0xff]
          %v2412 = vld [vmem:[#allocation2 + $0xd8] sm:$0xff]
          %v2413 = vld [vmem:[#allocation2 + $0xe0] sm:$0xff]
          %v2414 = vld [vmem:[#allocation2 + $0xe8] sm:$0xff]
          %v2415 = vld [vmem:[#allocation2 + $0xf0] sm:$0xff]
          %v2416 = vld [vmem:[#allocation2 + $0xf8] sm:$0xff]
          %v2417 = vld [vmem:[#allocation2 + $0x100] sm:$0xff]
          %v2418 = vld [vmem:[#allocation2 + $0x108] sm:$0xff]
          %v2419 = vld [vmem:[#allocation2 + $0x110] sm:$0xff]
          %v2420 = vld [vmem:[#allocation2 + $0x118] sm:$0xff]
          %v2421 = vld [vmem:[#allocation2 + $0x120] sm:$0xff]
          %v2422 = vld [vmem:[#allocation2 + $0x128] sm:$0xff]
          %v2423 = vld [vmem:[#allocation2 + $0x130] sm:$0xff]
          %v2424 = vld [vmem:[#allocation2 + $0x138] sm:$0xff]
          %v2425 = vld [vmem:[#allocation2 + $0x140] sm:$0xff]
          %v2426 = vld [vmem:[#allocation2 + $0x148] sm:$0xff]
          %v2427 = vld [vmem:[#allocation2 + $0x150] sm:$0xff]
          %v2428 = vld [vmem:[#allocation2 + $0x158] sm:$0xff]
          %v2429 = vld [vmem:[#allocation2 + $0x160] sm:$0xff]
          %v2430 = vld [vmem:[#allocation2 + $0x168] sm:$0xff]
          %v2431 = vld [vmem:[#allocation2 + $0x170] sm:$0xff]
          %v2432 = vld [vmem:[#allocation2 + $0x178] sm:$0xff]
          %v2433 = vld [vmem:[#allocation2 + $0x180] sm:$0xff]
          %v2434 = vld [vmem:[#allocation2 + $0x188] sm:$0xff]
          %v2435 = vld [vmem:[#allocation2 + $0x190] sm:$0xff]
          %v2436 = vld [vmem:[#allocation2 + $0x198] sm:$0xff]
          %v2437 = vld [vmem:[#allocation2 + $0x1a0] sm:$0xff]
          %v2438 = vld [vmem:[#allocation2 + $0x1a8] sm:$0xff]
          %v2439 = vld [vmem:[#allocation2 + $0x1b0] sm:$0xff]
          %v2440 = vld [vmem:[#allocation2 + $0x1b8] sm:$0xff]
          %v2441 = vld [vmem:[#allocation2 + $0x1c0] sm:$0xff]
          %v2442 = vld [vmem:[#allocation2 + $0x1c8] sm:$0xff]
          %v2443 = vld [vmem:[#allocation2 + $0x1d0] sm:$0xff]
          %v2444 = vld [vmem:[#allocation2 + $0x1d8] sm:$0xff]
          %v2445 = vld [vmem:[#allocation2 + $0x1e0] sm:$0xff]
          %v2446 = vld [vmem:[#allocation2 + $0x1e8] sm:$0xff]
          %v2447 = vld [vmem:[#allocation2 + $0x1f0] sm:$0xff]
          %v2448 = vld [vmem:[#allocation2 + $0x1f8] sm:$0xff]
          %v2449 = vadd.f32 %v2385, %v2386
          %v2450 = vadd.f32 %v2449, %v2387
          %v2451 = vadd.f32 %v2450, %v2388
          %v2452 = vadd.f32 %v2451, %v2389
          %v2453 = vadd.f32 %v2452, %v2390
          %v2454 = vadd.f32 %v2453, %v2391
          %v2455 = vadd.f32 %v2454, %v2392
          %v2456 = vadd.f32 %v2455, %v2393
          %v2457 = vadd.f32 %v2456, %v2394
          %v2458 = vadd.f32 %v2457, %v2395
          %v2459 = vadd.f32 %v2458, %v2396
          %v2460 = vadd.f32 %v2459, %v2397
          %v2461 = vadd.f32 %v2460, %v2398
          %v2462 = vadd.f32 %v2461, %v2399
          %v2463 = vadd.f32 %v2462, %v2400
          %v2464 = vadd.f32 %v2463, %v2401
          %v2465 = vadd.f32 %v2464, %v2402
          %v2466 = vadd.f32 %v2465, %v2403
          %v2467 = vadd.f32 %v2466, %v2404
          %v2468 = vadd.f32 %v2467, %v2405
          %v2469 = vadd.f32 %v2468, %v2406
          %v2470 = vadd.f32 %v2469, %v2407
          %v2471 = vadd.f32 %v2470, %v2408
          %v2472 = vadd.f32 %v2471, %v2409
          %v2473 = vadd.f32 %v2472, %v2410
          %v2474 = vadd.f32 %v2473, %v2411
          %v2475 = vadd.f32 %v2474, %v2412
          %v2476 = vadd.f32 %v2475, %v2413
          %v2477 = vadd.f32 %v2476, %v2414
          %v2478 = vadd.f32 %v2477, %v2415
          %v2479 = vadd.f32 %v2478, %v2416
          %v2480 = vadd.f32 %v2479, %v2417
          %v2481 = vadd.f32 %v2480, %v2418
          %v2482 = vadd.f32 %v2481, %v2419
          %v2483 = vadd.f32 %v2482, %v2420
          %v2484 = vadd.f32 %v2483, %v2421
          %v2485 = vadd.f32 %v2484, %v2422
          %v2486 = vadd.f32 %v2485, %v2423
          %v2487 = vadd.f32 %v2486, %v2424
          %v2488 = vadd.f32 %v2487, %v2425
          %v2489 = vadd.f32 %v2488, %v2426
          %v2490 = vadd.f32 %v2489, %v2427
          %v2491 = vadd.f32 %v2490, %v2428
          %v2492 = vadd.f32 %v2491, %v2429
          %v2493 = vadd.f32 %v2492, %v2430
          %v2494 = vadd.f32 %v2493, %v2431
          %v2495 = vadd.f32 %v2494, %v2432
          %v2496 = vadd.f32 %v2495, %v2433
          %v2497 = vadd.f32 %v2496, %v2434
          %v2498 = vadd.f32 %v2497, %v2435
          %v2499 = vadd.f32 %v2498, %v2436
          %v2500 = vadd.f32 %v2499, %v2437
          %v2501 = vadd.f32 %v2500, %v2438
          %v2502 = vadd.f32 %v2501, %v2439
          %v2503 = vadd.f32 %v2502, %v2440
          %v2504 = vadd.f32 %v2503, %v2441
          %v2505 = vadd.f32 %v2504, %v2442
          %v2506 = vadd.f32 %v2505, %v2443
          %v2507 = vadd.f32 %v2506, %v2444
          %v2508 = vadd.f32 %v2507, %v2445
          %v2509 = vadd.f32 %v2508, %v2446
          %v2510 = vadd.f32 %v2509, %v2447
          %v2511 = vadd.f32 %v2510, %v2448
          %2512 = vadd.xlane.f32.xlu0 %v2511
          %v2513 = vpop.xlane.xlu0 %2512
          %v2514 = vrot.slane %v2513, 4
          %v2515 = vadd.f32 %v2513, %v2514
          %v2516 = vrot.slane %v2515, 2
          %v2517 = vadd.f32 %v2515, %v2516
          %v2518 = vrot.slane %v2517, 1
          %v2519 = vadd.f32 %v2517, %v2518
          %s2520 = vtos %v2519
          %s2521 = sadd.f32 %s2520, 1e-10
          %v2522 = vstv %s2521
          %v2523 = vrcp.pop %v2522
          %v2524 = vmul.f32 %v2385, %v2523
          %v2525 = vmul.f32 %v2386, %v2523
          %v2526 = vmul.f32 %v2387, %v2523
          %v2527 = vmul.f32 %v2388, %v2523
          %v2528 = vmul.f32 %v2389, %v2523
          %v2529 = vmul.f32 %v2390, %v2523
          %v2530 = vmul.f32 %v2391, %v2523
          %v2531 = vmul.f32 %v2392, %v2523
          %v2532 = vmul.f32 %v2393, %v2523
          %v2533 = vmul.f32 %v2394, %v2523
          %v2534 = vmul.f32 %v2395, %v2523
          %v2535 = vmul.f32 %v2396, %v2523
          %v2536 = vmul.f32 %v2397, %v2523
          %v2537 = vmul.f32 %v2398, %v2523
          %v2538 = vmul.f32 %v2399, %v2523
          %v2539 = vmul.f32 %v2400, %v2523
          %v2540 = vmul.f32 %v2401, %v2523
          %v2541 = vmul.f32 %v2402, %v2523
          %v2542 = vmul.f32 %v2403, %v2523
          %v2543 = vmul.f32 %v2404, %v2523
          %v2544 = vmul.f32 %v2405, %v2523
          %v2545 = vmul.f32 %v2406, %v2523
          %v2546 = vmul.f32 %v2407, %v2523
          %v2547 = vmul.f32 %v2408, %v2523
          %v2548 = vmul.f32 %v2409, %v2523
          %v2549 = vmul.f32 %v2410, %v2523
          %v2550 = vmul.f32 %v2411, %v2523
          %v2551 = vmul.f32 %v2412, %v2523
          %v2552 = vmul.f32 %v2413, %v2523
          %v2553 = vmul.f32 %v2414, %v2523
          %v2554 = vmul.f32 %v2415, %v2523
          %v2555 = vmul.f32 %v2416, %v2523
          %v2556 = vmul.f32 %v2417, %v2523
          %v2557 = vmul.f32 %v2418, %v2523
          %v2558 = vmul.f32 %v2419, %v2523
          %v2559 = vmul.f32 %v2420, %v2523
          %v2560 = vmul.f32 %v2421, %v2523
          %v2561 = vmul.f32 %v2422, %v2523
          %v2562 = vmul.f32 %v2423, %v2523
          %v2563 = vmul.f32 %v2424, %v2523
          %v2564 = vmul.f32 %v2425, %v2523
          %v2565 = vmul.f32 %v2426, %v2523
          %v2566 = vmul.f32 %v2427, %v2523
          %v2567 = vmul.f32 %v2428, %v2523
          %v2568 = vmul.f32 %v2429, %v2523
          %v2569 = vmul.f32 %v2430, %v2523
          %v2570 = vmul.f32 %v2431, %v2523
          %v2571 = vmul.f32 %v2432, %v2523
          %v2572 = vmul.f32 %v2433, %v2523
          %v2573 = vmul.f32 %v2434, %v2523
          %v2574 = vmul.f32 %v2435, %v2523
          %v2575 = vmul.f32 %v2436, %v2523
          %v2576 = vmul.f32 %v2437, %v2523
          %v2577 = vmul.f32 %v2438, %v2523
          %v2578 = vmul.f32 %v2439, %v2523
          %v2579 = vmul.f32 %v2440, %v2523
          %v2580 = vmul.f32 %v2441, %v2523
          %v2581 = vmul.f32 %v2442, %v2523
          %v2582 = vmul.f32 %v2443, %v2523
          %v2583 = vmul.f32 %v2444, %v2523
          %v2584 = vmul.f32 %v2445, %v2523
          %v2585 = vmul.f32 %v2446, %v2523
          %v2586 = vmul.f32 %v2447, %v2523
          %v2587 = vmul.f32 %v2448, %v2523
          %v2588 = vadd.f32 %v2246, 1e-10
          %v2589 = vadd.f32 %v2247, 1e-10
          %v2590 = vadd.f32 %v2248, 1e-10
          %v2591 = vadd.f32 %v2249, 1e-10
          %v2592 = vadd.f32 %v2250, 1e-10
          %v2593 = vadd.f32 %v2251, 1e-10
          %v2594 = vadd.f32 %v2252, 1e-10
          %v2595 = vadd.f32 %v2253, 1e-10
          %v2596 = vadd.f32 %v2254, 1e-10
          %v2597 = vadd.f32 %v2255, 1e-10
          %v2598 = vadd.f32 %v2256, 1e-10
          %v2599 = vadd.f32 %v2257, 1e-10
          %v2600 = vadd.f32 %v2258, 1e-10
          %v2601 = vadd.f32 %v2259, 1e-10
          %v2602 = vadd.f32 %v2260, 1e-10
          %v2603 = vadd.f32 %v2261, 1e-10
          %v2604 = vadd.f32 %v2262, 1e-10
          %v2605 = vadd.f32 %v2263, 1e-10
          %v2606 = vadd.f32 %v2264, 1e-10
          %v2607 = vadd.f32 %v2265, 1e-10
          %v2608 = vadd.f32 %v2266, 1e-10
          %v2609 = vadd.f32 %v2267, 1e-10
          %v2610 = vadd.f32 %v2268, 1e-10
          %v2611 = vadd.f32 %v2269, 1e-10
          %v2612 = vadd.f32 %v2270, 1e-10
          %v2613 = vadd.f32 %v2271, 1e-10
          %v2614 = vadd.f32 %v2272, 1e-10
          %v2615 = vadd.f32 %v2273, 1e-10
          %v2616 = vadd.f32 %v2274, 1e-10
          %v2617 = vadd.f32 %v2275, 1e-10
          %v2618 = vadd.f32 %v2276, 1e-10
          %v2619 = vadd.f32 %v2277, 1e-10
          %v2620 = vlog2.pop %v2588
          %v2621 = vmul.f32 %v2620, 0.6931472
          %v2622 = vlog2.pop %v2589
          %v2623 = vmul.f32 %v2622, 0.6931472
          %v2624 = vlog2.pop %v2590
          %v2625 = vmul.f32 %v2624, 0.6931472
          %v2626 = vlog2.pop %v2591
          %v2627 = vmul.f32 %v2626, 0.6931472
          %v2628 = vlog2.pop %v2592
          %v2629 = vmul.f32 %v2628, 0.6931472
          %v2630 = vlog2.pop %v2593
          %v2631 = vmul.f32 %v2630, 0.6931472
          %v2632 = vlog2.pop %v2594
          %v2633 = vmul.f32 %v2632, 0.6931472
          %v2634 = vlog2.pop %v2595
          %v2635 = vmul.f32 %v2634, 0.6931472
          %v2636 = vlog2.pop %v2596
          %v2637 = vmul.f32 %v2636, 0.6931472
          %v2638 = vlog2.pop %v2597
          %v2639 = vmul.f32 %v2638, 0.6931472
          %v2640 = vlog2.pop %v2598
          %v2641 = vmul.f32 %v2640, 0.6931472
          %v2642 = vlog2.pop %v2599
          %v2643 = vmul.f32 %v2642, 0.6931472
          %v2644 = vlog2.pop %v2600
          %v2645 = vmul.f32 %v2644, 0.6931472
          %v2646 = vlog2.pop %v2601
          %v2647 = vmul.f32 %v2646, 0.6931472
          %v2648 = vlog2.pop %v2602
          %v2649 = vmul.f32 %v2648, 0.6931472
          %v2650 = vlog2.pop %v2603
          %v2651 = vmul.f32 %v2650, 0.6931472
          %v2652 = vlog2.pop %v2604
          %v2653 = vmul.f32 %v2652, 0.6931472
          %v2654 = vlog2.pop %v2605
          %v2655 = vmul.f32 %v2654, 0.6931472
          %v2656 = vlog2.pop %v2606
          %v2657 = vmul.f32 %v2656, 0.6931472
          %v2658 = vlog2.pop %v2607
          %v2659 = vmul.f32 %v2658, 0.6931472
          %v2660 = vlog2.pop %v2608
          %v2661 = vmul.f32 %v2660, 0.6931472
          %v2662 = vlog2.pop %v2609
          %v2663 = vmul.f32 %v2662, 0.6931472
          %v2664 = vlog2.pop %v2610
          %v2665 = vmul.f32 %v2664, 0.6931472
          %v2666 = vlog2.pop %v2611
          %v2667 = vmul.f32 %v2666, 0.6931472
          %v2668 = vlog2.pop %v2612
          %v2669 = vmul.f32 %v2668, 0.6931472
          %v2670 = vlog2.pop %v2613
          %v2671 = vmul.f32 %v2670, 0.6931472
          %v2672 = vlog2.pop %v2614
          %v2673 = vmul.f32 %v2672, 0.6931472
          %v2674 = vlog2.pop %v2615
          %v2675 = vmul.f32 %v2674, 0.6931472
          %v2676 = vlog2.pop %v2616
          %v2677 = vmul.f32 %v2676, 0.6931472
          %v2678 = vlog2.pop %v2617
          %v2679 = vmul.f32 %v2678, 0.6931472
          %v2680 = vlog2.pop %v2618
          %v2681 = vmul.f32 %v2680, 0.6931472
          %v2682 = vlog2.pop %v2619
          %v2683 = vmul.f32 %v2682, 0.6931472
          %v2684 = vrcp.pop 0.6931472
          %v2685 = vmul.f32 %v2621, %v2684
          %v2686 = vmul.f32 %v2623, %v2684
          %v2687 = vmul.f32 %v2625, %v2684
          %v2688 = vmul.f32 %v2627, %v2684
          %v2689 = vmul.f32 %v2629, %v2684
          %v2690 = vmul.f32 %v2631, %v2684
          %v2691 = vmul.f32 %v2633, %v2684
          %v2692 = vmul.f32 %v2635, %v2684
          %v2693 = vmul.f32 %v2637, %v2684
          %v2694 = vmul.f32 %v2639, %v2684
          %v2695 = vmul.f32 %v2641, %v2684
          %v2696 = vmul.f32 %v2643, %v2684
          %v2697 = vmul.f32 %v2645, %v2684
          %v2698 = vmul.f32 %v2647, %v2684
          %v2699 = vmul.f32 %v2649, %v2684
          %v2700 = vmul.f32 %v2651, %v2684
          %v2701 = vmul.f32 %v2653, %v2684
          %v2702 = vmul.f32 %v2655, %v2684
          %v2703 = vmul.f32 %v2657, %v2684
          %v2704 = vmul.f32 %v2659, %v2684
          %v2705 = vmul.f32 %v2661, %v2684
          %v2706 = vmul.f32 %v2663, %v2684
          %v2707 = vmul.f32 %v2665, %v2684
          %v2708 = vmul.f32 %v2667, %v2684
          %v2709 = vmul.f32 %v2669, %v2684
          %v2710 = vmul.f32 %v2671, %v2684
          %v2711 = vmul.f32 %v2673, %v2684
          %v2712 = vmul.f32 %v2675, %v2684
          %v2713 = vmul.f32 %v2677, %v2684
          %v2714 = vmul.f32 %v2679, %v2684
          %v2715 = vmul.f32 %v2681, %v2684
          %v2716 = vmul.f32 %v2683, %v2684
          %v2717 = vmul.f32 %v2246, %v2685
          %v2718 = vmul.f32 %v2247, %v2686
          %v2719 = vmul.f32 %v2248, %v2687
          %v2720 = vmul.f32 %v2249, %v2688
          %v2721 = vmul.f32 %v2250, %v2689
          %v2722 = vmul.f32 %v2251, %v2690
          %v2723 = vmul.f32 %v2252, %v2691
          %v2724 = vmul.f32 %v2253, %v2692
          %v2725 = vmul.f32 %v2254, %v2693
          %v2726 = vmul.f32 %v2255, %v2694
          %v2727 = vmul.f32 %v2256, %v2695
          %v2728 = vmul.f32 %v2257, %v2696
          %v2729 = vmul.f32 %v2258, %v2697
          %v2730 = vmul.f32 %v2259, %v2698
          %v2731 = vmul.f32 %v2260, %v2699
          %v2732 = vmul.f32 %v2261, %v2700
          %v2733 = vmul.f32 %v2262, %v2701
          %v2734 = vmul.f32 %v2263, %v2702
          %v2735 = vmul.f32 %v2264, %v2703
          %v2736 = vmul.f32 %v2265, %v2704
          %v2737 = vmul.f32 %v2266, %v2705
          %v2738 = vmul.f32 %v2267, %v2706
          %v2739 = vmul.f32 %v2268, %v2707
          %v2740 = vmul.f32 %v2269, %v2708
          %v2741 = vmul.f32 %v2270, %v2709
          %v2742 = vmul.f32 %v2271, %v2710
          %v2743 = vmul.f32 %v2272, %v2711
          %v2744 = vmul.f32 %v2273, %v2712
          %v2745 = vmul.f32 %v2274, %v2713
          %v2746 = vmul.f32 %v2275, %v2714
          %v2747 = vmul.f32 %v2276, %v2715
          %v2748 = vmul.f32 %v2277, %v2716
          %v2749 = vsel %vm2170, %v2717, 0.0
          %v2750 = vsel %vm2170, %v2718, 0.0
          %v2751 = vadd.f32 %v2749, %v2750
          %v2752 = vsel %vm2170, %v2719, 0.0
          %v2753 = vadd.f32 %v2751, %v2752
          %v2754 = vsel %vm2170, %v2720, 0.0
          %v2755 = vadd.f32 %v2753, %v2754
          %v2756 = vsel %vm2170, %v2721, 0.0
          %v2757 = vadd.f32 %v2755, %v2756
          %v2758 = vsel %vm2170, %v2722, 0.0
          %v2759 = vadd.f32 %v2757, %v2758
          %v2760 = vsel %vm2170, %v2723, 0.0
          %v2761 = vadd.f32 %v2759, %v2760
          %v2762 = vsel %vm2170, %v2724, 0.0
          %v2763 = vadd.f32 %v2761, %v2762
          %v2764 = vsel %vm2170, %v2725, 0.0
          %v2765 = vadd.f32 %v2763, %v2764
          %v2766 = vsel %vm2170, %v2726, 0.0
          %v2767 = vadd.f32 %v2765, %v2766
          %v2768 = vsel %vm2170, %v2727, 0.0
          %v2769 = vadd.f32 %v2767, %v2768
          %v2770 = vsel %vm2170, %v2728, 0.0
          %v2771 = vadd.f32 %v2769, %v2770
          %v2772 = vsel %vm2170, %v2729, 0.0
          %v2773 = vadd.f32 %v2771, %v2772
          %v2774 = vsel %vm2170, %v2730, 0.0
          %v2775 = vadd.f32 %v2773, %v2774
          %v2776 = vsel %vm2170, %v2731, 0.0
          %v2777 = vadd.f32 %v2775, %v2776
          %v2778 = vsel %vm2170, %v2732, 0.0
          %v2779 = vadd.f32 %v2777, %v2778
          %v2780 = vsel %vm2170, %v2733, 0.0
          %v2781 = vadd.f32 %v2779, %v2780
          %v2782 = vsel %vm2170, %v2734, 0.0
          %v2783 = vadd.f32 %v2781, %v2782
          %v2784 = vsel %vm2170, %v2735, 0.0
          %v2785 = vadd.f32 %v2783, %v2784
          %v2786 = vsel %vm2170, %v2736, 0.0
          %v2787 = vadd.f32 %v2785, %v2786
          %v2788 = vsel %vm2170, %v2737, 0.0
          %v2789 = vadd.f32 %v2787, %v2788
          %v2790 = vsel %vm2170, %v2738, 0.0
          %v2791 = vadd.f32 %v2789, %v2790
          %v2792 = vsel %vm2170, %v2739, 0.0
          %v2793 = vadd.f32 %v2791, %v2792
          %v2794 = vsel %vm2170, %v2740, 0.0
          %v2795 = vadd.f32 %v2793, %v2794
          %v2796 = vsel %vm2170, %v2741, 0.0
          %v2797 = vadd.f32 %v2795, %v2796
          %v2798 = vsel %vm2170, %v2742, 0.0
          %v2799 = vadd.f32 %v2797, %v2798
          %v2800 = vsel %vm2170, %v2743, 0.0
          %v2801 = vadd.f32 %v2799, %v2800
          %v2802 = vsel %vm2170, %v2744, 0.0
          %v2803 = vadd.f32 %v2801, %v2802
          %v2804 = vsel %vm2170, %v2745, 0.0
          %v2805 = vadd.f32 %v2803, %v2804
          %v2806 = vsel %vm2170, %v2746, 0.0
          %v2807 = vadd.f32 %v2805, %v2806
          %v2808 = vsel %vm2170, %v2747, 0.0
          %v2809 = vadd.f32 %v2807, %v2808
          %v2810 = vsel %vm2170, %v2748, 0.0
          %v2811 = vadd.f32 %v2809, %v2810
          %2812 = vadd.xlane.f32.xlu0 %v2811
          %v2813 = vpop.xlane.xlu0 %2812
          %v2814 = vrot.slane %v2813, 4
          %v2815 = vadd.f32 %v2813, %v2814
          %v2816 = vrot.slane %v2815, 2
          %v2817 = vadd.f32 %v2815, %v2816
          %v2818 = vrot.slane %v2817, 1
          %v2819 = vadd.f32 %v2817, %v2818
          %s2820 = vtos %v2819
          %s2821 = ssub.f32 0.0, %s2820
          %v2822 = vadd.f32 %v2353, 1e-10
          %v2823 = vadd.f32 %v2354, 1e-10
          %v2824 = vadd.f32 %v2355, 1e-10
          %v2825 = vadd.f32 %v2356, 1e-10
          %v2826 = vadd.f32 %v2357, 1e-10
          %v2827 = vadd.f32 %v2358, 1e-10
          %v2828 = vadd.f32 %v2359, 1e-10
          %v2829 = vadd.f32 %v2360, 1e-10
          %v2830 = vadd.f32 %v2361, 1e-10
          %v2831 = vadd.f32 %v2362, 1e-10
          %v2832 = vadd.f32 %v2363, 1e-10
          %v2833 = vadd.f32 %v2364, 1e-10
          %v2834 = vadd.f32 %v2365, 1e-10
          %v2835 = vadd.f32 %v2366, 1e-10
          %v2836 = vadd.f32 %v2367, 1e-10
          %v2837 = vadd.f32 %v2368, 1e-10
          %v2838 = vadd.f32 %v2369, 1e-10
          %v2839 = vadd.f32 %v2370, 1e-10
          %v2840 = vadd.f32 %v2371, 1e-10
          %v2841 = vadd.f32 %v2372, 1e-10
          %v2842 = vadd.f32 %v2373, 1e-10
          %v2843 = vadd.f32 %v2374, 1e-10
          %v2844 = vadd.f32 %v2375, 1e-10
          %v2845 = vadd.f32 %v2376, 1e-10
          %v2846 = vadd.f32 %v2377, 1e-10
          %v2847 = vadd.f32 %v2378, 1e-10
          %v2848 = vadd.f32 %v2379, 1e-10
          %v2849 = vadd.f32 %v2380, 1e-10
          %v2850 = vadd.f32 %v2381, 1e-10
          %v2851 = vadd.f32 %v2382, 1e-10
          %v2852 = vadd.f32 %v2383, 1e-10
          %v2853 = vadd.f32 %v2384, 1e-10
          %v2854 = vlog2.pop %v2822
          %v2855 = vmul.f32 %v2854, 0.6931472
          %v2856 = vlog2.pop %v2823
          %v2857 = vmul.f32 %v2856, 0.6931472
          %v2858 = vlog2.pop %v2824
          %v2859 = vmul.f32 %v2858, 0.6931472
          %v2860 = vlog2.pop %v2825
          %v2861 = vmul.f32 %v2860, 0.6931472
          %v2862 = vlog2.pop %v2826
          %v2863 = vmul.f32 %v2862, 0.6931472
          %v2864 = vlog2.pop %v2827
          %v2865 = vmul.f32 %v2864, 0.6931472
          %v2866 = vlog2.pop %v2828
          %v2867 = vmul.f32 %v2866, 0.6931472
          %v2868 = vlog2.pop %v2829
          %v2869 = vmul.f32 %v2868, 0.6931472
          %v2870 = vlog2.pop %v2830
          %v2871 = vmul.f32 %v2870, 0.6931472
          %v2872 = vlog2.pop %v2831
          %v2873 = vmul.f32 %v2872, 0.6931472
          %v2874 = vlog2.pop %v2832
          %v2875 = vmul.f32 %v2874, 0.6931472
          %v2876 = vlog2.pop %v2833
          %v2877 = vmul.f32 %v2876, 0.6931472
          %v2878 = vlog2.pop %v2834
          %v2879 = vmul.f32 %v2878, 0.6931472
          %v2880 = vlog2.pop %v2835
          %v2881 = vmul.f32 %v2880, 0.6931472
          %v2882 = vlog2.pop %v2836
          %v2883 = vmul.f32 %v2882, 0.6931472
          %v2884 = vlog2.pop %v2837
          %v2885 = vmul.f32 %v2884, 0.6931472
          %v2886 = vlog2.pop %v2838
          %v2887 = vmul.f32 %v2886, 0.6931472
          %v2888 = vlog2.pop %v2839
          %v2889 = vmul.f32 %v2888, 0.6931472
          %v2890 = vlog2.pop %v2840
          %v2891 = vmul.f32 %v2890, 0.6931472
          %v2892 = vlog2.pop %v2841
          %v2893 = vmul.f32 %v2892, 0.6931472
          %v2894 = vlog2.pop %v2842
          %v2895 = vmul.f32 %v2894, 0.6931472
          %v2896 = vlog2.pop %v2843
          %v2897 = vmul.f32 %v2896, 0.6931472
          %v2898 = vlog2.pop %v2844
          %v2899 = vmul.f32 %v2898, 0.6931472
          %v2900 = vlog2.pop %v2845
          %v2901 = vmul.f32 %v2900, 0.6931472
          %v2902 = vlog2.pop %v2846
          %v2903 = vmul.f32 %v2902, 0.6931472
          %v2904 = vlog2.pop %v2847
          %v2905 = vmul.f32 %v2904, 0.6931472
          %v2906 = vlog2.pop %v2848
          %v2907 = vmul.f32 %v2906, 0.6931472
          %v2908 = vlog2.pop %v2849
          %v2909 = vmul.f32 %v2908, 0.6931472
          %v2910 = vlog2.pop %v2850
          %v2911 = vmul.f32 %v2910, 0.6931472
          %v2912 = vlog2.pop %v2851
          %v2913 = vmul.f32 %v2912, 0.6931472
          %v2914 = vlog2.pop %v2852
          %v2915 = vmul.f32 %v2914, 0.6931472
          %v2916 = vlog2.pop %v2853
          %v2917 = vmul.f32 %v2916, 0.6931472
          %v2918 = vmul.f32 %v2855, %v2684
          %v2919 = vmul.f32 %v2857, %v2684
          %v2920 = vmul.f32 %v2859, %v2684
          %v2921 = vmul.f32 %v2861, %v2684
          %v2922 = vmul.f32 %v2863, %v2684
          %v2923 = vmul.f32 %v2865, %v2684
          %v2924 = vmul.f32 %v2867, %v2684
          %v2925 = vmul.f32 %v2869, %v2684
          %v2926 = vmul.f32 %v2871, %v2684
          %v2927 = vmul.f32 %v2873, %v2684
          %v2928 = vmul.f32 %v2875, %v2684
          %v2929 = vmul.f32 %v2877, %v2684
          %v2930 = vmul.f32 %v2879, %v2684
          %v2931 = vmul.f32 %v2881, %v2684
          %v2932 = vmul.f32 %v2883, %v2684
          %v2933 = vmul.f32 %v2885, %v2684
          %v2934 = vmul.f32 %v2887, %v2684
          %v2935 = vmul.f32 %v2889, %v2684
          %v2936 = vmul.f32 %v2891, %v2684
          %v2937 = vmul.f32 %v2893, %v2684
          %v2938 = vmul.f32 %v2895, %v2684
          %v2939 = vmul.f32 %v2897, %v2684
          %v2940 = vmul.f32 %v2899, %v2684
          %v2941 = vmul.f32 %v2901, %v2684
          %v2942 = vmul.f32 %v2903, %v2684
          %v2943 = vmul.f32 %v2905, %v2684
          %v2944 = vmul.f32 %v2907, %v2684
          %v2945 = vmul.f32 %v2909, %v2684
          %v2946 = vmul.f32 %v2911, %v2684
          %v2947 = vmul.f32 %v2913, %v2684
          %v2948 = vmul.f32 %v2915, %v2684
          %v2949 = vmul.f32 %v2917, %v2684
          %v2950 = vmul.f32 %v2353, %v2918
          %v2951 = vmul.f32 %v2354, %v2919
          %v2952 = vmul.f32 %v2355, %v2920
          %v2953 = vmul.f32 %v2356, %v2921
          %v2954 = vmul.f32 %v2357, %v2922
          %v2955 = vmul.f32 %v2358, %v2923
          %v2956 = vmul.f32 %v2359, %v2924
          %v2957 = vmul.f32 %v2360, %v2925
          %v2958 = vmul.f32 %v2361, %v2926
          %v2959 = vmul.f32 %v2362, %v2927
          %v2960 = vmul.f32 %v2363, %v2928
          %v2961 = vmul.f32 %v2364, %v2929
          %v2962 = vmul.f32 %v2365, %v2930
          %v2963 = vmul.f32 %v2366, %v2931
          %v2964 = vmul.f32 %v2367, %v2932
          %v2965 = vmul.f32 %v2368, %v2933
          %v2966 = vmul.f32 %v2369, %v2934
          %v2967 = vmul.f32 %v2370, %v2935
          %v2968 = vmul.f32 %v2371, %v2936
          %v2969 = vmul.f32 %v2372, %v2937
          %v2970 = vmul.f32 %v2373, %v2938
          %v2971 = vmul.f32 %v2374, %v2939
          %v2972 = vmul.f32 %v2375, %v2940
          %v2973 = vmul.f32 %v2376, %v2941
          %v2974 = vmul.f32 %v2377, %v2942
          %v2975 = vmul.f32 %v2378, %v2943
          %v2976 = vmul.f32 %v2379, %v2944
          %v2977 = vmul.f32 %v2380, %v2945
          %v2978 = vmul.f32 %v2381, %v2946
          %v2979 = vmul.f32 %v2382, %v2947
          %v2980 = vmul.f32 %v2383, %v2948
          %v2981 = vmul.f32 %v2384, %v2949
          %v2982 = vsel %vm2170, %v2950, 0.0
          %v2983 = vsel %vm2170, %v2951, 0.0
          %v2984 = vadd.f32 %v2982, %v2983
          %v2985 = vsel %vm2170, %v2952, 0.0
          %v2986 = vadd.f32 %v2984, %v2985
          %v2987 = vsel %vm2170, %v2953, 0.0
          %v2988 = vadd.f32 %v2986, %v2987
          %v2989 = vsel %vm2170, %v2954, 0.0
          %v2990 = vadd.f32 %v2988, %v2989
          %v2991 = vsel %vm2170, %v2955, 0.0
          %v2992 = vadd.f32 %v2990, %v2991
          %v2993 = vsel %vm2170, %v2956, 0.0
          %v2994 = vadd.f32 %v2992, %v2993
          %v2995 = vsel %vm2170, %v2957, 0.0
          %v2996 = vadd.f32 %v2994, %v2995
          %v2997 = vsel %vm2170, %v2958, 0.0
          %v2998 = vadd.f32 %v2996, %v2997
          %v2999 = vsel %vm2170, %v2959, 0.0
          %v3000 = vadd.f32 %v2998, %v2999
          %v3001 = vsel %vm2170, %v2960, 0.0
          %v3002 = vadd.f32 %v3000, %v3001
          %v3003 = vsel %vm2170, %v2961, 0.0
          %v3004 = vadd.f32 %v3002, %v3003
          %v3005 = vsel %vm2170, %v2962, 0.0
          %v3006 = vadd.f32 %v3004, %v3005
          %v3007 = vsel %vm2170, %v2963, 0.0
          %v3008 = vadd.f32 %v3006, %v3007
          %v3009 = vsel %vm2170, %v2964, 0.0
          %v3010 = vadd.f32 %v3008, %v3009
          %v3011 = vsel %vm2170, %v2965, 0.0
          %v3012 = vadd.f32 %v3010, %v3011
          %v3013 = vsel %vm2170, %v2966, 0.0
          %v3014 = vadd.f32 %v3012, %v3013
          %v3015 = vsel %vm2170, %v2967, 0.0
          %v3016 = vadd.f32 %v3014, %v3015
          %v3017 = vsel %vm2170, %v2968, 0.0
          %v3018 = vadd.f32 %v3016, %v3017
          %v3019 = vsel %vm2170, %v2969, 0.0
          %v3020 = vadd.f32 %v3018, %v3019
          %v3021 = vsel %vm2170, %v2970, 0.0
          %v3022 = vadd.f32 %v3020, %v3021
          %v3023 = vsel %vm2170, %v2971, 0.0
          %v3024 = vadd.f32 %v3022, %v3023
          %v3025 = vsel %vm2170, %v2972, 0.0
          %v3026 = vadd.f32 %v3024, %v3025
          %v3027 = vsel %vm2170, %v2973, 0.0
          %v3028 = vadd.f32 %v3026, %v3027
          %v3029 = vsel %vm2170, %v2974, 0.0
          %v3030 = vadd.f32 %v3028, %v3029
          %v3031 = vsel %vm2170, %v2975, 0.0
          %v3032 = vadd.f32 %v3030, %v3031
          %v3033 = vsel %vm2170, %v2976, 0.0
          %v3034 = vadd.f32 %v3032, %v3033
          %v3035 = vsel %vm2170, %v2977, 0.0
          %v3036 = vadd.f32 %v3034, %v3035
          %v3037 = vsel %vm2170, %v2978, 0.0
          %v3038 = vadd.f32 %v3036, %v3037
          %v3039 = vsel %vm2170, %v2979, 0.0
          %v3040 = vadd.f32 %v3038, %v3039
          %v3041 = vsel %vm2170, %v2980, 0.0
          %v3042 = vadd.f32 %v3040, %v3041
          %v3043 = vsel %vm2170, %v2981, 0.0
          %v3044 = vadd.f32 %v3042, %v3043
          %3045 = vadd.xlane.f32.xlu0 %v3044
          %v3046 = vpop.xlane.xlu0 %3045
          %v3047 = vrot.slane %v3046, 4
          %v3048 = vadd.f32 %v3046, %v3047
          %v3049 = vrot.slane %v3048, 2
          %v3050 = vadd.f32 %v3048, %v3049
          %v3051 = vrot.slane %v3050, 1
          %v3052 = vadd.f32 %v3050, %v3051
          %s3053 = vtos %v3052
          %s3054 = ssub.f32 0.0, %s3053
          %v3055 = vadd.f32 %v2524, 1e-10
          %v3056 = vadd.f32 %v2525, 1e-10
          %v3057 = vadd.f32 %v2526, 1e-10
          %v3058 = vadd.f32 %v2527, 1e-10
          %v3059 = vadd.f32 %v2528, 1e-10
          %v3060 = vadd.f32 %v2529, 1e-10
          %v3061 = vadd.f32 %v2530, 1e-10
          %v3062 = vadd.f32 %v2531, 1e-10
          %v3063 = vadd.f32 %v2532, 1e-10
          %v3064 = vadd.f32 %v2533, 1e-10
          %v3065 = vadd.f32 %v2534, 1e-10
          %v3066 = vadd.f32 %v2535, 1e-10
          %v3067 = vadd.f32 %v2536, 1e-10
          %v3068 = vadd.f32 %v2537, 1e-10
          %v3069 = vadd.f32 %v2538, 1e-10
          %v3070 = vadd.f32 %v2539, 1e-10
          %v3071 = vadd.f32 %v2540, 1e-10
          %v3072 = vadd.f32 %v2541, 1e-10
          %v3073 = vadd.f32 %v2542, 1e-10
          %v3074 = vadd.f32 %v2543, 1e-10
          %v3075 = vadd.f32 %v2544, 1e-10
          %v3076 = vadd.f32 %v2545, 1e-10
          %v3077 = vadd.f32 %v2546, 1e-10
          %v3078 = vadd.f32 %v2547, 1e-10
          %v3079 = vadd.f32 %v2548, 1e-10
          %v3080 = vadd.f32 %v2549, 1e-10
          %v3081 = vadd.f32 %v2550, 1e-10
          %v3082 = vadd.f32 %v2551, 1e-10
          %v3083 = vadd.f32 %v2552, 1e-10
          %v3084 = vadd.f32 %v2553, 1e-10
          %v3085 = vadd.f32 %v2554, 1e-10
          %v3086 = vadd.f32 %v2555, 1e-10
          %v3087 = vadd.f32 %v2556, 1e-10
          %v3088 = vadd.f32 %v2557, 1e-10
          %v3089 = vadd.f32 %v2558, 1e-10
          %v3090 = vadd.f32 %v2559, 1e-10
          %v3091 = vadd.f32 %v2560, 1e-10
          %v3092 = vadd.f32 %v2561, 1e-10
          %v3093 = vadd.f32 %v2562, 1e-10
          %v3094 = vadd.f32 %v2563, 1e-10
          %v3095 = vadd.f32 %v2564, 1e-10
          %v3096 = vadd.f32 %v2565, 1e-10
          %v3097 = vadd.f32 %v2566, 1e-10
          %v3098 = vadd.f32 %v2567, 1e-10
          %v3099 = vadd.f32 %v2568, 1e-10
          %v3100 = vadd.f32 %v2569, 1e-10
          %v3101 = vadd.f32 %v2570, 1e-10
          %v3102 = vadd.f32 %v2571, 1e-10
          %v3103 = vadd.f32 %v2572, 1e-10
          %v3104 = vadd.f32 %v2573, 1e-10
          %v3105 = vadd.f32 %v2574, 1e-10
          %v3106 = vadd.f32 %v2575, 1e-10
          %v3107 = vadd.f32 %v2576, 1e-10
          %v3108 = vadd.f32 %v2577, 1e-10
          %v3109 = vadd.f32 %v2578, 1e-10
          %v3110 = vadd.f32 %v2579, 1e-10
          %v3111 = vadd.f32 %v2580, 1e-10
          %v3112 = vadd.f32 %v2581, 1e-10
          %v3113 = vadd.f32 %v2582, 1e-10
          %v3114 = vadd.f32 %v2583, 1e-10
          %v3115 = vadd.f32 %v2584, 1e-10
          %v3116 = vadd.f32 %v2585, 1e-10
          %v3117 = vadd.f32 %v2586, 1e-10
          %v3118 = vadd.f32 %v2587, 1e-10
          %v3119 = vlog2.pop %v3055
          %v3120 = vmul.f32 %v3119, 0.6931472
          %v3121 = vlog2.pop %v3056
          %v3122 = vmul.f32 %v3121, 0.6931472
          %v3123 = vlog2.pop %v3057
          %v3124 = vmul.f32 %v3123, 0.6931472
          %v3125 = vlog2.pop %v3058
          %v3126 = vmul.f32 %v3125, 0.6931472
          %v3127 = vlog2.pop %v3059
          %v3128 = vmul.f32 %v3127, 0.6931472
          %v3129 = vlog2.pop %v3060
          %v3130 = vmul.f32 %v3129, 0.6931472
          %v3131 = vlog2.pop %v3061
          %v3132 = vmul.f32 %v3131, 0.6931472
          %v3133 = vlog2.pop %v3062
          %v3134 = vmul.f32 %v3133, 0.6931472
          %v3135 = vlog2.pop %v3063
          %v3136 = vmul.f32 %v3135, 0.6931472
          %v3137 = vlog2.pop %v3064
          %v3138 = vmul.f32 %v3137, 0.6931472
          %v3139 = vlog2.pop %v3065
          %v3140 = vmul.f32 %v3139, 0.6931472
          %v3141 = vlog2.pop %v3066
          %v3142 = vmul.f32 %v3141, 0.6931472
          %v3143 = vlog2.pop %v3067
          %v3144 = vmul.f32 %v3143, 0.6931472
          %v3145 = vlog2.pop %v3068
          %v3146 = vmul.f32 %v3145, 0.6931472
          %v3147 = vlog2.pop %v3069
          %v3148 = vmul.f32 %v3147, 0.6931472
          %v3149 = vlog2.pop %v3070
          %v3150 = vmul.f32 %v3149, 0.6931472
          %v3151 = vlog2.pop %v3071
          %v3152 = vmul.f32 %v3151, 0.6931472
          %v3153 = vlog2.pop %v3072
          %v3154 = vmul.f32 %v3153, 0.6931472
          %v3155 = vlog2.pop %v3073
          %v3156 = vmul.f32 %v3155, 0.6931472
          %v3157 = vlog2.pop %v3074
          %v3158 = vmul.f32 %v3157, 0.6931472
          %v3159 = vlog2.pop %v3075
          %v3160 = vmul.f32 %v3159, 0.6931472
          %v3161 = vlog2.pop %v3076
          %v3162 = vmul.f32 %v3161, 0.6931472
          %v3163 = vlog2.pop %v3077
          %v3164 = vmul.f32 %v3163, 0.6931472
          %v3165 = vlog2.pop %v3078
          %v3166 = vmul.f32 %v3165, 0.6931472
          %v3167 = vlog2.pop %v3079
          %v3168 = vmul.f32 %v3167, 0.6931472
          %v3169 = vlog2.pop %v3080
          %v3170 = vmul.f32 %v3169, 0.6931472
          %v3171 = vlog2.pop %v3081
          %v3172 = vmul.f32 %v3171, 0.6931472
          %v3173 = vlog2.pop %v3082
          %v3174 = vmul.f32 %v3173, 0.6931472
          %v3175 = vlog2.pop %v3083
          %v3176 = vmul.f32 %v3175, 0.6931472
          %v3177 = vlog2.pop %v3084
          %v3178 = vmul.f32 %v3177, 0.6931472
          %v3179 = vlog2.pop %v3085
          %v3180 = vmul.f32 %v3179, 0.6931472
          %v3181 = vlog2.pop %v3086
          %v3182 = vmul.f32 %v3181, 0.6931472
          %v3183 = vlog2.pop %v3087
          %v3184 = vmul.f32 %v3183, 0.6931472
          %v3185 = vlog2.pop %v3088
          %v3186 = vmul.f32 %v3185, 0.6931472
          %v3187 = vlog2.pop %v3089
          %v3188 = vmul.f32 %v3187, 0.6931472
          %v3189 = vlog2.pop %v3090
          %v3190 = vmul.f32 %v3189, 0.6931472
          %v3191 = vlog2.pop %v3091
          %v3192 = vmul.f32 %v3191, 0.6931472
          %v3193 = vlog2.pop %v3092
          %v3194 = vmul.f32 %v3193, 0.6931472
          %v3195 = vlog2.pop %v3093
          %v3196 = vmul.f32 %v3195, 0.6931472
          %v3197 = vlog2.pop %v3094
          %v3198 = vmul.f32 %v3197, 0.6931472
          %v3199 = vlog2.pop %v3095
          %v3200 = vmul.f32 %v3199, 0.6931472
          %v3201 = vlog2.pop %v3096
          %v3202 = vmul.f32 %v3201, 0.6931472
          %v3203 = vlog2.pop %v3097
          %v3204 = vmul.f32 %v3203, 0.6931472
          %v3205 = vlog2.pop %v3098
          %v3206 = vmul.f32 %v3205, 0.6931472
          %v3207 = vlog2.pop %v3099
          %v3208 = vmul.f32 %v3207, 0.6931472
          %v3209 = vlog2.pop %v3100
          %v3210 = vmul.f32 %v3209, 0.6931472
          %v3211 = vlog2.pop %v3101
          %v3212 = vmul.f32 %v3211, 0.6931472
          %v3213 = vlog2.pop %v3102
          %v3214 = vmul.f32 %v3213, 0.6931472
          %v3215 = vlog2.pop %v3103
          %v3216 = vmul.f32 %v3215, 0.6931472
          %v3217 = vlog2.pop %v3104
          %v3218 = vmul.f32 %v3217, 0.6931472
          %v3219 = vlog2.pop %v3105
          %v3220 = vmul.f32 %v3219, 0.6931472
          %v3221 = vlog2.pop %v3106
          %v3222 = vmul.f32 %v3221, 0.6931472
          %v3223 = vlog2.pop %v3107
          %v3224 = vmul.f32 %v3223, 0.6931472
          %v3225 = vlog2.pop %v3108
          %v3226 = vmul.f32 %v3225, 0.6931472
          %v3227 = vlog2.pop %v3109
          %v3228 = vmul.f32 %v3227, 0.6931472
          %v3229 = vlog2.pop %v3110
          %v3230 = vmul.f32 %v3229, 0.6931472
          %v3231 = vlog2.pop %v3111
          %v3232 = vmul.f32 %v3231, 0.6931472
          %v3233 = vlog2.pop %v3112
          %v3234 = vmul.f32 %v3233, 0.6931472
          %v3235 = vlog2.pop %v3113
          %v3236 = vmul.f32 %v3235, 0.6931472
          %v3237 = vlog2.pop %v3114
          %v3238 = vmul.f32 %v3237, 0.6931472
          %v3239 = vlog2.pop %v3115
          %v3240 = vmul.f32 %v3239, 0.6931472
          %v3241 = vlog2.pop %v3116
          %v3242 = vmul.f32 %v3241, 0.6931472
          %v3243 = vlog2.pop %v3117
          %v3244 = vmul.f32 %v3243, 0.6931472
          %v3245 = vlog2.pop %v3118
          %v3246 = vmul.f32 %v3245, 0.6931472
          %v3247 = vmul.f32 %v3120, %v2684
          %v3248 = vmul.f32 %v3122, %v2684
          %v3249 = vmul.f32 %v3124, %v2684
          %v3250 = vmul.f32 %v3126, %v2684
          %v3251 = vmul.f32 %v3128, %v2684
          %v3252 = vmul.f32 %v3130, %v2684
          %v3253 = vmul.f32 %v3132, %v2684
          %v3254 = vmul.f32 %v3134, %v2684
          %v3255 = vmul.f32 %v3136, %v2684
          %v3256 = vmul.f32 %v3138, %v2684
          %v3257 = vmul.f32 %v3140, %v2684
          %v3258 = vmul.f32 %v3142, %v2684
          %v3259 = vmul.f32 %v3144, %v2684
          %v3260 = vmul.f32 %v3146, %v2684
          %v3261 = vmul.f32 %v3148, %v2684
          %v3262 = vmul.f32 %v3150, %v2684
          %v3263 = vmul.f32 %v3152, %v2684
          %v3264 = vmul.f32 %v3154, %v2684
          %v3265 = vmul.f32 %v3156, %v2684
          %v3266 = vmul.f32 %v3158, %v2684
          %v3267 = vmul.f32 %v3160, %v2684
          %v3268 = vmul.f32 %v3162, %v2684
          %v3269 = vmul.f32 %v3164, %v2684
          %v3270 = vmul.f32 %v3166, %v2684
          %v3271 = vmul.f32 %v3168, %v2684
          %v3272 = vmul.f32 %v3170, %v2684
          %v3273 = vmul.f32 %v3172, %v2684
          %v3274 = vmul.f32 %v3174, %v2684
          %v3275 = vmul.f32 %v3176, %v2684
          %v3276 = vmul.f32 %v3178, %v2684
          %v3277 = vmul.f32 %v3180, %v2684
          %v3278 = vmul.f32 %v3182, %v2684
          %v3279 = vmul.f32 %v3184, %v2684
          %v3280 = vmul.f32 %v3186, %v2684
          %v3281 = vmul.f32 %v3188, %v2684
          %v3282 = vmul.f32 %v3190, %v2684
          %v3283 = vmul.f32 %v3192, %v2684
          %v3284 = vmul.f32 %v3194, %v2684
          %v3285 = vmul.f32 %v3196, %v2684
          %v3286 = vmul.f32 %v3198, %v2684
          %v3287 = vmul.f32 %v3200, %v2684
          %v3288 = vmul.f32 %v3202, %v2684
          %v3289 = vmul.f32 %v3204, %v2684
          %v3290 = vmul.f32 %v3206, %v2684
          %v3291 = vmul.f32 %v3208, %v2684
          %v3292 = vmul.f32 %v3210, %v2684
          %v3293 = vmul.f32 %v3212, %v2684
          %v3294 = vmul.f32 %v3214, %v2684
          %v3295 = vmul.f32 %v3216, %v2684
          %v3296 = vmul.f32 %v3218, %v2684
          %v3297 = vmul.f32 %v3220, %v2684
          %v3298 = vmul.f32 %v3222, %v2684
          %v3299 = vmul.f32 %v3224, %v2684
          %v3300 = vmul.f32 %v3226, %v2684
          %v3301 = vmul.f32 %v3228, %v2684
          %v3302 = vmul.f32 %v3230, %v2684
          %v3303 = vmul.f32 %v3232, %v2684
          %v3304 = vmul.f32 %v3234, %v2684
          %v3305 = vmul.f32 %v3236, %v2684
          %v3306 = vmul.f32 %v3238, %v2684
          %v3307 = vmul.f32 %v3240, %v2684
          %v3308 = vmul.f32 %v3242, %v2684
          %v3309 = vmul.f32 %v3244, %v2684
          %v3310 = vmul.f32 %v3246, %v2684
          %v3311 = vmul.f32 %v2524, %v3247
          %v3312 = vmul.f32 %v2525, %v3248
          %v3313 = vmul.f32 %v2526, %v3249
          %v3314 = vmul.f32 %v2527, %v3250
          %v3315 = vmul.f32 %v2528, %v3251
          %v3316 = vmul.f32 %v2529, %v3252
          %v3317 = vmul.f32 %v2530, %v3253
          %v3318 = vmul.f32 %v2531, %v3254
          %v3319 = vmul.f32 %v2532, %v3255
          %v3320 = vmul.f32 %v2533, %v3256
          %v3321 = vmul.f32 %v2534, %v3257
          %v3322 = vmul.f32 %v2535, %v3258
          %v3323 = vmul.f32 %v2536, %v3259
          %v3324 = vmul.f32 %v2537, %v3260
          %v3325 = vmul.f32 %v2538, %v3261
          %v3326 = vmul.f32 %v2539, %v3262
          %v3327 = vmul.f32 %v2540, %v3263
          %v3328 = vmul.f32 %v2541, %v3264
          %v3329 = vmul.f32 %v2542, %v3265
          %v3330 = vmul.f32 %v2543, %v3266
          %v3331 = vmul.f32 %v2544, %v3267
          %v3332 = vmul.f32 %v2545, %v3268
          %v3333 = vmul.f32 %v2546, %v3269
          %v3334 = vmul.f32 %v2547, %v3270
          %v3335 = vmul.f32 %v2548, %v3271
          %v3336 = vmul.f32 %v2549, %v3272
          %v3337 = vmul.f32 %v2550, %v3273
          %v3338 = vmul.f32 %v2551, %v3274
          %v3339 = vmul.f32 %v2552, %v3275
          %v3340 = vmul.f32 %v2553, %v3276
          %v3341 = vmul.f32 %v2554, %v3277
          %v3342 = vmul.f32 %v2555, %v3278
          %v3343 = vmul.f32 %v2556, %v3279
          %v3344 = vmul.f32 %v2557, %v3280
          %v3345 = vmul.f32 %v2558, %v3281
          %v3346 = vmul.f32 %v2559, %v3282
          %v3347 = vmul.f32 %v2560, %v3283
          %v3348 = vmul.f32 %v2561, %v3284
          %v3349 = vmul.f32 %v2562, %v3285
          %v3350 = vmul.f32 %v2563, %v3286
          %v3351 = vmul.f32 %v2564, %v3287
          %v3352 = vmul.f32 %v2565, %v3288
          %v3353 = vmul.f32 %v2566, %v3289
          %v3354 = vmul.f32 %v2567, %v3290
          %v3355 = vmul.f32 %v2568, %v3291
          %v3356 = vmul.f32 %v2569, %v3292
          %v3357 = vmul.f32 %v2570, %v3293
          %v3358 = vmul.f32 %v2571, %v3294
          %v3359 = vmul.f32 %v2572, %v3295
          %v3360 = vmul.f32 %v2573, %v3296
          %v3361 = vmul.f32 %v2574, %v3297
          %v3362 = vmul.f32 %v2575, %v3298
          %v3363 = vmul.f32 %v2576, %v3299
          %v3364 = vmul.f32 %v2577, %v3300
          %v3365 = vmul.f32 %v2578, %v3301
          %v3366 = vmul.f32 %v2579, %v3302
          %v3367 = vmul.f32 %v2580, %v3303
          %v3368 = vmul.f32 %v2581, %v3304
          %v3369 = vmul.f32 %v2582, %v3305
          %v3370 = vmul.f32 %v2583, %v3306
          %v3371 = vmul.f32 %v2584, %v3307
          %v3372 = vmul.f32 %v2585, %v3308
          %v3373 = vmul.f32 %v2586, %v3309
          %v3374 = vmul.f32 %v2587, %v3310
          %v3375 = vadd.f32 %v3311, %v3312
          %v3376 = vadd.f32 %v3375, %v3313
          %v3377 = vadd.f32 %v3376, %v3314
          %v3378 = vadd.f32 %v3377, %v3315
          %v3379 = vadd.f32 %v3378, %v3316
          %v3380 = vadd.f32 %v3379, %v3317
          %v3381 = vadd.f32 %v3380, %v3318
          %v3382 = vadd.f32 %v3381, %v3319
          %v3383 = vadd.f32 %v3382, %v3320
          %v3384 = vadd.f32 %v3383, %v3321
          %v3385 = vadd.f32 %v3384, %v3322
          %v3386 = vadd.f32 %v3385, %v3323
          %v3387 = vadd.f32 %v3386, %v3324
          %v3388 = vadd.f32 %v3387, %v3325
          %v3389 = vadd.f32 %v3388, %v3326
          %v3390 = vadd.f32 %v3389, %v3327
          %v3391 = vadd.f32 %v3390, %v3328
          %v3392 = vadd.f32 %v3391, %v3329
          %v3393 = vadd.f32 %v3392, %v3330
          %v3394 = vadd.f32 %v3393, %v3331
          %v3395 = vadd.f32 %v3394, %v3332
          %v3396 = vadd.f32 %v3395, %v3333
          %v3397 = vadd.f32 %v3396, %v3334
          %v3398 = vadd.f32 %v3397, %v3335
          %v3399 = vadd.f32 %v3398, %v3336
          %v3400 = vadd.f32 %v3399, %v3337
          %v3401 = vadd.f32 %v3400, %v3338
          %v3402 = vadd.f32 %v3401, %v3339
          %v3403 = vadd.f32 %v3402, %v3340
          %v3404 = vadd.f32 %v3403, %v3341
          %v3405 = vadd.f32 %v3404, %v3342
          %v3406 = vadd.f32 %v3405, %v3343
          %v3407 = vadd.f32 %v3406, %v3344
          %v3408 = vadd.f32 %v3407, %v3345
          %v3409 = vadd.f32 %v3408, %v3346
          %v3410 = vadd.f32 %v3409, %v3347
          %v3411 = vadd.f32 %v3410, %v3348
          %v3412 = vadd.f32 %v3411, %v3349
          %v3413 = vadd.f32 %v3412, %v3350
          %v3414 = vadd.f32 %v3413, %v3351
          %v3415 = vadd.f32 %v3414, %v3352
          %v3416 = vadd.f32 %v3415, %v3353
          %v3417 = vadd.f32 %v3416, %v3354
          %v3418 = vadd.f32 %v3417, %v3355
          %v3419 = vadd.f32 %v3418, %v3356
          %v3420 = vadd.f32 %v3419, %v3357
          %v3421 = vadd.f32 %v3420, %v3358
          %v3422 = vadd.f32 %v3421, %v3359
          %v3423 = vadd.f32 %v3422, %v3360
          %v3424 = vadd.f32 %v3423, %v3361
          %v3425 = vadd.f32 %v3424, %v3362
          %v3426 = vadd.f32 %v3425, %v3363
          %v3427 = vadd.f32 %v3426, %v3364
          %v3428 = vadd.f32 %v3427, %v3365
          %v3429 = vadd.f32 %v3428, %v3366
          %v3430 = vadd.f32 %v3429, %v3367
          %v3431 = vadd.f32 %v3430, %v3368
          %v3432 = vadd.f32 %v3431, %v3369
          %v3433 = vadd.f32 %v3432, %v3370
          %v3434 = vadd.f32 %v3433, %v3371
          %v3435 = vadd.f32 %v3434, %v3372
          %v3436 = vadd.f32 %v3435, %v3373
          %v3437 = vadd.f32 %v3436, %v3374
          %3438 = vadd.xlane.f32.xlu0 %v3437
          %v3439 = vpop.xlane.xlu0 %3438
          %v3440 = vrot.slane %v3439, 4
          %v3441 = vadd.f32 %v3439, %v3440
          %v3442 = vrot.slane %v3441, 2
          %v3443 = vadd.f32 %v3441, %v3442
          %v3444 = vrot.slane %v3443, 1
          %v3445 = vadd.f32 %v3443, %v3444
          %s3446 = vtos %v3445
          %s3447 = ssub.f32 0.0, %s3446
          %s3448 = sadd.f32 %s2821, %s3054
          %s3449 = ssub.f32 %s3448, %s3447
          %s3450 = smul.f32 %s3449, 2.0
          %v3451 = vstv %s3448
          %v3452 = vrcp.pop %v3451
          %s3453 = vtos %v3452
          %s3454 = smul.f32 %s3450, %s3453
          %v3455 = vstv %s3454
          %3456 = vst [vmem:[%s216] sm:$0x1] %v3455
        $region44: #{tpu_custom_call.1} parent=27 // pred_fallthru
          _
        %s3457 = sand.u32 %s98, 1
        %s3458 = scalar_lea.sflag [#allocation7], %s3457
        %s3459 = sand.u32 %s98, 1
        %s3460 = scalar_lea.vmem [#allocation10], %s3459
        // Predicated region
        $region45: #{tpu_custom_call.1} parent=27 // pred_check
          %p3461 = pneg %p108
        $region46: #{tpu_custom_call.1} parent=27 // pred_check_branch
          %3463 = sbr.rel (%p3461) target = $region48
        $region47: #{tpu_custom_call.1} parent=27 // pred_region
          %s3465 = ssub.s32 16, 16
          %3466 = vsyncadd %s3458, %s3465
          %s3467 = smul.addr %s26, 16
          %s3468 = scalar_lea.hbm %s2, %s3467
          %s3470 = sshll.u32 %s3460, 4
          %s3471 = int_to_ptr.vmem [resolvable:$true] %s3470
          %3473 = dma.vmem_to_hbm [thread:$0]  %s3471, 16, %s3468, %s3458
        $region48: #{tpu_custom_call.1} parent=27 // pred_fallthru
          _
      $region28: #{tpu_custom_call.1} parent=5 // pred_fallthru
        _
      %p3474 = scmp.le.s32.totalorder 2, %s17
      // Predicated region
      $region49: #{tpu_custom_call.1} parent=5 // pred_check
        %p3475 = pneg %p3474
      $region50: #{tpu_custom_call.1} parent=5 // pred_check_branch
        %3477 = sbr.rel (%p3475) target = $region52
      $region51: #{tpu_custom_call.1} parent=5 // pred_region
        %s3478 = ssub.s32 %s17, 2
        // Predicated region
        $region53: #{tpu_custom_call.1} parent=51 // pred_check
          %p3479 = pneg %p114
        $region54: #{tpu_custom_call.1} parent=51 // pred_check_branch
          %3481 = sbr.rel (%p3479) target = $region56
        $region55: #{tpu_custom_call.1} parent=51 // pred_region
          %s3482 = sand.u32 %s99, 1
          %s3483 = scalar_lea.sflag [#allocation7], %s3482
          %s3484 = sand.u32 %s99, 1
          %s3485 = scalar_lea.vmem [#allocation10], %s3484
          %3486 = dma.done %s3483, 16
        $region56: #{tpu_custom_call.1} parent=51 // pred_fallthru
          _
      $region52: #{tpu_custom_call.1} parent=5 // pred_fallthru
        _
    $region6: #{tpu_custom_call.1} parent=1 // loop_footer
      %s21 = sadd.s32 1, %s17
    $region7: #{tpu_custom_call.1} parent=1 // loop_footer_branch
      %16 = sbr.rel target = $region3
    $region8: #{tpu_custom_call.1} parent=1 // loop_exit
      _
    %3487 = vsyncpa [#allocation6], 1
    %s3488 = scalar_lea.sflag [#allocation6], 1
    %3489 = vsyncpa %s3488, 1
    %3490 = vsyncpa [#allocation9], 1
    %s3491 = scalar_lea.sflag [#allocation9], 1
    %3492 = vsyncpa %s3491, 1
    %3493 = vsyncpa [#allocation7], 1
    %s3494 = scalar_lea.sflag [#allocation7], 1
    %3495 = vsyncpa %s3494, 1

</llo_original>
